<compile_context>
chip_gen: v7x
topology: tpu7x:2x2x1
jax: 0.10.0
libtpu: 0.0.40
codegen_flags: <defaults>
</compile_context>

<pallas_src>
import functools

import jax
import jax.numpy as jnp
from jax.experimental import pallas as pl
from jax.experimental.pallas import tpu as pltpu

# MXU compute/storage dtype for the big adjacency / embedding matmuls
# (f32 accumulation on the MXU).
_MATMUL_DTYPE = jnp.bfloat16
# Tile caps -- multiples of 8/16 and 128 so padded tiles always satisfy the
# (8,128) layout rule (and bf16 sublane packing); dims smaller than the cap use
# the full extent (always legal).
_TM, _TN, _TK = 256, 256, 512
# Explicit scoped-VMEM budget: fits v7x's 64 MiB physical VMEM with headroom,
# keeps double-buffering alive on v5e/v6e as well.
_VMEM_LIMIT = 48 * 1024 * 1024


def _round_up(x, m):
    return ((x + m - 1) // m) * m


def _tile(dim, cap):
    """Return (tile, padded_dim): full extent when small, cap-aligned when big."""
    if dim <= cap:
        return dim, dim
    return cap, _round_up(dim, cap)


def _pad2(x, rows, cols):
    pr, pc = rows - x.shape[0], cols - x.shape[1]
    if pr == 0 and pc == 0:
        return x
    return jnp.pad(x, ((0, pr), (0, pc)))


# ----------------------------------------------------------------------------
# Tiled matmul (optionally A^T @ B, optionally fused row-L2-normalize epilogue)
# ----------------------------------------------------------------------------
def _matmul_kernel(a_ref, b_ref, o_ref, acc_ref, *, trans_a, normalize,
                   compute_dtype):
    @pl.when(pl.program_id(2) == 0)
    def _():
        acc_ref[...] = jnp.zeros_like(acc_ref)

    a = a_ref[...].astype(compute_dtype)
    b = b_ref[...].astype(compute_dtype)
    dims = (((0,), (0,)), ((), ())) if trans_a else (((1,), (0,)), ((), ()))
    acc_ref[...] += jax.lax.dot_general(a, b, dims,
                                        preferred_element_type=jnp.float32)

    @pl.when(pl.program_id(2) == pl.num_programs(2) - 1)
    def _():
        acc = acc_ref[...]
        if normalize:  # static python bool
            nrm = jnp.sqrt(jnp.sum(acc * acc, axis=-1, keepdims=True))
            acc = acc / jnp.maximum(nrm, 1e-12)
        o_ref[...] = acc


def _matmul_single_k_kernel(a_ref, b_ref, o_ref, *, trans_a, normalize,
                            compute_dtype):
    # Fast path: whole K fits one block -> no scratch accumulator, no gating.
    a = a_ref[...].astype(compute_dtype)
    b = b_ref[...].astype(compute_dtype)
    dims = (((0,), (0,)), ((), ())) if trans_a else (((1,), (0,)), ((), ()))
    acc = jax.lax.dot_general(a, b, dims, preferred_element_type=jnp.float32)
    if normalize:  # static python bool
        nrm = jnp.sqrt(jnp.sum(acc * acc, axis=-1, keepdims=True))
        acc = acc / jnp.maximum(nrm, 1e-12)
    o_ref[...] = acc


def pallas_matmul(a, b, *, trans_a=False, l2_normalize_rows=False,
                  compute_dtype=jnp.float32):
    """C = (A^T if trans_a else A) @ B with f32 accumulation.

    Operands are stored in HBM at `compute_dtype` (bf16 halves DMA traffic of
    the big adjacency operand); the MXU accumulates in f32 either way.
    """
    a = a.astype(compute_dtype)
    b = b.astype(compute_dtype)
    if trans_a:
        k, m = a.shape
    else:
        m, k = a.shape
    kb, n = b.shape
    assert kb == k
    tm, mp = _tile(m, _TM)
    tn, npad = _tile(n, _TN)
    tk, kp = _tile(k, _TK)
    if l2_normalize_rows:
        assert npad == tn, "row-normalize fusion needs a single N block"
    a_p = _pad2(a, kp, mp) if trans_a else _pad2(a, mp, kp)
    b_p = _pad2(b, kp, npad)

    if kp == tk:  # single K block -> scratch-free kernel
        a_spec = (pl.BlockSpec((tk, tm), lambda i, j: (0, i)) if trans_a
                  else pl.BlockSpec((tm, tk), lambda i, j: (i, 0)))
        out = pl.pallas_call(
            functools.partial(_matmul_single_k_kernel, trans_a=trans_a,
                              normalize=l2_normalize_rows,
                              compute_dtype=compute_dtype),
            out_shape=jax.ShapeDtypeStruct((mp, npad), jnp.float32),
            grid_spec=pltpu.PrefetchScalarGridSpec(
                num_scalar_prefetch=0,
                grid=(mp // tm, npad // tn),
                in_specs=[a_spec,
                          pl.BlockSpec((tk, tn), lambda i, j: (0, j))],
                out_specs=pl.BlockSpec((tm, tn), lambda i, j: (i, j))),
            compiler_params=pltpu.CompilerParams(
                dimension_semantics=("parallel", "parallel"),
                vmem_limit_bytes=_VMEM_LIMIT),
        )(a_p, b_p)
        return out[:m, :n]

    a_spec = (pl.BlockSpec((tk, tm), lambda i, j, kk: (kk, i)) if trans_a
              else pl.BlockSpec((tm, tk), lambda i, j, kk: (i, kk)))
    out = pl.pallas_call(
        functools.partial(_matmul_kernel, trans_a=trans_a,
                          normalize=l2_normalize_rows,
                          compute_dtype=compute_dtype),
        out_shape=jax.ShapeDtypeStruct((mp, npad), jnp.float32),
        grid_spec=pltpu.PrefetchScalarGridSpec(
            num_scalar_prefetch=0,
            grid=(mp // tm, npad // tn, kp // tk),
            in_specs=[a_spec,
                      pl.BlockSpec((tk, tn), lambda i, j, kk: (kk, j))],
            out_specs=pl.BlockSpec((tm, tn), lambda i, j, kk: (i, j)),
            scratch_shapes=[pltpu.VMEM((tm, tn), jnp.float32)]),
        compiler_params=pltpu.CompilerParams(
            dimension_semantics=("parallel", "parallel", "arbitrary"),
            vmem_limit_bytes=_VMEM_LIMIT),
    )(a_p, b_p)
    return out[:m, :n]


# ----------------------------------------------------------------------------
# Fused normalize + self-similarity:  sim = normalize(X) @ normalize(X)^T
# ----------------------------------------------------------------------------
def _selfsim_kernel(xi_ref, xj_ref, o_ref, *, compute_dtype):
    xi = xi_ref[...]
    xj = xj_ref[...]
    xi = xi / jnp.maximum(jnp.sqrt(jnp.sum(xi * xi, axis=-1, keepdims=True)), 1e-12)
    xj = xj / jnp.maximum(jnp.sqrt(jnp.sum(xj * xj, axis=-1, keepdims=True)), 1e-12)
    o_ref[...] = jax.lax.dot_general(
        xi.astype(compute_dtype), xj.astype(compute_dtype),
        (((1,), (1,)), ((), ())), preferred_element_type=jnp.float32)


def pallas_self_sim(x, *, compute_dtype=jnp.float32):
    n, d = x.shape
    x = x.astype(jnp.float32)
    t, npad = _tile(n, _TM)
    x_p = _pad2(x, npad, d)
    out = pl.pallas_call(
        functools.partial(_selfsim_kernel, compute_dtype=compute_dtype),
        out_shape=jax.ShapeDtypeStruct((npad, npad), jnp.float32),
        grid_spec=pltpu.PrefetchScalarGridSpec(
            num_scalar_prefetch=0,
            grid=(npad // t, npad // t),
            in_specs=[pl.BlockSpec((t, d), lambda i, j: (i, 0)),
                      pl.BlockSpec((t, d), lambda i, j: (j, 0))],
            out_specs=pl.BlockSpec((t, t), lambda i, j: (i, j))),
        compiler_params=pltpu.CompilerParams(
            dimension_semantics=("parallel", "parallel"),
            vmem_limit_bytes=_VMEM_LIMIT),
    )(x_p, x_p)
    return out[:n, :n]


# ----------------------------------------------------------------------------
# Fused user hop: user_agg = interact @ entity ; += softmax(u @ W^T) @ W * agg ;
#                 row L2-normalize.  Grid (user tiles, entity/K tiles).
# ----------------------------------------------------------------------------
def _user_hop_kernel(inter_ref, ent_ref, user_ref, w_ref, o_ref, acc_ref, *,
                     compute_dtype):
    k = pl.program_id(1)

    @pl.when(k == 0)
    def _():
        acc_ref[...] = jnp.zeros_like(acc_ref)

    acc_ref[...] += jnp.dot(inter_ref[...].astype(compute_dtype),
                            ent_ref[...].astype(compute_dtype),
                            preferred_element_type=jnp.float32)

    @pl.when(k == pl.num_programs(1) - 1)
    def _():
        u = user_ref[...]
        w = w_ref[...]
        score = jax.lax.dot_general(u, w, (((1,), (1,)), ((), ())),
                                    preferred_element_type=jnp.float32)
        score = jnp.exp(score - jnp.max(score, axis=-1, keepdims=True))
        score = score / jnp.sum(score, axis=-1, keepdims=True)
        proj = jnp.dot(score, w, preferred_element_type=jnp.float32)
        agg = acc_ref[...]
        out = agg + proj * agg
        nrm = jnp.sqrt(jnp.sum(out * out, axis=-1, keepdims=True))
        o_ref[...] = out / jnp.maximum(nrm, 1e-12)


def pallas_user_hop(interact, entity_emb, user_emb, weight, *,
                    compute_dtype=jnp.float32):
    nu, ne = interact.shape
    d = entity_emb.shape[1]
    r1 = weight.shape[0]
    tm, mp = _tile(nu, _TM)
    tk, kp = _tile(ne, _TK)
    # store big matmul operands at compute_dtype in HBM (half the DMA at bf16);
    # softmax/residual path stays f32.
    inter_p = _pad2(interact.astype(compute_dtype), mp, kp)
    ent_p = _pad2(entity_emb.astype(compute_dtype), kp, d)
    user_p = _pad2(user_emb.astype(jnp.float32), mp, d)
    out = pl.pallas_call(
        functools.partial(_user_hop_kernel, compute_dtype=compute_dtype),
        out_shape=jax.ShapeDtypeStruct((mp, d), jnp.float32),
        grid_spec=pltpu.PrefetchScalarGridSpec(
            num_scalar_prefetch=0,
            grid=(mp // tm, kp // tk),
            in_specs=[pl.BlockSpec((tm, tk), lambda i, k: (i, k)),
                      pl.BlockSpec((tk, d), lambda i, k: (k, 0)),
                      pl.BlockSpec((tm, d), lambda i, k: (i, 0)),
                      pl.BlockSpec((r1, d), lambda i, k: (0, 0))],
            out_specs=pl.BlockSpec((tm, d), lambda i, k: (i, 0)),
            scratch_shapes=[pltpu.VMEM((tm, d), jnp.float32)]),
        compiler_params=pltpu.CompilerParams(
            dimension_semantics=("parallel", "arbitrary"),
            vmem_limit_bytes=_VMEM_LIMIT),
    )(inter_p, ent_p, user_p, weight.astype(jnp.float32))
    return out[:nu]


# ----------------------------------------------------------------------------
# Fused contrastive branch: 3 MLP heads + InfoNCE (sym heads reuse between-sim),
# scalar loss sums written to SMEM (no lane-sparse (N,1) outputs).
# ----------------------------------------------------------------------------
def _contrastive_kernel(a_ref, b_ref, w1_ref, b1_ref, w2_ref, b2_ref, o_ref):
    inv_tau = 1.0 / 0.6
    nt = (((1,), (1,)), ((), ()))   # X @ Y^T
    c0 = (((0,), (0,)), ((), ()))   # contraction on axis 0 (column sums via ones)
    nrows = a_ref.shape[1]
    ones = jnp.ones((nrows, 1), jnp.float32)
    for h in range(a_ref.shape[0]):          # static unroll over the 3 fc heads
        w1, bb1 = w1_ref[h], b1_ref[h]
        w2, bb2 = w2_ref[h], b2_ref[h]

        def mlp(x):
            hid = jnp.dot(x, w1, preferred_element_type=jnp.float32) + bb1
            hid = jnp.maximum(hid, 0.0)
            return jnp.dot(hid, w2, preferred_element_type=jnp.float32) + bb2

        az, bz = mlp(a_ref[h]), mlp(b_ref[h])
        an = az / jnp.maximum(jnp.sqrt(jnp.sum(az * az, -1, keepdims=True)), 1e-12)
        bn = bz / jnp.maximum(jnp.sqrt(jnp.sum(bz * bz, -1, keepdims=True)), 1e-12)

        betw = jnp.exp(jax.lax.dot_general(an, bn, nt,
                                           preferred_element_type=jnp.float32) * inv_tau)
        refl_a = jnp.exp(jax.lax.dot_general(an, an, nt,
                                             preferred_element_type=jnp.float32) * inv_tau)
        refl_b = jnp.exp(jax.lax.dot_general(bn, bn, nt,
                                             preferred_element_type=jnp.float32) * inv_tau)
        # diagonals computed directly -- no NxN eye mask
        diag_b = jnp.exp(jnp.sum(an * bn, -1, keepdims=True) * inv_tau)
        diag_ra = jnp.exp(jnp.sum(an * an, -1, keepdims=True) * inv_tau)
        diag_rb = jnp.exp(jnp.sum(bn * bn, -1, keepdims=True) * inv_tau)
        row_ra = jnp.sum(refl_a, -1, keepdims=True)
        row_rb = jnp.sum(refl_b, -1, keepdims=True)
        row_b = jnp.sum(betw, -1, keepdims=True)
        # reverse direction reuses betw: rowsum(betw^T) == colsum(betw)
        col_b = jax.lax.dot_general(betw, ones, c0,
                                    preferred_element_type=jnp.float32)
        loss1 = -jnp.log(diag_b / (row_ra + row_b - diag_ra))
        loss2 = -jnp.log(diag_b / (row_rb + col_b - diag_rb))
        o_ref[h, 0] = jnp.sum(loss1)
        o_ref[h, 1] = jnp.sum(loss2)


def pallas_contrastive(a_stack, b_stack, w1s, b1s, w2s, b2s):
    h = a_stack.shape[0]
    return pl.pallas_call(
        _contrastive_kernel,
        out_shape=jax.ShapeDtypeStruct((h, 2), jnp.float32),
        out_specs=pl.BlockSpec(memory_space=pltpu.MemorySpace.SMEM),
        compiler_params=pltpu.CompilerParams(vmem_limit_bytes=_VMEM_LIMIT),
    )(a_stack.astype(jnp.float32), b_stack.astype(jnp.float32),
      w1s.astype(jnp.float32), b1s.astype(jnp.float32),
      w2s.astype(jnp.float32), b2s.astype(jnp.float32))


# ----------------------------------------------------------------------------
# Model glue (plain JAX around the kernels)
# ----------------------------------------------------------------------------
def l2_normalize(x, eps=1e-12):
    nrm = jnp.sqrt(jnp.sum(x * x, axis=-1, keepdims=True))
    return x / jnp.maximum(nrm, eps)


def kg_aggregate(entity_emb, edge_index, edge_type, weight, n_entities):
    """Scatter-softmax attention + segment-sum aggregation (replaces one-hot matmul)."""
    head, tail = edge_index[0], edge_index[1]
    rel = weight[edge_type - 1]                 # edge_type >= 1 (as in torch ref)
    head_e = entity_emb[head]
    tail_e = entity_emb[tail]
    hr = head_e * rel
    tr = tail_e * rel
    # (||hr|| * ||tr||)^2 == sum(hr^2) * sum(tr^2)   (exact, sqrt-free)
    att = jnp.sum(hr * hr, axis=-1) * jnp.sum(tr * tr, axis=-1)
    m = jax.ops.segment_max(att, head, num_segments=n_entities)
    e = jnp.exp(att - m[head])
    denom = jax.ops.segment_sum(e, head, num_segments=n_entities)
    sm = e / denom[head]
    neigh = sm[:, None] * (tail_e * rel)
    return jax.ops.segment_sum(neigh, head, num_segments=n_entities)


def build_adj(context, topk):
    n = context.shape[0]
    # f32 similarity: top-k ordering matches the f32 torch reference; the n^2
    # output (not the n*d input) dominates traffic so bf16 wouldn't help here.
    sim = pallas_self_sim(context, compute_dtype=jnp.float32)
    knn_val, knn_ind = jax.lax.top_k(sim, topk)
    rows = jnp.repeat(jnp.arange(n), topk)
    adj = jnp.zeros((n, n), jnp.float32).at[rows, knn_ind.reshape(-1)].add(
        knn_val.reshape(-1))
    rowsum = jnp.sum(adj, axis=1)
    d_inv_sqrt = jnp.where(rowsum > 0.0,
                           jax.lax.rsqrt(jnp.maximum(rowsum, 1e-12)), 0.0)
    return d_inv_sqrt[:, None] * adj * d_inv_sqrt[None, :]


def gcn_forward(user_emb, entity_emb, edge_index, edge_type, interact, weight,
                n_hops, n_entities, topk, lambda_coeff):
    origin_item_adj = build_adj(entity_emb, topk)
    entity_res, user_res = entity_emb, user_emb
    for _ in range(n_hops):
        entity_agg = kg_aggregate(entity_emb, edge_index, edge_type, weight,
                                  n_entities)
        # fused: interact @ entity + relation-softmax residual + L2-normalize
        user_emb = pallas_user_hop(interact, entity_emb, user_emb, weight,
                                   compute_dtype=_MATMUL_DTYPE)
        # mess_dropout / node_dropout are identity (eval mode)
        entity_emb = l2_normalize(entity_agg)
        entity_res = entity_res + entity_emb
        user_res = user_res + user_emb
    item_adj = ((1.0 - lambda_coeff) * build_adj(entity_res, topk)
                + lambda_coeff * origin_item_adj)
    return entity_res, user_res, item_adj


def light_gcn(user_emb, item_emb, interact, n_layers):
    # G @ [u; i] == [interact @ i ; interact^T @ u]  (dense graph never built)
    u, it = user_emb, item_emb
    acc_u, acc_i = u, it
    for _ in range(n_layers):
        u_new = pallas_matmul(interact, it, compute_dtype=_MATMUL_DTYPE)
        i_new = pallas_matmul(interact, u, trans_a=True,
                              compute_dtype=_MATMUL_DTYPE)
        u, it = u_new, i_new
        acc_u = acc_u + u
        acc_i = acc_i + it
    scale = 1.0 / (n_layers + 1)
    return acc_u * scale, acc_i * scale


def recommender_forward(params, edge_index, edge_type, interact, users, items,
                        labels, *, cfg):
    n_users = cfg['n_users']
    n_entities = cfg['n_entities']

    all_embed = params['all_embed']
    user_emb = all_embed[:n_users]
    item_emb = all_embed[n_users:]

    entity_gcn_emb, user_gcn_emb, item_adj = gcn_forward(
        user_emb, item_emb, edge_index, edge_type, interact,
        params['rel_weight'], cfg['context_hops'], n_entities,
        cfg['topk'], cfg['lambda_coeff'])

    u_e = user_gcn_emb[users]
    i_e = entity_gcn_emb[items]

    i_h = item_emb
    for layer in range(cfg['n_item_layer']):
        i_h = pallas_matmul(
            item_adj, i_h,
            l2_normalize_rows=(layer == cfg['n_item_layer'] - 1),
            compute_dtype=_MATMUL_DTYPE)
    i_e_1 = i_h[items]

    user_lg, item_lg = light_gcn(user_emb, item_emb, interact,
                                 cfg['lightgcn_layer'])
    u_e_1 = user_lg[users]
    i_e_2 = item_lg[items]

    # Three contrastive heads (fc1 one-sided, fc2/fc3 symmetric) in one call.
    a_stack = jnp.stack([i_e_1, i_e, u_e], axis=0)
    b_stack = jnp.stack([i_e_2, i_e_2, u_e_1], axis=0)
    w1s = jnp.stack([params['fc1']['w1'], params['fc2']['w1'], params['fc3']['w1']])
    b1s = jnp.stack([params['fc1']['b1'], params['fc2']['b1'], params['fc3']['b1']])
    w2s = jnp.stack([params['fc1']['w2'], params['fc2']['w2'], params['fc3']['w2']])
    b2s = jnp.stack([params['fc1']['b2'], params['fc2']['b2'], params['fc3']['b2']])
    sums = pallas_contrastive(a_stack, b_stack, w1s, b1s, w2s, b2s)   # (3, 2)
    bsz = users.shape[0]
    loss_contrast = (sums[0, 0]
                     + 0.5 * (sums[1, 0] + sums[1, 1])
                     + 0.5 * (sums[2, 0] + sums[2, 1])) / bsz

    u_cat = jnp.concatenate([u_e, u_e_1, u_e_1], axis=-1)   # matches torch ref
    i_cat = jnp.concatenate([i_e, i_e_1, i_e_2], axis=-1)

    # BPR / BCE branch kept in XLA (batch-sized, launch-overhead-bound in Pallas)
    scores = jax.nn.sigmoid(jnp.sum(u_cat * i_cat, axis=-1))
    eps = 1e-7
    sc = jnp.clip(scores, eps, 1.0 - eps)
    labels_f = labels.astype(jnp.float32)
    bce_loss = -jnp.mean(labels_f * jnp.log(sc)
                         + (1.0 - labels_f) * jnp.log(1.0 - sc))

    regularizer = (jnp.sum(u_cat * u_cat) + jnp.sum(i_cat * i_cat)) / 2.0
    emb_loss = cfg['decay'] * regularizer / u_cat.shape[0]
    total = bce_loss + emb_loss + cfg['cl_weight'] * loss_contrast
    return total, scores, bce_loss, emb_loss


# ----------------------------------------------------------------------------
# Deterministic parameter / input construction
# ----------------------------------------------------------------------------
def xavier_uniform(key, shape):
    fan_out, fan_in = shape[0], shape[1]
    bound = (6.0 / (fan_in + fan_out)) ** 0.5
    return jax.random.uniform(key, shape, jnp.float32, -bound, bound)


def make_fc(key, dim):
    k1, k2, k3, k4 = jax.random.split(key, 4)
    bb = 1.0 / (dim ** 0.5)
    return {
        'w1': xavier_uniform(k1, (dim, dim)),
        'b1': jax.random.uniform(k2, (1, dim), jnp.float32, -bb, bb),
        'w2': xavier_uniform(k3, (dim, dim)),
        'b2': jax.random.uniform(k4, (1, dim), jnp.float32, -bb, bb),
    }


if __name__ == "__main__":
    CFG = dict(
        n_users=8, n_items=12, n_entities=16, n_nodes=24, n_relations=4,
        emb_size=32, context_hops=2, topk=10, lambda_coeff=0.5,
        lightgcn_layer=4, n_item_layer=4, cl_weight=1.0, decay=1e-4,
    )
    n_edges = 40
    batch = 8

    key = jax.random.PRNGKey(0)
    (k_emb, k_rel, k_fc1, k_fc2, k_fc3, k_head, k_tail, k_type,
     k_int, k_u, k_i, k_l) = jax.random.split(key, 12)

    params = {
        'all_embed': xavier_uniform(k_emb, (CFG['n_nodes'], CFG['emb_size'])),
        'rel_weight': xavier_uniform(k_rel, (CFG['n_relations'] - 1, CFG['emb_size'])),
        'fc1': make_fc(k_fc1, CFG['emb_size']),
        'fc2': make_fc(k_fc2, CFG['emb_size']),
        'fc3': make_fc(k_fc3, CFG['emb_size']),
    }

    head = jax.random.randint(k_head, (n_edges,), 0, CFG['n_entities'])
    tail = jax.random.randint(k_tail, (n_edges,), 0, CFG['n_entities'])
    edge_index = jnp.stack([head, tail], axis=0)                       # (2, E)
    edge_type = jax.random.randint(k_type, (n_edges,), 1, CFG['n_relations'])

    # dense (row-normalized) user-entity interaction matrix standing in for the
    # sparse interact_mat; every user gets at least one interaction.
    # TODO(synk): true sparse interact_mat (torch.sparse.mm) has no clean Pallas
    # equivalent; we use its dense equivalent here.
    mask = (jax.random.uniform(k_int, (CFG['n_users'], CFG['n_entities'])) < 0.3)
    mask = mask.at[jnp.arange(CFG['n_users']), jnp.arange(CFG['n_users'])].set(True)
    interact_dense = mask.astype(jnp.float32)
    interact_dense = interact_dense / jnp.sum(interact_dense, axis=1, keepdims=True)

    users = jax.random.randint(k_u, (batch,), 0, CFG['n_users'])
    items = jax.random.randint(k_i, (batch,), 0, CFG['n_items'])
    labels = jax.random.bernoulli(k_l, 0.5, (batch,)).astype(jnp.float32)

    fwd = jax.jit(functools.partial(recommender_forward, cfg=CFG))
    total, scores, bce_loss, emb_loss = fwd(params, edge_index, edge_type,
                                            interact_dense, users, items, labels)
    jax.block_until_ready((total, scores, bce_loss, emb_loss))
    print("KERNEL_OK")
</pallas_src>

<mosaic_0001>
module attributes {stable_mosaic.version = 11 : i64} {
  func.func private @main(%arg0: i32) attributes {dimension_semantics = [#tpu.dimension_semantics<core_parallel>], iteration_bounds = array<i64: 2>, tpu.core_type = #tpu.core_type<sc_scalar_subcore>, window_params = []} {
    return
  }
}

module attributes {stable_mosaic.version = 11 : i64} {
  func.func private @main(%arg0: i32) attributes {dimension_semantics = [#tpu.dimension_semantics<core_parallel>], iteration_bounds = array<i64: 2>, tpu.core_type = #tpu.core_type<sc_scalar_subcore>, window_params = []} {
    return
  }
}

module attributes {stable_mosaic.version = 11 : i64} {
  func.func @_selfsim_kernel(%arg0: i32, %arg1: i32, %arg2: memref<16x32xf32, #tpu.memory_space<vmem>>, %arg3: memref<16x32xf32, #tpu.memory_space<vmem>>, %arg4: memref<16x16xf32, #tpu.memory_space<vmem>>) attributes {dimension_semantics = [#tpu.dimension_semantics<parallel>, #tpu.dimension_semantics<parallel>], iteration_bounds = array<i64: 1, 1>, scalar_prefetch = 0 : i64, scratch_operands = 0 : i64, tpu.core_type = #tpu.core_type<tc>, window_params = [{transform_indices = @transform_0, window_bounds = array<i64: 16, 32>}, {transform_indices = @transform_1, window_bounds = array<i64: 16, 32>}, {transform_indices = @transform_2, window_bounds = array<i64: 16, 16>}]} {
    %c0 = arith.constant 0 : index
    %c0_0 = arith.constant 0 : index
    %0 = vector.load %arg2[%c0, %c0_0] : memref<16x32xf32, #tpu.memory_space<vmem>>, vector<16x32xf32>
    %c0_1 = arith.constant 0 : index
    %c0_2 = arith.constant 0 : index
    %1 = vector.load %arg3[%c0_1, %c0_2] : memref<16x32xf32, #tpu.memory_space<vmem>>, vector<16x32xf32>
    %2 = arith.mulf %0, %0 : vector<16x32xf32>
    %cst = arith.constant dense<0.000000e+00> : vector<16xf32>
    %3 = vector.multi_reduction <add>, %2, %cst [1] : vector<16x32xf32> to vector<16xf32>
    %4 = vector.shape_cast %3 : vector<16xf32> to vector<16x1xf32>
    %5 = math.sqrt %4 : vector<16x1xf32>
    %cst_3 = arith.constant 9.99999996E-13 : f32
    %6 = vector.broadcast %cst_3 : f32 to vector<16x1xf32>
    %7 = arith.maximumf %5, %6 : vector<16x1xf32>
    %8 = vector.broadcast %7 : vector<16x1xf32> to vector<16x32xf32>
    %9 = arith.divf %0, %8 : vector<16x32xf32>
    %10 = arith.mulf %1, %1 : vector<16x32xf32>
    %cst_4 = arith.constant dense<0.000000e+00> : vector<16xf32>
    %11 = vector.multi_reduction <add>, %10, %cst_4 [1] : vector<16x32xf32> to vector<16xf32>
    %12 = vector.shape_cast %11 : vector<16xf32> to vector<16x1xf32>
    %13 = math.sqrt %12 : vector<16x1xf32>
    %cst_5 = arith.constant 9.99999996E-13 : f32
    %14 = vector.broadcast %cst_5 : f32 to vector<16x1xf32>
    %15 = arith.maximumf %13, %14 : vector<16x1xf32>
    %16 = vector.broadcast %15 : vector<16x1xf32> to vector<16x32xf32>
    %17 = arith.divf %1, %16 : vector<16x32xf32>
    %cst_6 = arith.constant dense<0.000000e+00> : vector<16x16xf32>
    %18 = tpu.matmul %9, %17, %cst_6 {dimension_numbers = #tpu.dot_dimension_numbers<[1], [1], [0], [0], [0, 0, 1, 0], [], []>} : vector<16x32xf32>, vector<16x32xf32>, vector<16x16xf32> -> vector<16x16xf32>
    %c0_7 = arith.constant 0 : index
    %c0_8 = arith.constant 0 : index
    %19 = vector.load %arg4[%c0_7, %c0_8] : memref<16x16xf32, #tpu.memory_space<vmem>>, vector<16x16xf32>
    tpu.vector_store %arg4[%c0_7, %c0_8], %18 {strides = array<i32>} : memref<16x16xf32, #tpu.memory_space<vmem>>, vector<16x16xf32>,
    return
  }
  func.func @transform_0(%arg0: i32, %arg1: i32) -> (i32, i32) {
    %c0_i32 = arith.constant 0 : i32
    %c0_i32_0 = arith.constant 0 : i32
    return %arg0, %c0_i32 : i32, i32
  }
  func.func @transform_1(%arg0: i32, %arg1: i32) -> (i32, i32) {
    %c0_i32 = arith.constant 0 : i32
    %c0_i32_0 = arith.constant 0 : i32
    return %arg1, %c0_i32 : i32, i32
  }
  func.func @transform_2(%arg0: i32, %arg1: i32) -> (i32, i32) {
    %c0_i32 = arith.constant 0 : i32
    return %arg0, %arg1 : i32, i32
  }
}

module attributes {stable_mosaic.version = 11 : i64} {
  func.func @_matmul_single_k_kernel(%arg0: i32, %arg1: i32, %arg2: memref<8x16xbf16, #tpu.memory_space<vmem>>, %arg3: memref<16x32xbf16, #tpu.memory_space<vmem>>, %arg4: memref<8x32xf32, #tpu.memory_space<vmem>>) attributes {dimension_semantics = [#tpu.dimension_semantics<parallel>, #tpu.dimension_semantics<parallel>], iteration_bounds = array<i64: 1, 1>, scalar_prefetch = 0 : i64, scratch_operands = 0 : i64, tpu.core_type = #tpu.core_type<tc>, window_params = [{transform_indices = @transform_0, window_bounds = array<i64: 8, 16>}, {transform_indices = @transform_1, window_bounds = array<i64: 16, 32>}, {transform_indices = @transform_2, window_bounds = array<i64: 8, 32>}]} {
    %c0 = arith.constant 0 : index
    %c0_0 = arith.constant 0 : index
    %0 = vector.load %arg2[%c0, %c0_0] : memref<8x16xbf16, #tpu.memory_space<vmem>>, vector<8x16xbf16>
    %c0_1 = arith.constant 0 : index
    %c0_2 = arith.constant 0 : index
    %1 = vector.load %arg3[%c0_1, %c0_2] : memref<16x32xbf16, #tpu.memory_space<vmem>>, vector<16x32xbf16>
    %cst = arith.constant dense<0.000000e+00> : vector<8x32xf32>
    %2 = tpu.matmul %0, %1, %cst {dimension_numbers = #tpu.dot_dimension_numbers<[1], [0], [0], [1], [0, 0, 1, 1], [], []>} : vector<8x16xbf16>, vector<16x32xbf16>, vector<8x32xf32> -> vector<8x32xf32>
    %c0_3 = arith.constant 0 : index
    %c0_4 = arith.constant 0 : index
    %3 = vector.load %arg4[%c0_3, %c0_4] : memref<8x32xf32, #tpu.memory_space<vmem>>, vector<8x32xf32>
    tpu.vector_store %arg4[%c0_3, %c0_4], %2 {strides = array<i32>} : memref<8x32xf32, #tpu.memory_space<vmem>>, vector<8x32xf32>,
    return
  }
  func.func @transform_0(%arg0: i32, %arg1: i32) -> (i32, i32) {
    %c0_i32 = arith.constant 0 : i32
    %c0_i32_0 = arith.constant 0 : i32
    return %arg0, %c0_i32 : i32, i32
  }
  func.func @transform_1(%arg0: i32, %arg1: i32) -> (i32, i32) {
    %c0_i32 = arith.constant 0 : i32
    %c0_i32_0 = arith.constant 0 : i32
    return %c0_i32, %arg1 : i32, i32
  }
  func.func @transform_2(%arg0: i32, %arg1: i32) -> (i32, i32) {
    %c0_i32 = arith.constant 0 : i32
    return %arg0, %arg1 : i32, i32
  }
}

module attributes {stable_mosaic.version = 11 : i64} {
  func.func @_matmul_single_k_kernel(%arg0: i32, %arg1: i32, %arg2: memref<8x16xbf16, #tpu.memory_space<vmem>>, %arg3: memref<8x32xbf16, #tpu.memory_space<vmem>>, %arg4: memref<16x32xf32, #tpu.memory_space<vmem>>) attributes {dimension_semantics = [#tpu.dimension_semantics<parallel>, #tpu.dimension_semantics<parallel>], iteration_bounds = array<i64: 1, 1>, scalar_prefetch = 0 : i64, scratch_operands = 0 : i64, tpu.core_type = #tpu.core_type<tc>, window_params = [{transform_indices = @transform_0, window_bounds = array<i64: 8, 16>}, {transform_indices = @transform_1, window_bounds = array<i64: 8, 32>}, {transform_indices = @transform_2, window_bounds = array<i64: 16, 32>}]} {
    %c0 = arith.constant 0 : index
    %c0_0 = arith.constant 0 : index
    %0 = vector.load %arg2[%c0, %c0_0] : memref<8x16xbf16, #tpu.memory_space<vmem>>, vector<8x16xbf16>
    %c0_1 = arith.constant 0 : index
    %c0_2 = arith.constant 0 : index
    %1 = vector.load %arg3[%c0_1, %c0_2] : memref<8x32xbf16, #tpu.memory_space<vmem>>, vector<8x32xbf16>
    %cst = arith.constant dense<0.000000e+00> : vector<16x32xf32>
    %2 = tpu.matmul %0, %1, %cst {dimension_numbers = #tpu.dot_dimension_numbers<[0], [0], [1], [1], [0, 1, 1, 1], [], []>} : vector<8x16xbf16>, vector<8x32xbf16>, vector<16x32xf32> -> vector<16x32xf32>
    %c0_3 = arith.constant 0 : index
    %c0_4 = arith.constant 0 : index
    %3 = vector.load %arg4[%c0_3, %c0_4] : memref<16x32xf32, #tpu.memory_space<vmem>>, vector<16x32xf32>
    tpu.vector_store %arg4[%c0_3, %c0_4], %2 {strides = array<i32>} : memref<16x32xf32, #tpu.memory_space<vmem>>, vector<16x32xf32>,
    return
  }
  func.func @transform_0(%arg0: i32, %arg1: i32) -> (i32, i32) {
    %c0_i32 = arith.constant 0 : i32
    %c0_i32_0 = arith.constant 0 : i32
    return %c0_i32, %arg0 : i32, i32
  }
  func.func @transform_1(%arg0: i32, %arg1: i32) -> (i32, i32) {
    %c0_i32 = arith.constant 0 : i32
    %c0_i32_0 = arith.constant 0 : i32
    return %c0_i32, %arg1 : i32, i32
  }
  func.func @transform_2(%arg0: i32, %arg1: i32) -> (i32, i32) {
    %c0_i32 = arith.constant 0 : i32
    return %arg0, %arg1 : i32, i32
  }
}

module attributes {stable_mosaic.version = 11 : i64} {
  func.func @_user_hop_kernel(%arg0: i32, %arg1: i32, %arg2: memref<8x16xbf16, #tpu.memory_space<vmem>>, %arg3: memref<16x32xbf16, #tpu.memory_space<vmem>>, %arg4: memref<8x32xf32, #tpu.memory_space<vmem>>, %arg5: memref<3x32xf32, #tpu.memory_space<vmem>>, %arg6: memref<8x32xf32, #tpu.memory_space<vmem>>, %arg7: memref<8x32xf32, #tpu.memory_space<vmem>>) attributes {dimension_semantics = [#tpu.dimension_semantics<parallel>, #tpu.dimension_semantics<arbitrary>], iteration_bounds = array<i64: 1, 1>, scalar_prefetch = 0 : i64, scratch_operands = 1 : i64, tpu.core_type = #tpu.core_type<tc>, window_params = [{transform_indices = @transform_0, window_bounds = array<i64: 8, 16>}, {transform_indices = @transform_1, window_bounds = array<i64: 16, 32>}, {transform_indices = @transform_2, window_bounds = array<i64: 8, 32>}, {pipeline_mode = #tpu.pipeline_mode<synchronous>, transform_indices = @transform_3, window_bounds = array<i64: 3, 32>}, {transform_indices = @transform_4, window_bounds = array<i64: 8, 32>}]} {
    %c0_i32 = arith.constant 0 : i32
    %0 = arith.cmpi eq, %arg1, %c0_i32 : i32
    %1 = arith.extui %0 : i1 to i32
    %c0_i32_0 = arith.constant 0 : i32
    %2 = arith.cmpi ne, %1, %c0_i32_0 : i32
    scf.if %2 {
      %cst_10 = arith.constant 0.000000e+00 : f32
      %12 = vector.broadcast %cst_10 : f32 to vector<8x32xf32>
      %c0_11 = arith.constant 0 : index
      %c0_12 = arith.constant 0 : index
      %13 = vector.load %arg7[%c0_11, %c0_12] : memref<8x32xf32, #tpu.memory_space<vmem>>, vector<8x32xf32>
      tpu.vector_store %arg7[%c0_11, %c0_12], %12 {strides = array<i32>} : memref<8x32xf32, #tpu.memory_space<vmem>>, vector<8x32xf32>,
    } else {
    }
    %c0 = arith.constant 0 : index
    %c0_1 = arith.constant 0 : index
    %3 = vector.load %arg7[%c0, %c0_1] : memref<8x32xf32, #tpu.memory_space<vmem>>, vector<8x32xf32>
    %c0_2 = arith.constant 0 : index
    %c0_3 = arith.constant 0 : index
    %4 = vector.load %arg2[%c0_2, %c0_3] : memref<8x16xbf16, #tpu.memory_space<vmem>>, vector<8x16xbf16>
    %c0_4 = arith.constant 0 : index
    %c0_5 = arith.constant 0 : index
    %5 = vector.load %arg3[%c0_4, %c0_5] : memref<16x32xbf16, #tpu.memory_space<vmem>>, vector<16x32xbf16>
    %cst = arith.constant dense<0.000000e+00> : vector<8x32xf32>
    %6 = tpu.matmul %4, %5, %cst {dimension_numbers = #tpu.dot_dimension_numbers<[1], [0], [0], [1], [0, 0, 1, 1], [], []>} : vector<8x16xbf16>, vector<16x32xbf16>, vector<8x32xf32> -> vector<8x32xf32>
    %7 = arith.addf %3, %6 : vector<8x32xf32>
    %c0_6 = arith.constant 0 : index
    %c0_7 = arith.constant 0 : index
    %8 = vector.load %arg7[%c0_6, %c0_7] : memref<8x32xf32, #tpu.memory_space<vmem>>, vector<8x32xf32>
    tpu.vector_store %arg7[%c0_6, %c0_7], %7 {strides = array<i32>} : memref<8x32xf32, #tpu.memory_space<vmem>>, vector<8x32xf32>,
    %c0_i32_8 = arith.constant 0 : i32
    %9 = arith.cmpi eq, %arg1, %c0_i32_8 : i32
    %10 = arith.extui %9 : i1 to i32
    %c0_i32_9 = arith.constant 0 : i32
    %11 = arith.cmpi ne, %10, %c0_i32_9 : i32
    scf.if %11 {
      %c0_10 = arith.constant 0 : index
      %c0_11 = arith.constant 0 : index
      %12 = vector.load %arg4[%c0_10, %c0_11] : memref<8x32xf32, #tpu.memory_space<vmem>>, vector<8x32xf32>
      %c0_12 = arith.constant 0 : index
      %c0_13 = arith.constant 0 : index
      %13 = vector.load %arg5[%c0_12, %c0_13] : memref<3x32xf32, #tpu.memory_space<vmem>>, vector<3x32xf32>
      %cst_14 = arith.constant dense<0.000000e+00> : vector<8x3xf32>
      %14 = tpu.matmul %12, %13, %cst_14 {dimension_numbers = #tpu.dot_dimension_numbers<[1], [1], [0], [0], [0, 0, 1, 0], [], []>} : vector<8x32xf32>, vector<3x32xf32>, vector<8x3xf32> -> vector<8x3xf32>
      %cst_15 = arith.constant dense<0xFF800000> : vector<8xf32>
      %15 = vector.multi_reduction <maximumf>, %14, %cst_15 [1] : vector<8x3xf32> to vector<8xf32>
      %16 = vector.shape_cast %15 : vector<8xf32> to vector<8x1xf32>
      %17 = vector.broadcast %16 : vector<8x1xf32> to vector<8x3xf32>
      %18 = arith.subf %14, %17 : vector<8x3xf32>
      %19 = math.exp %18 : vector<8x3xf32>
      %cst_16 = arith.constant dense<0.000000e+00> : vector<8xf32>
      %20 = vector.multi_reduction <add>, %19, %cst_16 [1] : vector<8x3xf32> to vector<8xf32>
      %21 = vector.shape_cast %20 : vector<8xf32> to vector<8x1xf32>
      %22 = vector.broadcast %21 : vector<8x1xf32> to vector<8x3xf32>
      %23 = arith.divf %19, %22 : vector<8x3xf32>
      %cst_17 = arith.constant dense<0.000000e+00> : vector<8x32xf32>
      %24 = tpu.matmul %23, %13, %cst_17 {dimension_numbers = #tpu.dot_dimension_numbers<[1], [0], [0], [1], [0, 0, 1, 1], [], []>} : vector<8x3xf32>, vector<3x32xf32>, vector<8x32xf32> -> vector<8x32xf32>
      %c0_18 = arith.constant 0 : index
      %c0_19 = arith.constant 0 : index
      %25 = vector.load %arg7[%c0_18, %c0_19] : memref<8x32xf32, #tpu.memory_space<vmem>>, vector<8x32xf32>
      %26 = arith.mulf %24, %25 : vector<8x32xf32>
      %27 = arith.addf %25, %26 : vector<8x32xf32>
      %28 = arith.mulf %27, %27 : vector<8x32xf32>
      %cst_20 = arith.constant dense<0.000000e+00> : vector<8xf32>
      %29 = vector.multi_reduction <add>, %28, %cst_20 [1] : vector<8x32xf32> to vector<8xf32>
      %30 = vector.shape_cast %29 : vector<8xf32> to vector<8x1xf32>
      %31 = math.sqrt %30 : vector<8x1xf32>
      %cst_21 = arith.constant 9.99999996E-13 : f32
      %32 = vector.broadcast %cst_21 : f32 to vector<8x1xf32>
      %33 = arith.maximumf %31, %32 : vector<8x1xf32>
      %34 = vector.broadcast %33 : vector<8x1xf32> to vector<8x32xf32>
      %35 = arith.divf %27, %34 : vector<8x32xf32>
      %c0_22 = arith.constant 0 : index
      %c0_23 = arith.constant 0 : index
      %36 = vector.load %arg6[%c0_22, %c0_23] : memref<8x32xf32, #tpu.memory_space<vmem>>, vector<8x32xf32>
      tpu.vector_store %arg6[%c0_22, %c0_23], %35 {strides = array<i32>} : memref<8x32xf32, #tpu.memory_space<vmem>>, vector<8x32xf32>,
    } else {
    }
    return
  }
  func.func @transform_0(%arg0: i32, %arg1: i32) -> (i32, i32) {
    %c0_i32 = arith.constant 0 : i32
    return %arg0, %arg1 : i32, i32
  }
  func.func @transform_1(%arg0: i32, %arg1: i32) -> (i32, i32) {
    %c0_i32 = arith.constant 0 : i32
    %c0_i32_0 = arith.constant 0 : i32
    return %arg1, %c0_i32 : i32, i32
  }
  func.func @transform_2(%arg0: i32, %arg1: i32) -> (i32, i32) {
    %c0_i32 = arith.constant 0 : i32
    %c0_i32_0 = arith.constant 0 : i32
    return %arg0, %c0_i32 : i32, i32
  }
  func.func @transform_3(%arg0: i32, %arg1: i32) -> (i32, i32) {
    %c0_i32 = arith.constant 0 : i32
    %c0_i32_0 = arith.constant 0 : i32
    %c0_i32_1 = arith.constant 0 : i32
    return %c0_i32, %c0_i32_0 : i32, i32
  }
  func.func @transform_4(%arg0: i32, %arg1: i32) -> (i32, i32) {
    %c0_i32 = arith.constant 0 : i32
    %c0_i32_0 = arith.constant 0 : i32
    return %arg0, %c0_i32 : i32, i32
  }
}

module attributes {stable_mosaic.version = 11 : i64} {
  func.func @_matmul_single_k_kernel(%arg0: i32, %arg1: i32, %arg2: memref<16x16xbf16, #tpu.memory_space<vmem>>, %arg3: memref<16x32xbf16, #tpu.memory_space<vmem>>, %arg4: memref<16x32xf32, #tpu.memory_space<vmem>>) attributes {dimension_semantics = [#tpu.dimension_semantics<parallel>, #tpu.dimension_semantics<parallel>], iteration_bounds = array<i64: 1, 1>, scalar_prefetch = 0 : i64, scratch_operands = 0 : i64, tpu.core_type = #tpu.core_type<tc>, window_params = [{transform_indices = @transform_0, window_bounds = array<i64: 16, 16>}, {transform_indices = @transform_1, window_bounds = array<i64: 16, 32>}, {transform_indices = @transform_2, window_bounds = array<i64: 16, 32>}]} {
    %c0 = arith.constant 0 : index
    %c0_0 = arith.constant 0 : index
    %0 = vector.load %arg2[%c0, %c0_0] : memref<16x16xbf16, #tpu.memory_space<vmem>>, vector<16x16xbf16>
    %c0_1 = arith.constant 0 : index
    %c0_2 = arith.constant 0 : index
    %1 = vector.load %arg3[%c0_1, %c0_2] : memref<16x32xbf16, #tpu.memory_space<vmem>>, vector<16x32xbf16>
    %cst = arith.constant dense<0.000000e+00> : vector<16x32xf32>
    %2 = tpu.matmul %0, %1, %cst {dimension_numbers = #tpu.dot_dimension_numbers<[1], [0], [0], [1], [0, 0, 1, 1], [], []>} : vector<16x16xbf16>, vector<16x32xbf16>, vector<16x32xf32> -> vector<16x32xf32>
    %3 = arith.mulf %2, %2 : vector<16x32xf32>
    %cst_3 = arith.constant dense<0.000000e+00> : vector<16xf32>
    %4 = vector.multi_reduction <add>, %3, %cst_3 [1] : vector<16x32xf32> to vector<16xf32>
    %5 = vector.shape_cast %4 : vector<16xf32> to vector<16x1xf32>
    %6 = math.sqrt %5 : vector<16x1xf32>
    %cst_4 = arith.constant 9.99999996E-13 : f32
    %7 = vector.broadcast %cst_4 : f32 to vector<16x1xf32>
    %8 = arith.maximumf %6, %7 : vector<16x1xf32>
    %9 = vector.broadcast %8 : vector<16x1xf32> to vector<16x32xf32>
    %10 = arith.divf %2, %9 : vector<16x32xf32>
    %c0_5 = arith.constant 0 : index
    %c0_6 = arith.constant 0 : index
    %11 = vector.load %arg4[%c0_5, %c0_6] : memref<16x32xf32, #tpu.memory_space<vmem>>, vector<16x32xf32>
    tpu.vector_store %arg4[%c0_5, %c0_6], %10 {strides = array<i32>} : memref<16x32xf32, #tpu.memory_space<vmem>>, vector<16x32xf32>,
    return
  }
  func.func @transform_0(%arg0: i32, %arg1: i32) -> (i32, i32) {
    %c0_i32 = arith.constant 0 : i32
    %c0_i32_0 = arith.constant 0 : i32
    return %arg0, %c0_i32 : i32, i32
  }
  func.func @transform_1(%arg0: i32, %arg1: i32) -> (i32, i32) {
    %c0_i32 = arith.constant 0 : i32
    %c0_i32_0 = arith.constant 0 : i32
    return %c0_i32, %arg1 : i32, i32
  }
  func.func @transform_2(%arg0: i32, %arg1: i32) -> (i32, i32) {
    %c0_i32 = arith.constant 0 : i32
    return %arg0, %arg1 : i32, i32
  }
}

module attributes {stable_mosaic.version = 11 : i64} {
  func.func @_matmul_single_k_kernel(%arg0: i32, %arg1: i32, %arg2: memref<16x16xbf16, #tpu.memory_space<vmem>>, %arg3: memref<16x32xbf16, #tpu.memory_space<vmem>>, %arg4: memref<16x32xf32, #tpu.memory_space<vmem>>) attributes {dimension_semantics = [#tpu.dimension_semantics<parallel>, #tpu.dimension_semantics<parallel>], iteration_bounds = array<i64: 1, 1>, scalar_prefetch = 0 : i64, scratch_operands = 0 : i64, tpu.core_type = #tpu.core_type<tc>, window_params = [{transform_indices = @transform_0, window_bounds = array<i64: 16, 16>}, {transform_indices = @transform_1, window_bounds = array<i64: 16, 32>}, {transform_indices = @transform_2, window_bounds = array<i64: 16, 32>}]} {
    %c0 = arith.constant 0 : index
    %c0_0 = arith.constant 0 : index
    %0 = vector.load %arg2[%c0, %c0_0] : memref<16x16xbf16, #tpu.memory_space<vmem>>, vector<16x16xbf16>
    %c0_1 = arith.constant 0 : index
    %c0_2 = arith.constant 0 : index
    %1 = vector.load %arg3[%c0_1, %c0_2] : memref<16x32xbf16, #tpu.memory_space<vmem>>, vector<16x32xbf16>
    %cst = arith.constant dense<0.000000e+00> : vector<16x32xf32>
    %2 = tpu.matmul %0, %1, %cst {dimension_numbers = #tpu.dot_dimension_numbers<[1], [0], [0], [1], [0, 0, 1, 1], [], []>} : vector<16x16xbf16>, vector<16x32xbf16>, vector<16x32xf32> -> vector<16x32xf32>
    %c0_3 = arith.constant 0 : index
    %c0_4 = arith.constant 0 : index
    %3 = vector.load %arg4[%c0_3, %c0_4] : memref<16x32xf32, #tpu.memory_space<vmem>>, vector<16x32xf32>
    tpu.vector_store %arg4[%c0_3, %c0_4], %2 {strides = array<i32>} : memref<16x32xf32, #tpu.memory_space<vmem>>, vector<16x32xf32>,
    return
  }
  func.func @transform_0(%arg0: i32, %arg1: i32) -> (i32, i32) {
    %c0_i32 = arith.constant 0 : i32
    %c0_i32_0 = arith.constant 0 : i32
    return %arg0, %c0_i32 : i32, i32
  }
  func.func @transform_1(%arg0: i32, %arg1: i32) -> (i32, i32) {
    %c0_i32 = arith.constant 0 : i32
    %c0_i32_0 = arith.constant 0 : i32
    return %c0_i32, %arg1 : i32, i32
  }
  func.func @transform_2(%arg0: i32, %arg1: i32) -> (i32, i32) {
    %c0_i32 = arith.constant 0 : i32
    return %arg0, %arg1 : i32, i32
  }
}

module attributes {stable_mosaic.version = 11 : i64} {
  func.func @_contrastive_kernel(%arg0: memref<3x8x32xf32, #tpu.memory_space<vmem>>, %arg1: memref<3x8x32xf32, #tpu.memory_space<vmem>>, %arg2: memref<3x32x32xf32, #tpu.memory_space<vmem>>, %arg3: memref<3x1x32xf32, #tpu.memory_space<vmem>>, %arg4: memref<3x32x32xf32, #tpu.memory_space<vmem>>, %arg5: memref<3x1x32xf32, #tpu.memory_space<vmem>>, %arg6: memref<3x2xf32, #tpu.memory_space<smem>>) attributes {dimension_semantics = [], scalar_prefetch = 0 : i64, scratch_operands = 0 : i64, tpu.core_type = #tpu.core_type<tc>} {
    %cst = arith.constant 1.000000e+00 : f32
    %0 = vector.broadcast %cst : f32 to vector<8x1xf32>
    %c0 = arith.constant 0 : index
    %c0_0 = arith.constant 0 : index
    %c0_1 = arith.constant 0 : index
    %1 = vector.load %arg2[%c0, %c0_0, %c0_1] : memref<3x32x32xf32, #tpu.memory_space<vmem>>, vector<1x32x32xf32>
    %2 = vector.shape_cast %1 : vector<1x32x32xf32> to vector<32x32xf32>
    %c0_2 = arith.constant 0 : index
    %c0_3 = arith.constant 0 : index
    %c0_4 = arith.constant 0 : index
    %3 = vector.load %arg3[%c0_2, %c0_3, %c0_4] : memref<3x1x32xf32, #tpu.memory_space<vmem>>, vector<1x1x32xf32>
    %4 = vector.shape_cast %3 : vector<1x1x32xf32> to vector<1x32xf32>
    %c0_5 = arith.constant 0 : index
    %c0_6 = arith.constant 0 : index
    %c0_7 = arith.constant 0 : index
    %5 = vector.load %arg4[%c0_5, %c0_6, %c0_7] : memref<3x32x32xf32, #tpu.memory_space<vmem>>, vector<1x32x32xf32>
    %6 = vector.shape_cast %5 : vector<1x32x32xf32> to vector<32x32xf32>
    %c0_8 = arith.constant 0 : index
    %c0_9 = arith.constant 0 : index
    %c0_10 = arith.constant 0 : index
    %7 = vector.load %arg5[%c0_8, %c0_9, %c0_10] : memref<3x1x32xf32, #tpu.memory_space<vmem>>, vector<1x1x32xf32>
    %8 = vector.shape_cast %7 : vector<1x1x32xf32> to vector<1x32xf32>
    %c0_11 = arith.constant 0 : index
    %c0_12 = arith.constant 0 : index
    %c0_13 = arith.constant 0 : index
    %9 = vector.load %arg0[%c0_11, %c0_12, %c0_13] : memref<3x8x32xf32, #tpu.memory_space<vmem>>, vector<1x8x32xf32>
    %10 = vector.shape_cast %9 : vector<1x8x32xf32> to vector<8x32xf32>
    %cst_14 = arith.constant dense<0.000000e+00> : vector<8x32xf32>
    %11 = tpu.matmul %10, %2, %cst_14 {dimension_numbers = #tpu.dot_dimension_numbers<[1], [0], [0], [1], [0, 0, 1, 1], [], []>} : vector<8x32xf32>, vector<32x32xf32>, vector<8x32xf32> -> vector<8x32xf32>
    %12 = vector.broadcast %4 : vector<1x32xf32> to vector<8x32xf32>
    %13 = arith.addf %11, %12 : vector<8x32xf32>
    %cst_15 = arith.constant 0.000000e+00 : f32
    %14 = vector.broadcast %cst_15 : f32 to vector<8x32xf32>
    %15 = arith.maximumf %13, %14 : vector<8x32xf32>
    %cst_16 = arith.constant dense<0.000000e+00> : vector<8x32xf32>
    %16 = tpu.matmul %15, %6, %cst_16 {dimension_numbers = #tpu.dot_dimension_numbers<[1], [0], [0], [1], [0, 0, 1, 1], [], []>} : vector<8x32xf32>, vector<32x32xf32>, vector<8x32xf32> -> vector<8x32xf32>
    %17 = vector.broadcast %8 : vector<1x32xf32> to vector<8x32xf32>
    %18 = arith.addf %16, %17 : vector<8x32xf32>
    %c0_17 = arith.constant 0 : index
    %c0_18 = arith.constant 0 : index
    %c0_19 = arith.constant 0 : index
    %19 = vector.load %arg1[%c0_17, %c0_18, %c0_19] : memref<3x8x32xf32, #tpu.memory_space<vmem>>, vector<1x8x32xf32>
    %20 = vector.shape_cast %19 : vector<1x8x32xf32> to vector<8x32xf32>
    %cst_20 = arith.constant dense<0.000000e+00> : vector<8x32xf32>
    %21 = tpu.matmul %20, %2, %cst_20 {dimension_numbers = #tpu.dot_dimension_numbers<[1], [0], [0], [1], [0, 0, 1, 1], [], []>} : vector<8x32xf32>, vector<32x32xf32>, vector<8x32xf32> -> vector<8x32xf32>
    %22 = vector.broadcast %4 : vector<1x32xf32> to vector<8x32xf32>
    %23 = arith.addf %21, %22 : vector<8x32xf32>
    %cst_21 = arith.constant 0.000000e+00 : f32
    %24 = vector.broadcast %cst_21 : f32 to vector<8x32xf32>
    %25 = arith.maximumf %23, %24 : vector<8x32xf32>
    %cst_22 = arith.constant dense<0.000000e+00> : vector<8x32xf32>
    %26 = tpu.matmul %25, %6, %cst_22 {dimension_numbers = #tpu.dot_dimension_numbers<[1], [0], [0], [1], [0, 0, 1, 1], [], []>} : vector<8x32xf32>, vector<32x32xf32>, vector<8x32xf32> -> vector<8x32xf32>
    %27 = vector.broadcast %8 : vector<1x32xf32> to vector<8x32xf32>
    %28 = arith.addf %26, %27 : vector<8x32xf32>
    %29 = arith.mulf %18, %18 : vector<8x32xf32>
    %cst_23 = arith.constant dense<0.000000e+00> : vector<8xf32>
    %30 = vector.multi_reduction <add>, %29, %cst_23 [1] : vector<8x32xf32> to vector<8xf32>
    %31 = vector.shape_cast %30 : vector<8xf32> to vector<8x1xf32>
    %32 = math.sqrt %31 : vector<8x1xf32>
    %cst_24 = arith.constant 9.99999996E-13 : f32
    %33 = vector.broadcast %cst_24 : f32 to vector<8x1xf32>
    %34 = arith.maximumf %32, %33 : vector<8x1xf32>
    %35 = vector.broadcast %34 : vector<8x1xf32> to vector<8x32xf32>
    %36 = arith.divf %18, %35 : vector<8x32xf32>
    %37 = arith.mulf %28, %28 : vector<8x32xf32>
    %cst_25 = arith.constant dense<0.000000e+00> : vector<8xf32>
    %38 = vector.multi_reduction <add>, %37, %cst_25 [1] : vector<8x32xf32> to vector<8xf32>
    %39 = vector.shape_cast %38 : vector<8xf32> to vector<8x1xf32>
    %40 = math.sqrt %39 : vector<8x1xf32>
    %cst_26 = arith.constant 9.99999996E-13 : f32
    %41 = vector.broadcast %cst_26 : f32 to vector<8x1xf32>
    %42 = arith.maximumf %40, %41 : vector<8x1xf32>
    %43 = vector.broadcast %42 : vector<8x1xf32> to vector<8x32xf32>
    %44 = arith.divf %28, %43 : vector<8x32xf32>
    %cst_27 = arith.constant dense<0.000000e+00> : vector<8x8xf32>
    %45 = tpu.matmul %36, %44, %cst_27 {dimension_numbers = #tpu.dot_dimension_numbers<[1], [1], [0], [0], [0, 0, 1, 0], [], []>} : vector<8x32xf32>, vector<8x32xf32>, vector<8x8xf32> -> vector<8x8xf32>
    %cst_28 = arith.constant 1.66666663 : f32
    %46 = vector.broadcast %cst_28 : f32 to vector<8x8xf32>
    %47 = arith.mulf %45, %46 : vector<8x8xf32>
    %48 = math.exp %47 : vector<8x8xf32>
    %cst_29 = arith.constant dense<0.000000e+00> : vector<8x8xf32>
    %49 = tpu.matmul %36, %36, %cst_29 {dimension_numbers = #tpu.dot_dimension_numbers<[1], [1], [0], [0], [0, 0, 1, 0], [], []>} : vector<8x32xf32>, vector<8x32xf32>, vector<8x8xf32> -> vector<8x8xf32>
    %cst_30 = arith.constant 1.66666663 : f32
    %50 = vector.broadcast %cst_30 : f32 to vector<8x8xf32>
    %51 = arith.mulf %49, %50 : vector<8x8xf32>
    %52 = math.exp %51 : vector<8x8xf32>
    %cst_31 = arith.constant dense<0.000000e+00> : vector<8x8xf32>
    %53 = tpu.matmul %44, %44, %cst_31 {dimension_numbers = #tpu.dot_dimension_numbers<[1], [1], [0], [0], [0, 0, 1, 0], [], []>} : vector<8x32xf32>, vector<8x32xf32>, vector<8x8xf32> -> vector<8x8xf32>
    %cst_32 = arith.constant 1.66666663 : f32
    %54 = vector.broadcast %cst_32 : f32 to vector<8x8xf32>
    %55 = arith.mulf %53, %54 : vector<8x8xf32>
    %56 = math.exp %55 : vector<8x8xf32>
    %57 = arith.mulf %36, %44 : vector<8x32xf32>
    %cst_33 = arith.constant dense<0.000000e+00> : vector<8xf32>
    %58 = vector.multi_reduction <add>, %57, %cst_33 [1] : vector<8x32xf32> to vector<8xf32>
    %59 = vector.shape_cast %58 : vector<8xf32> to vector<8x1xf32>
    %cst_34 = arith.constant 1.66666663 : f32
    %60 = vector.broadcast %cst_34 : f32 to vector<8x1xf32>
    %61 = arith.mulf %59, %60 : vector<8x1xf32>
    %62 = math.exp %61 : vector<8x1xf32>
    %63 = arith.mulf %36, %36 : vector<8x32xf32>
    %cst_35 = arith.constant dense<0.000000e+00> : vector<8xf32>
    %64 = vector.multi_reduction <add>, %63, %cst_35 [1] : vector<8x32xf32> to vector<8xf32>
    %65 = vector.shape_cast %64 : vector<8xf32> to vector<8x1xf32>
    %cst_36 = arith.constant 1.66666663 : f32
    %66 = vector.broadcast %cst_36 : f32 to vector<8x1xf32>
    %67 = arith.mulf %65, %66 : vector<8x1xf32>
    %68 = math.exp %67 : vector<8x1xf32>
    %69 = arith.mulf %44, %44 : vector<8x32xf32>
    %cst_37 = arith.constant dense<0.000000e+00> : vector<8xf32>
    %70 = vector.multi_reduction <add>, %69, %cst_37 [1] : vector<8x32xf32> to vector<8xf32>
    %71 = vector.shape_cast %70 : vector<8xf32> to vector<8x1xf32>
    %cst_38 = arith.constant 1.66666663 : f32
    %72 = vector.broadcast %cst_38 : f32 to vector<8x1xf32>
    %73 = arith.mulf %71, %72 : vector<8x1xf32>
    %74 = math.exp %73 : vector<8x1xf32>
    %cst_39 = arith.constant dense<0.000000e+00> : vector<8xf32>
    %75 = vector.multi_reduction <add>, %52, %cst_39 [1] : vector<8x8xf32> to vector<8xf32>
    %76 = vector.shape_cast %75 : vector<8xf32> to vector<8x1xf32>
    %cst_40 = arith.constant dense<0.000000e+00> : vector<8xf32>
    %77 = vector.multi_reduction <add>, %56, %cst_40 [1] : vector<8x8xf32> to vector<8xf32>
    %78 = vector.shape_cast %77 : vector<8xf32> to vector<8x1xf32>
    %cst_41 = arith.constant dense<0.000000e+00> : vector<8xf32>
    %79 = vector.multi_reduction <add>, %48, %cst_41 [1] : vector<8x8xf32> to vector<8xf32>
    %80 = vector.shape_cast %79 : vector<8xf32> to vector<8x1xf32>
    %cst_42 = arith.constant dense<0.000000e+00> : vector<8x1xf32>
    %81 = tpu.matmul %48, %0, %cst_42 {dimension_numbers = #tpu.dot_dimension_numbers<[0], [0], [1], [1], [0, 1, 1, 1], [], []>} : vector<8x8xf32>, vector<8x1xf32>, vector<8x1xf32> -> vector<8x1xf32>
    %82 = arith.addf %76, %80 : vector<8x1xf32>
    %83 = arith.subf %82, %68 : vector<8x1xf32>
    %84 = arith.divf %62, %83 : vector<8x1xf32>
    %85 = math.log %84 : vector<8x1xf32>
    %cst_43 = arith.constant 0.000000e+00 : f32
    %86 = vector.broadcast %cst_43 : f32 to vector<8x1xf32>
    %87 = arith.subf %86, %85 : vector<8x1xf32>
    %88 = arith.addf %78, %81 : vector<8x1xf32>
    %89 = arith.subf %88, %74 : vector<8x1xf32>
    %90 = arith.divf %62, %89 : vector<8x1xf32>
    %91 = math.log %90 : vector<8x1xf32>
    %cst_44 = arith.constant 0.000000e+00 : f32
    %92 = vector.broadcast %cst_44 : f32 to vector<8x1xf32>
    %93 = arith.subf %92, %91 : vector<8x1xf32>
    %94 = vector.shape_cast %87 : vector<8x1xf32> to vector<1x8x1xf32>
    %cst_45 = arith.constant dense<0.000000e+00> : vector<1xf32>
    %95 = vector.multi_reduction <add>, %94, %cst_45 [1, 2] : vector<1x8x1xf32> to vector<1xf32>
    %96 = vector.shape_cast %95 : vector<1xf32> to vector<1x1x1xf32>
    %97 = vector.extract %96[0, 0, 0] : f32 from vector<1x1x1xf32>
    %c0_46 = arith.constant 0 : index
    %c0_47 = arith.constant 0 : index
    %98 = memref.load %arg6[%c0_46, %c0_47] : memref<3x2xf32, #tpu.memory_space<smem>>
    memref.store %97, %arg6[%c0_46, %c0_47] : memref<3x2xf32, #tpu.memory_space<smem>>
    %99 = vector.shape_cast %93 : vector<8x1xf32> to vector<1x8x1xf32>
    %cst_48 = arith.constant dense<0.000000e+00> : vector<1xf32>
    %100 = vector.multi_reduction <add>, %99, %cst_48 [1, 2] : vector<1x8x1xf32> to vector<1xf32>
    %101 = vector.shape_cast %100 : vector<1xf32> to vector<1x1x1xf32>
    %102 = vector.extract %101[0, 0, 0] : f32 from vector<1x1x1xf32>
    %c0_49 = arith.constant 0 : index
    %c1 = arith.constant 1 : index
    %103 = memref.load %arg6[%c0_49, %c1] : memref<3x2xf32, #tpu.memory_space<smem>>
    memref.store %102, %arg6[%c0_49, %c1] : memref<3x2xf32, #tpu.memory_space<smem>>
    %c1_50 = arith.constant 1 : index
    %c0_51 = arith.constant 0 : index
    %c0_52 = arith.constant 0 : index
    %104 = vector.load %arg2[%c1_50, %c0_51, %c0_52] : memref<3x32x32xf32, #tpu.memory_space<vmem>>, vector<1x32x32xf32>
    %105 = vector.shape_cast %104 : vector<1x32x32xf32> to vector<32x32xf32>
    %c1_53 = arith.constant 1 : index
    %c0_54 = arith.constant 0 : index
    %c0_55 = arith.constant 0 : index
    %106 = vector.load %arg3[%c1_53, %c0_54, %c0_55] : memref<3x1x32xf32, #tpu.memory_space<vmem>>, vector<1x1x32xf32>
    %107 = vector.shape_cast %106 : vector<1x1x32xf32> to vector<1x32xf32>
    %c1_56 = arith.constant 1 : index
    %c0_57 = arith.constant 0 : index
    %c0_58 = arith.constant 0 : index
    %108 = vector.load %arg4[%c1_56, %c0_57, %c0_58] : memref<3x32x32xf32, #tpu.memory_space<vmem>>, vector<1x32x32xf32>
    %109 = vector.shape_cast %108 : vector<1x32x32xf32> to vector<32x32xf32>
    %c1_59 = arith.constant 1 : index
    %c0_60 = arith.constant 0 : index
    %c0_61 = arith.constant 0 : index
    %110 = vector.load %arg5[%c1_59, %c0_60, %c0_61] : memref<3x1x32xf32, #tpu.memory_space<vmem>>, vector<1x1x32xf32>
    %111 = vector.shape_cast %110 : vector<1x1x32xf32> to vector<1x32xf32>
    %c1_62 = arith.constant 1 : index
    %c0_63 = arith.constant 0 : index
    %c0_64 = arith.constant 0 : index
    %112 = vector.load %arg0[%c1_62, %c0_63, %c0_64] : memref<3x8x32xf32, #tpu.memory_space<vmem>>, vector<1x8x32xf32>
    %113 = vector.shape_cast %112 : vector<1x8x32xf32> to vector<8x32xf32>
    %cst_65 = arith.constant dense<0.000000e+00> : vector<8x32xf32>
    %114 = tpu.matmul %113, %105, %cst_65 {dimension_numbers = #tpu.dot_dimension_numbers<[1], [0], [0], [1], [0, 0, 1, 1], [], []>} : vector<8x32xf32>, vector<32x32xf32>, vector<8x32xf32> -> vector<8x32xf32>
    %115 = vector.broadcast %107 : vector<1x32xf32> to vector<8x32xf32>
    %116 = arith.addf %114, %115 : vector<8x32xf32>
    %cst_66 = arith.constant 0.000000e+00 : f32
    %117 = vector.broadcast %cst_66 : f32 to vector<8x32xf32>
    %118 = arith.maximumf %116, %117 : vector<8x32xf32>
    %cst_67 = arith.constant dense<0.000000e+00> : vector<8x32xf32>
    %119 = tpu.matmul %118, %109, %cst_67 {dimension_numbers = #tpu.dot_dimension_numbers<[1], [0], [0], [1], [0, 0, 1, 1], [], []>} : vector<8x32xf32>, vector<32x32xf32>, vector<8x32xf32> -> vector<8x32xf32>
    %120 = vector.broadcast %111 : vector<1x32xf32> to vector<8x32xf32>
    %121 = arith.addf %119, %120 : vector<8x32xf32>
    %c1_68 = arith.constant 1 : index
    %c0_69 = arith.constant 0 : index
    %c0_70 = arith.constant 0 : index
    %122 = vector.load %arg1[%c1_68, %c0_69, %c0_70] : memref<3x8x32xf32, #tpu.memory_space<vmem>>, vector<1x8x32xf32>
    %123 = vector.shape_cast %122 : vector<1x8x32xf32> to vector<8x32xf32>
    %cst_71 = arith.constant dense<0.000000e+00> : vector<8x32xf32>
    %124 = tpu.matmul %123, %105, %cst_71 {dimension_numbers = #tpu.dot_dimension_numbers<[1], [0], [0], [1], [0, 0, 1, 1], [], []>} : vector<8x32xf32>, vector<32x32xf32>, vector<8x32xf32> -> vector<8x32xf32>
    %125 = vector.broadcast %107 : vector<1x32xf32> to vector<8x32xf32>
    %126 = arith.addf %124, %125 : vector<8x32xf32>
    %cst_72 = arith.constant 0.000000e+00 : f32
    %127 = vector.broadcast %cst_72 : f32 to vector<8x32xf32>
    %128 = arith.maximumf %126, %127 : vector<8x32xf32>
    %cst_73 = arith.constant dense<0.000000e+00> : vector<8x32xf32>
    %129 = tpu.matmul %128, %109, %cst_73 {dimension_numbers = #tpu.dot_dimension_numbers<[1], [0], [0], [1], [0, 0, 1, 1], [], []>} : vector<8x32xf32>, vector<32x32xf32>, vector<8x32xf32> -> vector<8x32xf32>
    %130 = vector.broadcast %111 : vector<1x32xf32> to vector<8x32xf32>
    %131 = arith.addf %129, %130 : vector<8x32xf32>
    %132 = arith.mulf %121, %121 : vector<8x32xf32>
    %cst_74 = arith.constant dense<0.000000e+00> : vector<8xf32>
    %133 = vector.multi_reduction <add>, %132, %cst_74 [1] : vector<8x32xf32> to vector<8xf32>
    %134 = vector.shape_cast %133 : vector<8xf32> to vector<8x1xf32>
    %135 = math.sqrt %134 : vector<8x1xf32>
    %cst_75 = arith.constant 9.99999996E-13 : f32
    %136 = vector.broadcast %cst_75 : f32 to vector<8x1xf32>
    %137 = arith.maximumf %135, %136 : vector<8x1xf32>
    %138 = vector.broadcast %137 : vector<8x1xf32> to vector<8x32xf32>
    %139 = arith.divf %121, %138 : vector<8x32xf32>
    %140 = arith.mulf %131, %131 : vector<8x32xf32>
    %cst_76 = arith.constant dense<0.000000e+00> : vector<8xf32>
    %141 = vector.multi_reduction <add>, %140, %cst_76 [1] : vector<8x32xf32> to vector<8xf32>
    %142 = vector.shape_cast %141 : vector<8xf32> to vector<8x1xf32>
    %143 = math.sqrt %142 : vector<8x1xf32>
    %cst_77 = arith.constant 9.99999996E-13 : f32
    %144 = vector.broadcast %cst_77 : f32 to vector<8x1xf32>
    %145 = arith.maximumf %143, %144 : vector<8x1xf32>
    %146 = vector.broadcast %145 : vector<8x1xf32> to vector<8x32xf32>
    %147 = arith.divf %131, %146 : vector<8x32xf32>
    %cst_78 = arith.constant dense<0.000000e+00> : vector<8x8xf32>
    %148 = tpu.matmul %139, %147, %cst_78 {dimension_numbers = #tpu.dot_dimension_numbers<[1], [1], [0], [0], [0, 0, 1, 0], [], []>} : vector<8x32xf32>, vector<8x32xf32>, vector<8x8xf32> -> vector<8x8xf32>
    %cst_79 = arith.constant 1.66666663 : f32
    %149 = vector.broadcast %cst_79 : f32 to vector<8x8xf32>
    %150 = arith.mulf %148, %149 : vector<8x8xf32>
    %151 = math.exp %150 : vector<8x8xf32>
    %cst_80 = arith.constant dense<0.000000e+00> : vector<8x8xf32>
    %152 = tpu.matmul %139, %139, %cst_80 {dimension_numbers = #tpu.dot_dimension_numbers<[1], [1], [0], [0], [0, 0, 1, 0], [], []>} : vector<8x32xf32>, vector<8x32xf32>, vector<8x8xf32> -> vector<8x8xf32>
    %cst_81 = arith.constant 1.66666663 : f32
    %153 = vector.broadcast %cst_81 : f32 to vector<8x8xf32>
    %154 = arith.mulf %152, %153 : vector<8x8xf32>
    %155 = math.exp %154 : vector<8x8xf32>
    %cst_82 = arith.constant dense<0.000000e+00> : vector<8x8xf32>
    %156 = tpu.matmul %147, %147, %cst_82 {dimension_numbers = #tpu.dot_dimension_numbers<[1], [1], [0], [0], [0, 0, 1, 0], [], []>} : vector<8x32xf32>, vector<8x32xf32>, vector<8x8xf32> -> vector<8x8xf32>
    %cst_83 = arith.constant 1.66666663 : f32
    %157 = vector.broadcast %cst_83 : f32 to vector<8x8xf32>
    %158 = arith.mulf %156, %157 : vector<8x8xf32>
    %159 = math.exp %158 : vector<8x8xf32>
    %160 = arith.mulf %139, %147 : vector<8x32xf32>
    %cst_84 = arith.constant dense<0.000000e+00> : vector<8xf32>
    %161 = vector.multi_reduction <add>, %160, %cst_84 [1] : vector<8x32xf32> to vector<8xf32>
    %162 = vector.shape_cast %161 : vector<8xf32> to vector<8x1xf32>
    %cst_85 = arith.constant 1.66666663 : f32
    %163 = vector.broadcast %cst_85 : f32 to vector<8x1xf32>
    %164 = arith.mulf %162, %163 : vector<8x1xf32>
    %165 = math.exp %164 : vector<8x1xf32>
    %166 = arith.mulf %139, %139 : vector<8x32xf32>
    %cst_86 = arith.constant dense<0.000000e+00> : vector<8xf32>
    %167 = vector.multi_reduction <add>, %166, %cst_86 [1] : vector<8x32xf32> to vector<8xf32>
    %168 = vector.shape_cast %167 : vector<8xf32> to vector<8x1xf32>
    %cst_87 = arith.constant 1.66666663 : f32
    %169 = vector.broadcast %cst_87 : f32 to vector<8x1xf32>
    %170 = arith.mulf %168, %169 : vector<8x1xf32>
    %171 = math.exp %170 : vector<8x1xf32>
    %172 = arith.mulf %147, %147 : vector<8x32xf32>
    %cst_88 = arith.constant dense<0.000000e+00> : vector<8xf32>
    %173 = vector.multi_reduction <add>, %172, %cst_88 [1] : vector<8x32xf32> to vector<8xf32>
    %174 = vector.shape_cast %173 : vector<8xf32> to vector<8x1xf32>
    %cst_89 = arith.constant 1.66666663 : f32
    %175 = vector.broadcast %cst_89 : f32 to vector<8x1xf32>
    %176 = arith.mulf %174, %175 : vector<8x1xf32>
    %177 = math.exp %176 : vector<8x1xf32>
    %cst_90 = arith.constant dense<0.000000e+00> : vector<8xf32>
    %178 = vector.multi_reduction <add>, %155, %cst_90 [1] : vector<8x8xf32> to vector<8xf32>
    %179 = vector.shape_cast %178 : vector<8xf32> to vector<8x1xf32>
    %cst_91 = arith.constant dense<0.000000e+00> : vector<8xf32>
    %180 = vector.multi_reduction <add>, %159, %cst_91 [1] : vector<8x8xf32> to vector<8xf32>
    %181 = vector.shape_cast %180 : vector<8xf32> to vector<8x1xf32>
    %cst_92 = arith.constant dense<0.000000e+00> : vector<8xf32>
    %182 = vector.multi_reduction <add>, %151, %cst_92 [1] : vector<8x8xf32> to vector<8xf32>
    %183 = vector.shape_cast %182 : vector<8xf32> to vector<8x1xf32>
    %cst_93 = arith.constant dense<0.000000e+00> : vector<8x1xf32>
    %184 = tpu.matmul %151, %0, %cst_93 {dimension_numbers = #tpu.dot_dimension_numbers<[0], [0], [1], [1], [0, 1, 1, 1], [], []>} : vector<8x8xf32>, vector<8x1xf32>, vector<8x1xf32> -> vector<8x1xf32>
    %185 = arith.addf %179, %183 : vector<8x1xf32>
    %186 = arith.subf %185, %171 : vector<8x1xf32>
    %187 = arith.divf %165, %186 : vector<8x1xf32>
    %188 = math.log %187 : vector<8x1xf32>
    %cst_94 = arith.constant 0.000000e+00 : f32
    %189 = vector.broadcast %cst_94 : f32 to vector<8x1xf32>
    %190 = arith.subf %189, %188 : vector<8x1xf32>
    %191 = arith.addf %181, %184 : vector<8x1xf32>
    %192 = arith.subf %191, %177 : vector<8x1xf32>
    %193 = arith.divf %165, %192 : vector<8x1xf32>
    %194 = math.log %193 : vector<8x1xf32>
    %cst_95 = arith.constant 0.000000e+00 : f32
    %195 = vector.broadcast %cst_95 : f32 to vector<8x1xf32>
    %196 = arith.subf %195, %194 : vector<8x1xf32>
    %197 = vector.shape_cast %190 : vector<8x1xf32> to vector<1x8x1xf32>
    %cst_96 = arith.constant dense<0.000000e+00> : vector<1xf32>
    %198 = vector.multi_reduction <add>, %197, %cst_96 [1, 2] : vector<1x8x1xf32> to vector<1xf32>
    %199 = vector.shape_cast %198 : vector<1xf32> to vector<1x1x1xf32>
    %200 = vector.extract %199[0, 0, 0] : f32 from vector<1x1x1xf32>
    %c1_97 = arith.constant 1 : index
    %c0_98 = arith.constant 0 : index
    %201 = memref.load %arg6[%c1_97, %c0_98] : memref<3x2xf32, #tpu.memory_space<smem>>
    memref.store %200, %arg6[%c1_97, %c0_98] : memref<3x2xf32, #tpu.memory_space<smem>>
    %202 = vector.shape_cast %196 : vector<8x1xf32> to vector<1x8x1xf32>
    %cst_99 = arith.constant dense<0.000000e+00> : vector<1xf32>
    %203 = vector.multi_reduction <add>, %202, %cst_99 [1, 2] : vector<1x8x1xf32> to vector<1xf32>
    %204 = vector.shape_cast %203 : vector<1xf32> to vector<1x1x1xf32>
    %205 = vector.extract %204[0, 0, 0] : f32 from vector<1x1x1xf32>
    %c1_100 = arith.constant 1 : index
    %c1_101 = arith.constant 1 : index
    %206 = memref.load %arg6[%c1_100, %c1_101] : memref<3x2xf32, #tpu.memory_space<smem>>
    memref.store %205, %arg6[%c1_100, %c1_101] : memref<3x2xf32, #tpu.memory_space<smem>>
    %c2 = arith.constant 2 : index
    %c0_102 = arith.constant 0 : index
    %c0_103 = arith.constant 0 : index
    %207 = vector.load %arg2[%c2, %c0_102, %c0_103] : memref<3x32x32xf32, #tpu.memory_space<vmem>>, vector<1x32x32xf32>
    %208 = vector.shape_cast %207 : vector<1x32x32xf32> to vector<32x32xf32>
    %c2_104 = arith.constant 2 : index
    %c0_105 = arith.constant 0 : index
    %c0_106 = arith.constant 0 : index
    %209 = vector.load %arg3[%c2_104, %c0_105, %c0_106] : memref<3x1x32xf32, #tpu.memory_space<vmem>>, vector<1x1x32xf32>
    %210 = vector.shape_cast %209 : vector<1x1x32xf32> to vector<1x32xf32>
    %c2_107 = arith.constant 2 : index
    %c0_108 = arith.constant 0 : index
    %c0_109 = arith.constant 0 : index
    %211 = vector.load %arg4[%c2_107, %c0_108, %c0_109] : memref<3x32x32xf32, #tpu.memory_space<vmem>>, vector<1x32x32xf32>
    %212 = vector.shape_cast %211 : vector<1x32x32xf32> to vector<32x32xf32>
    %c2_110 = arith.constant 2 : index
    %c0_111 = arith.constant 0 : index
    %c0_112 = arith.constant 0 : index
    %213 = vector.load %arg5[%c2_110, %c0_111, %c0_112] : memref<3x1x32xf32, #tpu.memory_space<vmem>>, vector<1x1x32xf32>
    %214 = vector.shape_cast %213 : vector<1x1x32xf32> to vector<1x32xf32>
    %c2_113 = arith.constant 2 : index
    %c0_114 = arith.constant 0 : index
    %c0_115 = arith.constant 0 : index
    %215 = vector.load %arg0[%c2_113, %c0_114, %c0_115] : memref<3x8x32xf32, #tpu.memory_space<vmem>>, vector<1x8x32xf32>
    %216 = vector.shape_cast %215 : vector<1x8x32xf32> to vector<8x32xf32>
    %cst_116 = arith.constant dense<0.000000e+00> : vector<8x32xf32>
    %217 = tpu.matmul %216, %208, %cst_116 {dimension_numbers = #tpu.dot_dimension_numbers<[1], [0], [0], [1], [0, 0, 1, 1], [], []>} : vector<8x32xf32>, vector<32x32xf32>, vector<8x32xf32> -> vector<8x32xf32>
    %218 = vector.broadcast %210 : vector<1x32xf32> to vector<8x32xf32>
    %219 = arith.addf %217, %218 : vector<8x32xf32>
    %cst_117 = arith.constant 0.000000e+00 : f32
    %220 = vector.broadcast %cst_117 : f32 to vector<8x32xf32>
    %221 = arith.maximumf %219, %220 : vector<8x32xf32>
    %cst_118 = arith.constant dense<0.000000e+00> : vector<8x32xf32>
    %222 = tpu.matmul %221, %212, %cst_118 {dimension_numbers = #tpu.dot_dimension_numbers<[1], [0], [0], [1], [0, 0, 1, 1], [], []>} : vector<8x32xf32>, vector<32x32xf32>, vector<8x32xf32> -> vector<8x32xf32>
    %223 = vector.broadcast %214 : vector<1x32xf32> to vector<8x32xf32>
    %224 = arith.addf %222, %223 : vector<8x32xf32>
    %c2_119 = arith.constant 2 : index
    %c0_120 = arith.constant 0 : index
    %c0_121 = arith.constant 0 : index
    %225 = vector.load %arg1[%c2_119, %c0_120, %c0_121] : memref<3x8x32xf32, #tpu.memory_space<vmem>>, vector<1x8x32xf32>
    %226 = vector.shape_cast %225 : vector<1x8x32xf32> to vector<8x32xf32>
    %cst_122 = arith.constant dense<0.000000e+00> : vector<8x32xf32>
    %227 = tpu.matmul %226, %208, %cst_122 {dimension_numbers = #tpu.dot_dimension_numbers<[1], [0], [0], [1], [0, 0, 1, 1], [], []>} : vector<8x32xf32>, vector<32x32xf32>, vector<8x32xf32> -> vector<8x32xf32>
    %228 = vector.broadcast %210 : vector<1x32xf32> to vector<8x32xf32>
    %229 = arith.addf %227, %228 : vector<8x32xf32>
    %cst_123 = arith.constant 0.000000e+00 : f32
    %230 = vector.broadcast %cst_123 : f32 to vector<8x32xf32>
    %231 = arith.maximumf %229, %230 : vector<8x32xf32>
    %cst_124 = arith.constant dense<0.000000e+00> : vector<8x32xf32>
    %232 = tpu.matmul %231, %212, %cst_124 {dimension_numbers = #tpu.dot_dimension_numbers<[1], [0], [0], [1], [0, 0, 1, 1], [], []>} : vector<8x32xf32>, vector<32x32xf32>, vector<8x32xf32> -> vector<8x32xf32>
    %233 = vector.broadcast %214 : vector<1x32xf32> to vector<8x32xf32>
    %234 = arith.addf %232, %233 : vector<8x32xf32>
    %235 = arith.mulf %224, %224 : vector<8x32xf32>
    %cst_125 = arith.constant dense<0.000000e+00> : vector<8xf32>
    %236 = vector.multi_reduction <add>, %235, %cst_125 [1] : vector<8x32xf32> to vector<8xf32>
    %237 = vector.shape_cast %236 : vector<8xf32> to vector<8x1xf32>
    %238 = math.sqrt %237 : vector<8x1xf32>
    %cst_126 = arith.constant 9.99999996E-13 : f32
    %239 = vector.broadcast %cst_126 : f32 to vector<8x1xf32>
    %240 = arith.maximumf %238, %239 : vector<8x1xf32>
    %241 = vector.broadcast %240 : vector<8x1xf32> to vector<8x32xf32>
    %242 = arith.divf %224, %241 : vector<8x32xf32>
    %243 = arith.mulf %234, %234 : vector<8x32xf32>
    %cst_127 = arith.constant dense<0.000000e+00> : vector<8xf32>
    %244 = vector.multi_reduction <add>, %243, %cst_127 [1] : vector<8x32xf32> to vector<8xf32>
    %245 = vector.shape_cast %244 : vector<8xf32> to vector<8x1xf32>
    %246 = math.sqrt %245 : vector<8x1xf32>
    %cst_128 = arith.constant 9.99999996E-13 : f32
    %247 = vector.broadcast %cst_128 : f32 to vector<8x1xf32>
    %248 = arith.maximumf %246, %247 : vector<8x1xf32>
    %249 = vector.broadcast %248 : vector<8x1xf32> to vector<8x32xf32>
    %250 = arith.divf %234, %249 : vector<8x32xf32>
    %cst_129 = arith.constant dense<0.000000e+00> : vector<8x8xf32>
    %251 = tpu.matmul %242, %250, %cst_129 {dimension_numbers = #tpu.dot_dimension_numbers<[1], [1], [0], [0], [0, 0, 1, 0], [], []>} : vector<8x32xf32>, vector<8x32xf32>, vector<8x8xf32> -> vector<8x8xf32>
    %cst_130 = arith.constant 1.66666663 : f32
    %252 = vector.broadcast %cst_130 : f32 to vector<8x8xf32>
    %253 = arith.mulf %251, %252 : vector<8x8xf32>
    %254 = math.exp %253 : vector<8x8xf32>
    %cst_131 = arith.constant dense<0.000000e+00> : vector<8x8xf32>
    %255 = tpu.matmul %242, %242, %cst_131 {dimension_numbers = #tpu.dot_dimension_numbers<[1], [1], [0], [0], [0, 0, 1, 0], [], []>} : vector<8x32xf32>, vector<8x32xf32>, vector<8x8xf32> -> vector<8x8xf32>
    %cst_132 = arith.constant 1.66666663 : f32
    %256 = vector.broadcast %cst_132 : f32 to vector<8x8xf32>
    %257 = arith.mulf %255, %256 : vector<8x8xf32>
    %258 = math.exp %257 : vector<8x8xf32>
    %cst_133 = arith.constant dense<0.000000e+00> : vector<8x8xf32>
    %259 = tpu.matmul %250, %250, %cst_133 {dimension_numbers = #tpu.dot_dimension_numbers<[1], [1], [0], [0], [0, 0, 1, 0], [], []>} : vector<8x32xf32>, vector<8x32xf32>, vector<8x8xf32> -> vector<8x8xf32>
    %cst_134 = arith.constant 1.66666663 : f32
    %260 = vector.broadcast %cst_134 : f32 to vector<8x8xf32>
    %261 = arith.mulf %259, %260 : vector<8x8xf32>
    %262 = math.exp %261 : vector<8x8xf32>
    %263 = arith.mulf %242, %250 : vector<8x32xf32>
    %cst_135 = arith.constant dense<0.000000e+00> : vector<8xf32>
    %264 = vector.multi_reduction <add>, %263, %cst_135 [1] : vector<8x32xf32> to vector<8xf32>
    %265 = vector.shape_cast %264 : vector<8xf32> to vector<8x1xf32>
    %cst_136 = arith.constant 1.66666663 : f32
    %266 = vector.broadcast %cst_136 : f32 to vector<8x1xf32>
    %267 = arith.mulf %265, %266 : vector<8x1xf32>
    %268 = math.exp %267 : vector<8x1xf32>
    %269 = arith.mulf %242, %242 : vector<8x32xf32>
    %cst_137 = arith.constant dense<0.000000e+00> : vector<8xf32>
    %270 = vector.multi_reduction <add>, %269, %cst_137 [1] : vector<8x32xf32> to vector<8xf32>
    %271 = vector.shape_cast %270 : vector<8xf32> to vector<8x1xf32>
    %cst_138 = arith.constant 1.66666663 : f32
    %272 = vector.broadcast %cst_138 : f32 to vector<8x1xf32>
    %273 = arith.mulf %271, %272 : vector<8x1xf32>
    %274 = math.exp %273 : vector<8x1xf32>
    %275 = arith.mulf %250, %250 : vector<8x32xf32>
    %cst_139 = arith.constant dense<0.000000e+00> : vector<8xf32>
    %276 = vector.multi_reduction <add>, %275, %cst_139 [1] : vector<8x32xf32> to vector<8xf32>
    %277 = vector.shape_cast %276 : vector<8xf32> to vector<8x1xf32>
    %cst_140 = arith.constant 1.66666663 : f32
    %278 = vector.broadcast %cst_140 : f32 to vector<8x1xf32>
    %279 = arith.mulf %277, %278 : vector<8x1xf32>
    %280 = math.exp %279 : vector<8x1xf32>
    %cst_141 = arith.constant dense<0.000000e+00> : vector<8xf32>
    %281 = vector.multi_reduction <add>, %258, %cst_141 [1] : vector<8x8xf32> to vector<8xf32>
    %282 = vector.shape_cast %281 : vector<8xf32> to vector<8x1xf32>
    %cst_142 = arith.constant dense<0.000000e+00> : vector<8xf32>
    %283 = vector.multi_reduction <add>, %262, %cst_142 [1] : vector<8x8xf32> to vector<8xf32>
    %284 = vector.shape_cast %283 : vector<8xf32> to vector<8x1xf32>
    %cst_143 = arith.constant dense<0.000000e+00> : vector<8xf32>
    %285 = vector.multi_reduction <add>, %254, %cst_143 [1] : vector<8x8xf32> to vector<8xf32>
    %286 = vector.shape_cast %285 : vector<8xf32> to vector<8x1xf32>
    %cst_144 = arith.constant dense<0.000000e+00> : vector<8x1xf32>
    %287 = tpu.matmul %254, %0, %cst_144 {dimension_numbers = #tpu.dot_dimension_numbers<[0], [0], [1], [1], [0, 1, 1, 1], [], []>} : vector<8x8xf32>, vector<8x1xf32>, vector<8x1xf32> -> vector<8x1xf32>
    %288 = arith.addf %282, %286 : vector<8x1xf32>
    %289 = arith.subf %288, %274 : vector<8x1xf32>
    %290 = arith.divf %268, %289 : vector<8x1xf32>
    %291 = math.log %290 : vector<8x1xf32>
    %cst_145 = arith.constant 0.000000e+00 : f32
    %292 = vector.broadcast %cst_145 : f32 to vector<8x1xf32>
    %293 = arith.subf %292, %291 : vector<8x1xf32>
    %294 = arith.addf %284, %287 : vector<8x1xf32>
    %295 = arith.subf %294, %280 : vector<8x1xf32>
    %296 = arith.divf %268, %295 : vector<8x1xf32>
    %297 = math.log %296 : vector<8x1xf32>
    %cst_146 = arith.constant 0.000000e+00 : f32
    %298 = vector.broadcast %cst_146 : f32 to vector<8x1xf32>
    %299 = arith.subf %298, %297 : vector<8x1xf32>
    %300 = vector.shape_cast %293 : vector<8x1xf32> to vector<1x8x1xf32>
    %cst_147 = arith.constant dense<0.000000e+00> : vector<1xf32>
    %301 = vector.multi_reduction <add>, %300, %cst_147 [1, 2] : vector<1x8x1xf32> to vector<1xf32>
    %302 = vector.shape_cast %301 : vector<1xf32> to vector<1x1x1xf32>
    %303 = vector.extract %302[0, 0, 0] : f32 from vector<1x1x1xf32>
    %c2_148 = arith.constant 2 : index
    %c0_149 = arith.constant 0 : index
    %304 = memref.load %arg6[%c2_148, %c0_149] : memref<3x2xf32, #tpu.memory_space<smem>>
    memref.store %303, %arg6[%c2_148, %c0_149] : memref<3x2xf32, #tpu.memory_space<smem>>
    %305 = vector.shape_cast %299 : vector<8x1xf32> to vector<1x8x1xf32>
    %cst_150 = arith.constant dense<0.000000e+00> : vector<1xf32>
    %306 = vector.multi_reduction <add>, %305, %cst_150 [1, 2] : vector<1x8x1xf32> to vector<1xf32>
    %307 = vector.shape_cast %306 : vector<1xf32> to vector<1x1x1xf32>
    %308 = vector.extract %307[0, 0, 0] : f32 from vector<1x1x1xf32>
    %c2_151 = arith.constant 2 : index
    %c1_152 = arith.constant 1 : index
    %309 = memref.load %arg6[%c2_151, %c1_152] : memref<3x2xf32, #tpu.memory_space<smem>>
    memref.store %308, %arg6[%c2_151, %c1_152] : memref<3x2xf32, #tpu.memory_space<smem>>
    return
  }
}

</mosaic_0001>

<llo_original>
// kernel: mul.5
$region0: #{mul.5}
  #allocation0 [shape = 's32[1]{0}', space=sflag, size = 0x4, scoped, tag = 'scoped memory for mul.5']
  %s0 = inlined_call_operand.vmem [shape: f32[40], index: 0, kind: input, shape index: {}]
  %s1 = inlined_call_operand.vmem [shape: f32[40], index: 1, kind: input, shape index: {}]
  %s2 = inlined_call_operand.vmem [shape: f32[40], index: 2, kind: output, shape index: {}]
  %v3 = vld [vmem:[%s0] sm:$0x1]
  %v4 = vld [vmem:[%s1] sm:$0x1]
  %5 = xla_tuple %v3, %v4
  %6 = xla_tuple %5
  %v7 = vmul.f32 %v3, %v4
  %8 = xla_tuple %v7
  %9 = vst [vmem:[%s2] sm:$0x1] %v7

// kernel: div.5
$region0: #{div.5}
  #allocation0 [shape = 's32[1]{0}', space=sflag, size = 0x4, scoped, tag = 'scoped memory for div.5']
  %s0 = inlined_call_operand.vmem [shape: f32[40], index: 0, kind: input, shape index: {}]
  %s1 = inlined_call_operand.vmem [shape: f32[40], index: 1, kind: input, shape index: {}]
  %s2 = inlined_call_operand.vmem [shape: f32[40], index: 2, kind: output, shape index: {}]
  %v3 = vld [vmem:[%s0] sm:$0x1]
  %v4 = vld [vmem:[%s1] sm:$0x1]
  %5 = xla_tuple %v3, %v4
  %6 = xla_tuple %5
  %v7 = vrcp.pop %v4
  %v8 = vmul.f32 %v3, %v7
  %9 = xla_tuple %v8
  %10 = vst [vmem:[%s2] sm:$0x1] %v8

// kernel: recommender_forward.17
$region0: #{recommender_forward.17}
  #allocation0 [shape = 'u32[]', space=smem, size = 0x4, offset = 0x4, fixed_abs, tag = 'smem constant byte address 0x4 - core index']
  #allocation1 [shape = 'u32[144,128]{1,0:T(1,128)}', space=vmem, size = 0x12000, scoped, tag = 'internal scratch']
  %s0 = inlined_call_operand.vmem [shape: f32[16,32], index: 0, kind: input, shape index: {}, may-alias: {0,1}]
  %s1 = inlined_call_operand.vmem [shape: f32[16,32], index: 1, kind: input, shape index: {}, may-alias: {0,1}]
  %s2 = inlined_call_operand.vmem [shape: f32[16,16], index: 2, kind: output, shape index: {}]
  %s3 = sld [smem:[#allocation0]]
  $region18: #{recommender_forward.17} parent=0
    _
  %s5 = ssub.s32 1, %s3
  %s6 = scalar_select 0, %s5, %s3
  // Predicated region
  $region2: #{recommender_forward.17} parent=0 // pred_check
    _
  $region3: #{recommender_forward.17} parent=0 // pred_check_branch
    %8 = sbr.rel (0) target = $region5
  $region4: #{recommender_forward.17} parent=0 // pred_region
    _
  $region5: #{recommender_forward.17} parent=0 // pred_fallthru
    _
  // Predicated region
  $region6: #{recommender_forward.17} parent=0 // pred_check
    _
  $region7: #{recommender_forward.17} parent=0 // pred_check_branch
    %10 = sbr.rel (0) target = $region9
  $region8: #{recommender_forward.17} parent=0 // pred_region
    _
  $region9: #{recommender_forward.17} parent=0 // pred_fallthru
    _
  %v11 = vld [vmem:[%s0] sm:$0xff]
  %v12 = vld [vmem:[%s0 + $0x8] sm:$0xff]
  %v13 = vld [vmem:[%s1] sm:$0xff]
  %v14 = vld [vmem:[%s1 + $0x8] sm:$0xff]
  %v15 = vmul.f32 %v11, %v11
  %v16 = vmul.f32 %v12, %v12
  %vm17 = vcmask 261120
  %v18 = vsel %vm17, %v15, 0.0
  %19 = vadd.xlane.f32.xlu0 %v18
  %v20 = vpop.xlane.xlu0 %19
  %v21 = vsel %vm17, %v16, 0.0
  %22 = vadd.xlane.f32.xlu0 %v21
  %v23 = vpop.xlane.xlu0 %22
  %v24 = vrsqrt.pop %v20
  %v25 = vmul.f32 %v20, %v24
  %vm26 = vcmp.eq.f32.partialorder %v20, inf
  %v27 = vsel %vm26, %v20, %v25
  %vm28 = vcmp.eq.f32.partialorder %v20, 0.0
  %v29 = vand.u32 %v20, 2147483648
  %v30 = vsel %vm28, %v29, %v27
  %v31 = vrsqrt.pop %v23
  %v32 = vmul.f32 %v23, %v31
  %vm33 = vcmp.eq.f32.partialorder %v23, inf
  %v34 = vsel %vm33, %v23, %v32
  %vm35 = vcmp.eq.f32.partialorder %v23, 0.0
  %v36 = vand.u32 %v23, 2147483648
  %v37 = vsel %vm35, %v36, %v34
  %v38 = vmax.f32 %v30, 1e-12
  %v39 = vmax.f32 %v37, 1e-12
  %v40 = vrcp.pop %v38
  %v41 = vmul.f32 %v11, %v40
  %v42 = vrcp.pop %v39
  %v43 = vmul.f32 %v12, %v42
  %v44 = vmul.f32 %v13, %v13
  %v45 = vmul.f32 %v14, %v14
  %v46 = vsel %vm17, %v44, 0.0
  %47 = vadd.xlane.f32.xlu0 %v46
  %v48 = vpop.xlane.xlu0 %47
  %v49 = vsel %vm17, %v45, 0.0
  %50 = vadd.xlane.f32.xlu0 %v49
  %v51 = vpop.xlane.xlu0 %50
  %v52 = vrsqrt.pop %v48
  %v53 = vmul.f32 %v48, %v52
  %vm54 = vcmp.eq.f32.partialorder %v48, inf
  %v55 = vsel %vm54, %v48, %v53
  %vm56 = vcmp.eq.f32.partialorder %v48, 0.0
  %v57 = vand.u32 %v48, 2147483648
  %v58 = vsel %vm56, %v57, %v55
  %v59 = vrsqrt.pop %v51
  %v60 = vmul.f32 %v51, %v59
  %vm61 = vcmp.eq.f32.partialorder %v51, inf
  %v62 = vsel %vm61, %v51, %v60
  %vm63 = vcmp.eq.f32.partialorder %v51, 0.0
  %v64 = vand.u32 %v51, 2147483648
  %v65 = vsel %vm63, %v64, %v62
  %v66 = vmax.f32 %v58, 1e-12
  %v67 = vmax.f32 %v65, 1e-12
  %v68 = vrcp.pop %v66
  %v69 = vmul.f32 %v13, %v68
  %v70 = vrcp.pop %v67
  %v71 = vmul.f32 %v14, %v70
  %v73 = vsel %vm17, %v41, 0
  %v76 = vsel %vm17, %v43, 0
  %v79 = vsel %vm17, %v69, 0
  %v82 = vsel %vm17, %v71, 0
  %84 = vmatprep.subr.mxu0 0.0
  %85 = vmatpush1.xpose.msra.mxu0 %v79
  %86 = vmatprep.subr.mxu0 0.0
  %87 = vmatpush1.xpose.msra.mxu0 %v82
  %88 = vmatprep.subr.mxu0 0.0
  %89 = vmatpush1.xpose.msra.mxu0 0.0
  %90 = vmatprep.subr.mxu0 0.0
  %91 = vmatpush1.xpose.msra.mxu0 0.0
  %92 = vmatprep.subr.mxu0 0.0
  %93 = vmatpush1.xpose.msra.mxu0 0.0
  %94 = vmatprep.subr.mxu0 0.0
  %95 = vmatpush1.xpose.msra.mxu0 0.0
  %96 = vmatprep.subr.mxu0 0.0
  %97 = vmatpush1.xpose.msra.mxu0 0.0
  %98 = vmatprep.subr.mxu0 0.0
  %99 = vmatpush1.xpose.msra.mxu0 0.0
  %100 = vmatprep.subr.mxu0 0.0
  %101 = vmatpush1.xpose.msra.mxu0 0.0
  %102 = vmatprep.subr.mxu0 0.0
  %103 = vmatpush1.xpose.msra.mxu0 0.0
  %104 = vmatprep.subr.mxu0 0.0
  %105 = vmatpush1.xpose.msra.mxu0 0.0
  %106 = vmatprep.subr.mxu0 0.0
  %107 = vmatpush1.xpose.msra.mxu0 0.0
  %108 = vmatprep.subr.mxu0 0.0
  %109 = vmatpush1.xpose.msra.mxu0 0.0
  %110 = vmatprep.subr.mxu0 0.0
  %111 = vmatpush1.xpose.msra.mxu0 0.0
  %112 = vmatprep.subr.mxu0 0.0
  %113 = vmatpush1.xpose.msra.mxu0 0.0
  %114 = vmatprep.subr.mxu0 0.0
  %115 = vmatpush1.xpose.msra.mxu0 0.0
  %116 = vmatprep.subr.mxu0 0.0
  %117 = vmatpush1.xpose.msra.mxu0 0.0
  %118 = vmatprep.subr.mxu0 0.0
  %119 = vmatpush1.xpose.msra.mxu0 0.0
  %120 = vmatprep.subr.mxu0 0.0
  %121 = vmatpush1.xpose.msra.mxu0 0.0
  %122 = vmatprep.subr.mxu0 0.0
  %123 = vmatpush1.xpose.msra.mxu0 0.0
  %124 = vmatprep.subr.mxu0 0.0
  %125 = vmatpush1.xpose.msra.mxu0 0.0
  %126 = vmatprep.subr.mxu0 0.0
  %127 = vmatpush1.xpose.msra.mxu0 0.0
  %128 = vmatprep.subr.mxu0 0.0
  %129 = vmatpush1.xpose.msra.mxu0 0.0
  %130 = vmatprep.subr.mxu0 0.0
  %131 = vmatpush1.xpose.msra.mxu0 0.0
  %132 = vmatprep.subr.mxu0 0.0
  %133 = vmatpush1.xpose.msra.mxu0 0.0
  %134 = vmatprep.subr.mxu0 0.0
  %135 = vmatpush1.xpose.msra.mxu0 0.0
  %136 = vmatprep.subr.mxu0 0.0
  %137 = vmatpush1.xpose.msra.mxu0 0.0
  %138 = vmatprep.subr.mxu0 0.0
  %139 = vmatpush1.xpose.msra.mxu0 0.0
  %140 = vmatprep.subr.mxu0 0.0
  %141 = vmatpush1.xpose.msra.mxu0 0.0
  %142 = vmatprep.subr.mxu0 0.0
  %143 = vmatpush1.xpose.msra.mxu0 0.0
  %144 = vmatprep.subr.mxu0 0.0
  %145 = vmatpush1.xpose.msra.mxu0 0.0
  %146 = vmatprep.subr.mxu0 0.0
  %147 = vmatpush1.xpose.msra.mxu0 0.0
  %148 = vmatprep.mubr.f32.mxu0 0.0
  %149 = vmatmul.mubr.f32.gmra.mrb[0].mxu0 %v73
  %v150 = vpop.f32.mrb[0].mxu0
  %v151 = vadd.f32 0.0, %v150
  %v152 = vpop.f32.mrb[0].mxu0
  %153 = vmatprep.mubr.f32.mxu0 0.0
  %154 = vmatmul.mubr.f32.gmra.mrb[0].mxu0 %v76
  %v155 = vpop.f32.mrb[0].mxu0
  %v156 = vadd.f32 0.0, %v155
  %v157 = vpop.f32.mrb[0].mxu0
  %158 = vdwg.mxu0
  %vm159 = vcmask 130048
  %160 = vst.msk [vmem:[%s2] sm:$0xff] %vm159, %v151
  %161 = vst.msk [vmem:[%s2 + $0x8] sm:$0xff] %vm159, %v156
  // Predicated region
  $region10: #{recommender_forward.17} parent=0 // pred_check
    _
  $region11: #{recommender_forward.17} parent=0 // pred_check_branch
    %163 = sbr.rel (0) target = $region13
  $region12: #{recommender_forward.17} parent=0 // pred_region
    _
  $region13: #{recommender_forward.17} parent=0 // pred_fallthru
    _
  // Predicated region
  $region14: #{recommender_forward.17} parent=0 // pred_check
    _
  $region15: #{recommender_forward.17} parent=0 // pred_check_branch
    %165 = sbr.rel (0) target = $region17
  $region16: #{recommender_forward.17} parent=0 // pred_region
    _
  $region17: #{recommender_forward.17} parent=0 // pred_fallthru
    _

// kernel: recommender_forward.25
$region0: #{recommender_forward.25}
  #allocation0 [shape = 'u32[]', space=smem, size = 0x4, offset = 0x4, fixed_abs, tag = 'smem constant byte address 0x4 - core index']
  #allocation1 [shape = 'u32[144,128]{1,0:T(1,128)}', space=vmem, size = 0x12000, scoped, tag = 'internal scratch']
  %s0 = inlined_call_operand.vmem [shape: bf16[8,16], index: 0, kind: input, shape index: {}]
  %s1 = inlined_call_operand.vmem [shape: bf16[16,32], index: 1, kind: input, shape index: {}]
  %s2 = inlined_call_operand.vmem [shape: f32[8,32], index: 2, kind: output, shape index: {}]
  %s3 = sld [smem:[#allocation0]]
  $region18: #{recommender_forward.25} parent=0
    _
  %s5 = ssub.s32 1, %s3
  %s6 = scalar_select 0, %s5, %s3
  // Predicated region
  $region2: #{recommender_forward.25} parent=0 // pred_check
    _
  $region3: #{recommender_forward.25} parent=0 // pred_check_branch
    %8 = sbr.rel (0) target = $region5
  $region4: #{recommender_forward.25} parent=0 // pred_region
    _
  $region5: #{recommender_forward.25} parent=0 // pred_fallthru
    _
  // Predicated region
  $region6: #{recommender_forward.25} parent=0 // pred_check
    _
  $region7: #{recommender_forward.25} parent=0 // pred_check_branch
    %10 = sbr.rel (0) target = $region9
  $region8: #{recommender_forward.25} parent=0 // pred_region
    _
  $region9: #{recommender_forward.25} parent=0 // pred_fallthru
    _
  %v12 = vld [vmem:[%s0] sm:$0xf]
  %v13 = vld [vmem:[%s1] sm:$0xf]
  %v14 = vld [vmem:[%s1 + $0x4] sm:$0xf]
  %v17 = vunpack.c.l.b16 %v13
  %v18 = vunpack.c.l.b16 %v14
  %v19 = vpack.c.b16 %v18, %v17
  %vm21 = vcmask 130048
  %v23 = vsel %vm21, %v12, 0
  %25 = vmatprep.subr.bf16.mxu0 0
  %26 = vmatpush1.bf16.msra.mxu0 %v19
  %27 = vmatprep.subr.bf16.mxu0 0
  %28 = vmatpush1.bf16.msra.mxu0 0
  %29 = vmatprep.subr.bf16.mxu0 0
  %30 = vmatpush1.bf16.msra.mxu0 0
  %31 = vmatprep.subr.bf16.mxu0 0
  %32 = vmatpush1.bf16.msra.mxu0 0
  %33 = vmatprep.subr.bf16.mxu0 0
  %34 = vmatpush1.bf16.msra.mxu0 0
  %35 = vmatprep.subr.bf16.mxu0 0
  %36 = vmatpush1.bf16.msra.mxu0 0
  %37 = vmatprep.subr.bf16.mxu0 0
  %38 = vmatpush1.bf16.msra.mxu0 0
  %39 = vmatprep.subr.bf16.mxu0 0
  %40 = vmatpush1.bf16.msra.mxu0 0
  %41 = vmatprep.subr.bf16.mxu0 0
  %42 = vmatpush1.bf16.msra.mxu0 0
  %43 = vmatprep.subr.bf16.mxu0 0
  %44 = vmatpush1.bf16.msra.mxu0 0
  %45 = vmatprep.subr.bf16.mxu0 0
  %46 = vmatpush1.bf16.msra.mxu0 0
  %47 = vmatprep.subr.bf16.mxu0 0
  %48 = vmatpush1.bf16.msra.mxu0 0
  %49 = vmatprep.subr.bf16.mxu0 0
  %50 = vmatpush1.bf16.msra.mxu0 0
  %51 = vmatprep.subr.bf16.mxu0 0
  %52 = vmatpush1.bf16.msra.mxu0 0
  %53 = vmatprep.subr.bf16.mxu0 0
  %54 = vmatpush1.bf16.msra.mxu0 0
  %55 = vmatprep.subr.bf16.mxu0 0
  %56 = vmatpush1.bf16.msra.mxu0 0
  %57 = vmatprep.mubr.bf16.mxu0 0
  %58 = vmatmul.mubr.bf16.gmra.mrb[0].mxu0 %v23
  %v59 = vpop.f32.mrb[0].mxu0
  %v60 = vadd.f32 0.0, %v59
  %v61 = vpop.f32.mrb[0].mxu0
  %v62 = vpop.f32.mrb[0].mxu0
  %v63 = vpop.f32.mrb[0].mxu0
  %64 = vdwg.mxu0
  %vm65 = vcmask 261120
  %66 = vst.msk [vmem:[%s2] sm:$0xff] %vm65, %v60
  // Predicated region
  $region10: #{recommender_forward.25} parent=0 // pred_check
    _
  $region11: #{recommender_forward.25} parent=0 // pred_check_branch
    %68 = sbr.rel (0) target = $region13
  $region12: #{recommender_forward.25} parent=0 // pred_region
    _
  $region13: #{recommender_forward.25} parent=0 // pred_fallthru
    _
  // Predicated region
  $region14: #{recommender_forward.25} parent=0 // pred_check
    _
  $region15: #{recommender_forward.25} parent=0 // pred_check_branch
    %70 = sbr.rel (0) target = $region17
  $region16: #{recommender_forward.25} parent=0 // pred_region
    _
  $region17: #{recommender_forward.25} parent=0 // pred_fallthru
    _

// kernel: recommender_forward.28
$region0: #{recommender_forward.28}
  #allocation0 [shape = 'u32[]', space=smem, size = 0x4, offset = 0x4, fixed_abs, tag = 'smem constant byte address 0x4 - core index']
  #allocation1 [shape = 'u32[144,128]{1,0:T(1,128)}', space=vmem, size = 0x12000, scoped, tag = 'internal scratch']
  %s0 = inlined_call_operand.vmem [shape: bf16[8,16], index: 0, kind: input, shape index: {}]
  %s1 = inlined_call_operand.vmem [shape: bf16[8,32], index: 1, kind: input, shape index: {}]
  %s2 = inlined_call_operand.vmem [shape: f32[16,32], index: 2, kind: output, shape index: {}]
  %s3 = sld [smem:[#allocation0]]
  $region18: #{recommender_forward.28} parent=0
    _
  %s5 = ssub.s32 1, %s3
  %s6 = scalar_select 0, %s5, %s3
  // Predicated region
  $region2: #{recommender_forward.28} parent=0 // pred_check
    _
  $region3: #{recommender_forward.28} parent=0 // pred_check_branch
    %8 = sbr.rel (0) target = $region5
  $region4: #{recommender_forward.28} parent=0 // pred_region
    _
  $region5: #{recommender_forward.28} parent=0 // pred_fallthru
    _
  // Predicated region
  $region6: #{recommender_forward.28} parent=0 // pred_check
    _
  $region7: #{recommender_forward.28} parent=0 // pred_check_branch
    %10 = sbr.rel (0) target = $region9
  $region8: #{recommender_forward.28} parent=0 // pred_region
    _
  $region9: #{recommender_forward.28} parent=0 // pred_fallthru
    _
  %v12 = vld [vmem:[%s0] sm:$0xf]
  %v13 = vld [vmem:[%s1] sm:$0xf]
  %14 = vxpose.xlu0.c.b16.start [1/8] %v12, 128
  %15 = vxpose.xlu0.c.b16.cont [2/8] 0, 128
  %16 = vxpose.xlu0.c.b16.cont [3/8] 0, 128
  %17 = vxpose.xlu0.c.b16.cont [4/8] 0, 128
  %18 = vxpose.xlu0.c.b16.cont [5/8] 0, 128
  %19 = vxpose.xlu0.c.b16.cont [6/8] 0, 128
  %20 = vxpose.xlu0.c.b16.cont [7/8] 0, 128
  %21 = vxpose.xlu0.c.b16.end [8/8] 0, 128
  %v22 = vpop.trf.xlu0
  %v23 = vpop.trf.xlu0
  %v24 = vpop.trf.xlu0
  %v25 = vpop.trf.xlu0
  %v26 = vpop.trf.xlu0
  %v27 = vpop.trf.xlu0
  %v28 = vpop.trf.xlu0
  %v29 = vpop.trf.xlu0
  %vm30 = vcmask 64512
  %v32 = vsel %vm30, %v22, 0
  %vm34 = vcmask 1043456
  %v36 = vsel %vm34, %v13, 0
  %38 = vmatprep.subr.bf16.mxu0 0
  %39 = vmatpush1.bf16.msra.mxu0 %v36
  %40 = vmatprep.subr.bf16.mxu0 0
  %41 = vmatpush1.bf16.msra.mxu0 0
  %42 = vmatprep.subr.bf16.mxu0 0
  %43 = vmatpush1.bf16.msra.mxu0 0
  %44 = vmatprep.subr.bf16.mxu0 0
  %45 = vmatpush1.bf16.msra.mxu0 0
  %46 = vmatprep.subr.bf16.mxu0 0
  %47 = vmatpush1.bf16.msra.mxu0 0
  %48 = vmatprep.subr.bf16.mxu0 0
  %49 = vmatpush1.bf16.msra.mxu0 0
  %50 = vmatprep.subr.bf16.mxu0 0
  %51 = vmatpush1.bf16.msra.mxu0 0
  %52 = vmatprep.subr.bf16.mxu0 0
  %53 = vmatpush1.bf16.msra.mxu0 0
  %54 = vmatprep.subr.bf16.mxu0 0
  %55 = vmatpush1.bf16.msra.mxu0 0
  %56 = vmatprep.subr.bf16.mxu0 0
  %57 = vmatpush1.bf16.msra.mxu0 0
  %58 = vmatprep.subr.bf16.mxu0 0
  %59 = vmatpush1.bf16.msra.mxu0 0
  %60 = vmatprep.subr.bf16.mxu0 0
  %61 = vmatpush1.bf16.msra.mxu0 0
  %62 = vmatprep.subr.bf16.mxu0 0
  %63 = vmatpush1.bf16.msra.mxu0 0
  %64 = vmatprep.subr.bf16.mxu0 0
  %65 = vmatpush1.bf16.msra.mxu0 0
  %66 = vmatprep.subr.bf16.mxu0 0
  %67 = vmatpush1.bf16.msra.mxu0 0
  %68 = vmatprep.subr.bf16.mxu0 0
  %69 = vmatpush1.bf16.msra.mxu0 0
  %70 = vmatprep.mubr.bf16.mxu0 0
  %71 = vmatmul.mubr.bf16.gmra.mrb[0].mxu0 %v32
  %v72 = vpop.f32.mrb[0].mxu0
  %v73 = vadd.f32 0.0, %v72
  %v74 = vpop.f32.mrb[0].mxu0
  %v75 = vpop.f32.mrb[0].mxu0
  %v76 = vadd.f32 0.0, %v75
  %v77 = vpop.f32.mrb[0].mxu0
  %78 = vdwg.mxu0
  %vm79 = vcmask 261120
  %80 = vst.msk [vmem:[%s2] sm:$0xff] %vm79, %v73
  %81 = vst.msk [vmem:[%s2 + $0x8] sm:$0xff] %vm79, %v76
  // Predicated region
  $region10: #{recommender_forward.28} parent=0 // pred_check
    _
  $region11: #{recommender_forward.28} parent=0 // pred_check_branch
    %83 = sbr.rel (0) target = $region13
  $region12: #{recommender_forward.28} parent=0 // pred_region
    _
  $region13: #{recommender_forward.28} parent=0 // pred_fallthru
    _
  // Predicated region
  $region14: #{recommender_forward.28} parent=0 // pred_check
    _
  $region15: #{recommender_forward.28} parent=0 // pred_check_branch
    %85 = sbr.rel (0) target = $region17
  $region16: #{recommender_forward.28} parent=0 // pred_region
    _
  $region17: #{recommender_forward.28} parent=0 // pred_fallthru
    _

// kernel: recommender_forward.24
$region0: #{recommender_forward.24}
  #allocation0 [shape = 'u32[]', space=smem, size = 0x4, offset = 0x4, fixed_abs, tag = 'smem constant byte address 0x4 - core index']
  #allocation1 [shape = 'u32[144,128]{1,0:T(1,128)}', space=vmem, size = 0x12000, scoped, tag = 'internal scratch']
  %s0 = inlined_call_operand.vmem [shape: bf16[16,16], index: 0, kind: input, shape index: {}]
  %s1 = inlined_call_operand.vmem [shape: bf16[16,32], index: 1, kind: input, shape index: {}]
  %s2 = inlined_call_operand.vmem [shape: f32[16,32], index: 2, kind: output, shape index: {}]
  %s3 = sld [smem:[#allocation0]]
  $region18: #{recommender_forward.24} parent=0
    _
  %s5 = ssub.s32 1, %s3
  %s6 = scalar_select 0, %s5, %s3
  // Predicated region
  $region2: #{recommender_forward.24} parent=0 // pred_check
    _
  $region3: #{recommender_forward.24} parent=0 // pred_check_branch
    %8 = sbr.rel (0) target = $region5
  $region4: #{recommender_forward.24} parent=0 // pred_region
    _
  $region5: #{recommender_forward.24} parent=0 // pred_fallthru
    _
  // Predicated region
  $region6: #{recommender_forward.24} parent=0 // pred_check
    _
  $region7: #{recommender_forward.24} parent=0 // pred_check_branch
    %10 = sbr.rel (0) target = $region9
  $region8: #{recommender_forward.24} parent=0 // pred_region
    _
  $region9: #{recommender_forward.24} parent=0 // pred_fallthru
    _
  %v12 = vld [vmem:[%s0] sm:$0xf]
  %v13 = vld [vmem:[%s0 + $0x4] sm:$0xf]
  %v14 = vld [vmem:[%s1] sm:$0xf]
  %v15 = vld [vmem:[%s1 + $0x4] sm:$0xf]
  %v18 = vunpack.c.l.b16 %v12
  %v19 = vunpack.c.l.b16 %v13
  %v20 = vpack.c.b16 %v19, %v18
  %v23 = vunpack.c.l.b16 %v14
  %v24 = vunpack.c.l.b16 %v15
  %v25 = vpack.c.b16 %v24, %v23
  %vm27 = vcmask 130048
  %v29 = vsel %vm27, %v20, 0
  %31 = vmatprep.subr.bf16.mxu0 0
  %32 = vmatpush1.bf16.msra.mxu0 %v25
  %33 = vmatprep.subr.bf16.mxu0 0
  %34 = vmatpush1.bf16.msra.mxu0 0
  %35 = vmatprep.subr.bf16.mxu0 0
  %36 = vmatpush1.bf16.msra.mxu0 0
  %37 = vmatprep.subr.bf16.mxu0 0
  %38 = vmatpush1.bf16.msra.mxu0 0
  %39 = vmatprep.subr.bf16.mxu0 0
  %40 = vmatpush1.bf16.msra.mxu0 0
  %41 = vmatprep.subr.bf16.mxu0 0
  %42 = vmatpush1.bf16.msra.mxu0 0
  %43 = vmatprep.subr.bf16.mxu0 0
  %44 = vmatpush1.bf16.msra.mxu0 0
  %45 = vmatprep.subr.bf16.mxu0 0
  %46 = vmatpush1.bf16.msra.mxu0 0
  %47 = vmatprep.subr.bf16.mxu0 0
  %48 = vmatpush1.bf16.msra.mxu0 0
  %49 = vmatprep.subr.bf16.mxu0 0
  %50 = vmatpush1.bf16.msra.mxu0 0
  %51 = vmatprep.subr.bf16.mxu0 0
  %52 = vmatpush1.bf16.msra.mxu0 0
  %53 = vmatprep.subr.bf16.mxu0 0
  %54 = vmatpush1.bf16.msra.mxu0 0
  %55 = vmatprep.subr.bf16.mxu0 0
  %56 = vmatpush1.bf16.msra.mxu0 0
  %57 = vmatprep.subr.bf16.mxu0 0
  %58 = vmatpush1.bf16.msra.mxu0 0
  %59 = vmatprep.subr.bf16.mxu0 0
  %60 = vmatpush1.bf16.msra.mxu0 0
  %61 = vmatprep.subr.bf16.mxu0 0
  %62 = vmatpush1.bf16.msra.mxu0 0
  %63 = vmatprep.mubr.bf16.mxu0 0
  %64 = vmatmul.mubr.bf16.gmra.mrb[0].mxu0 %v29
  %v65 = vpop.f32.mrb[0].mxu0
  %v66 = vadd.f32 0.0, %v65
  %v67 = vpop.f32.mrb[0].mxu0
  %v68 = vpop.f32.mrb[0].mxu0
  %v69 = vadd.f32 0.0, %v68
  %v70 = vpop.f32.mrb[0].mxu0
  %71 = vdwg.mxu0
  %v72 = vmul.f32 %v66, %v66
  %v73 = vmul.f32 %v69, %v69
  %vm74 = vcmask 261120
  %v75 = vsel %vm74, %v72, 0.0
  %76 = vadd.xlane.f32.xlu0 %v75
  %v77 = vpop.xlane.xlu0 %76
  %v78 = vsel %vm74, %v73, 0.0
  %79 = vadd.xlane.f32.xlu0 %v78
  %v80 = vpop.xlane.xlu0 %79
  %v81 = vrsqrt.pop %v77
  %v82 = vmul.f32 %v77, %v81
  %vm83 = vcmp.eq.f32.partialorder %v77, inf
  %v84 = vsel %vm83, %v77, %v82
  %vm85 = vcmp.eq.f32.partialorder %v77, 0.0
  %v86 = vand.u32 %v77, 2147483648
  %v87 = vsel %vm85, %v86, %v84
  %v88 = vrsqrt.pop %v80
  %v89 = vmul.f32 %v80, %v88
  %vm90 = vcmp.eq.f32.partialorder %v80, inf
  %v91 = vsel %vm90, %v80, %v89
  %vm92 = vcmp.eq.f32.partialorder %v80, 0.0
  %v93 = vand.u32 %v80, 2147483648
  %v94 = vsel %vm92, %v93, %v91
  %v95 = vmax.f32 %v87, 1e-12
  %v96 = vmax.f32 %v94, 1e-12
  %v97 = vrcp.pop %v95
  %v98 = vmul.f32 %v66, %v97
  %v99 = vrcp.pop %v96
  %v100 = vmul.f32 %v69, %v99
  %101 = vst.msk [vmem:[%s2] sm:$0xff] %vm74, %v98
  %102 = vst.msk [vmem:[%s2 + $0x8] sm:$0xff] %vm74, %v100
  // Predicated region
  $region10: #{recommender_forward.24} parent=0 // pred_check
    _
  $region11: #{recommender_forward.24} parent=0 // pred_check_branch
    %104 = sbr.rel (0) target = $region13
  $region12: #{recommender_forward.24} parent=0 // pred_region
    _
  $region13: #{recommender_forward.24} parent=0 // pred_fallthru
    _
  // Predicated region
  $region14: #{recommender_forward.24} parent=0 // pred_check
    _
  $region15: #{recommender_forward.24} parent=0 // pred_check_branch
    %106 = sbr.rel (0) target = $region17
  $region16: #{recommender_forward.24} parent=0 // pred_region
    _
  $region17: #{recommender_forward.24} parent=0 // pred_fallthru
    _

// kernel: recommender_forward.21
$region0: #{recommender_forward.21}
  #allocation0 [shape = 'u32[]', space=smem, size = 0x4, offset = 0x4, fixed_abs, tag = 'smem constant byte address 0x4 - core index']
  #allocation1 [shape = 'u32[144,128]{1,0:T(1,128)}', space=vmem, size = 0x12000, scoped, tag = 'internal scratch']
  %s0 = inlined_call_operand.vmem [shape: bf16[16,16], index: 0, kind: input, shape index: {}]
  %s1 = inlined_call_operand.vmem [shape: bf16[16,32], index: 1, kind: input, shape index: {}]
  %s2 = inlined_call_operand.vmem [shape: f32[16,32], index: 2, kind: output, shape index: {}]
  %s3 = sld [smem:[#allocation0]]
  $region18: #{recommender_forward.21} parent=0
    _
  %s5 = ssub.s32 1, %s3
  %s6 = scalar_select 0, %s5, %s3
  // Predicated region
  $region2: #{recommender_forward.21} parent=0 // pred_check
    _
  $region3: #{recommender_forward.21} parent=0 // pred_check_branch
    %8 = sbr.rel (0) target = $region5
  $region4: #{recommender_forward.21} parent=0 // pred_region
    _
  $region5: #{recommender_forward.21} parent=0 // pred_fallthru
    _
  // Predicated region
  $region6: #{recommender_forward.21} parent=0 // pred_check
    _
  $region7: #{recommender_forward.21} parent=0 // pred_check_branch
    %10 = sbr.rel (0) target = $region9
  $region8: #{recommender_forward.21} parent=0 // pred_region
    _
  $region9: #{recommender_forward.21} parent=0 // pred_fallthru
    _
  %v12 = vld [vmem:[%s0] sm:$0xf]
  %v13 = vld [vmem:[%s0 + $0x4] sm:$0xf]
  %v14 = vld [vmem:[%s1] sm:$0xf]
  %v15 = vld [vmem:[%s1 + $0x4] sm:$0xf]
  %v18 = vunpack.c.l.b16 %v12
  %v19 = vunpack.c.l.b16 %v13
  %v20 = vpack.c.b16 %v19, %v18
  %v23 = vunpack.c.l.b16 %v14
  %v24 = vunpack.c.l.b16 %v15
  %v25 = vpack.c.b16 %v24, %v23
  %vm27 = vcmask 130048
  %v29 = vsel %vm27, %v20, 0
  %31 = vmatprep.subr.bf16.mxu0 0
  %32 = vmatpush1.bf16.msra.mxu0 %v25
  %33 = vmatprep.subr.bf16.mxu0 0
  %34 = vmatpush1.bf16.msra.mxu0 0
  %35 = vmatprep.subr.bf16.mxu0 0
  %36 = vmatpush1.bf16.msra.mxu0 0
  %37 = vmatprep.subr.bf16.mxu0 0
  %38 = vmatpush1.bf16.msra.mxu0 0
  %39 = vmatprep.subr.bf16.mxu0 0
  %40 = vmatpush1.bf16.msra.mxu0 0
  %41 = vmatprep.subr.bf16.mxu0 0
  %42 = vmatpush1.bf16.msra.mxu0 0
  %43 = vmatprep.subr.bf16.mxu0 0
  %44 = vmatpush1.bf16.msra.mxu0 0
  %45 = vmatprep.subr.bf16.mxu0 0
  %46 = vmatpush1.bf16.msra.mxu0 0
  %47 = vmatprep.subr.bf16.mxu0 0
  %48 = vmatpush1.bf16.msra.mxu0 0
  %49 = vmatprep.subr.bf16.mxu0 0
  %50 = vmatpush1.bf16.msra.mxu0 0
  %51 = vmatprep.subr.bf16.mxu0 0
  %52 = vmatpush1.bf16.msra.mxu0 0
  %53 = vmatprep.subr.bf16.mxu0 0
  %54 = vmatpush1.bf16.msra.mxu0 0
  %55 = vmatprep.subr.bf16.mxu0 0
  %56 = vmatpush1.bf16.msra.mxu0 0
  %57 = vmatprep.subr.bf16.mxu0 0
  %58 = vmatpush1.bf16.msra.mxu0 0
  %59 = vmatprep.subr.bf16.mxu0 0
  %60 = vmatpush1.bf16.msra.mxu0 0
  %61 = vmatprep.subr.bf16.mxu0 0
  %62 = vmatpush1.bf16.msra.mxu0 0
  %63 = vmatprep.mubr.bf16.mxu0 0
  %64 = vmatmul.mubr.bf16.gmra.mrb[0].mxu0 %v29
  %v65 = vpop.f32.mrb[0].mxu0
  %v66 = vadd.f32 0.0, %v65
  %v67 = vpop.f32.mrb[0].mxu0
  %v68 = vpop.f32.mrb[0].mxu0
  %v69 = vadd.f32 0.0, %v68
  %v70 = vpop.f32.mrb[0].mxu0
  %71 = vdwg.mxu0
  %vm72 = vcmask 261120
  %73 = vst.msk [vmem:[%s2] sm:$0xff] %vm72, %v66
  %74 = vst.msk [vmem:[%s2 + $0x8] sm:$0xff] %vm72, %v69
  // Predicated region
  $region10: #{recommender_forward.21} parent=0 // pred_check
    _
  $region11: #{recommender_forward.21} parent=0 // pred_check_branch
    %76 = sbr.rel (0) target = $region13
  $region12: #{recommender_forward.21} parent=0 // pred_region
    _
  $region13: #{recommender_forward.21} parent=0 // pred_fallthru
    _
  // Predicated region
  $region14: #{recommender_forward.21} parent=0 // pred_check
    _
  $region15: #{recommender_forward.21} parent=0 // pred_check_branch
    %78 = sbr.rel (0) target = $region17
  $region16: #{recommender_forward.21} parent=0 // pred_region
    _
  $region17: #{recommender_forward.21} parent=0 // pred_fallthru
    _

// kernel: recommender_forward.18
$region0: #{recommender_forward.18}
  #allocation0 [shape = 'u32[]', space=smem, size = 0x4, offset = 0x4, fixed_abs, tag = 'smem constant byte address 0x4 - core index']
  #allocation1 [shape = 'u32[144,128]{1,0:T(1,128)}', space=vmem, size = 0x12000, scoped, tag = 'internal scratch']
  #allocation2 [shape = 'f32[8,32]{1,0:T(8,128)}', space=vmem, size = 0x1000, scoped, tag = 'scratch operand']
  %s0 = inlined_call_operand.vmem [shape: bf16[8,16], index: 0, kind: input, shape index: {}]
  %s1 = inlined_call_operand.vmem [shape: bf16[16,32], index: 1, kind: input, shape index: {}]
  %s2 = inlined_call_operand.vmem [shape: f32[8,32], index: 2, kind: input, shape index: {}]
  %s3 = inlined_call_operand.vmem [shape: f32[3,32], index: 3, kind: input, shape index: {}]
  %s4 = inlined_call_operand.vmem [shape: f32[8,32], index: 4, kind: output, shape index: {}]
  %s5 = sld [smem:[#allocation0]]
  $region34: #{recommender_forward.18} parent=0
    _
  %s7 = ssub.s32 1, %s5
  %s8 = scalar_select 0, %s7, %s5
  // Predicated region
  $region2: #{recommender_forward.18} parent=0 // pred_check
    _
  $region3: #{recommender_forward.18} parent=0 // pred_check_branch
    %10 = sbr.rel (0) target = $region5
  $region4: #{recommender_forward.18} parent=0 // pred_region
    _
  $region5: #{recommender_forward.18} parent=0 // pred_fallthru
    _
  // Predicated region
  $region6: #{recommender_forward.18} parent=0 // pred_check
    _
  $region7: #{recommender_forward.18} parent=0 // pred_check_branch
    %12 = sbr.rel (0) target = $region9
  $region8: #{recommender_forward.18} parent=0 // pred_region
    _
  $region9: #{recommender_forward.18} parent=0 // pred_fallthru
    _
  // Predicated region
  $region10: #{recommender_forward.18} parent=0 // pred_check
    _
  $region11: #{recommender_forward.18} parent=0 // pred_check_branch
    %14 = sbr.rel (0) target = $region13
  $region12: #{recommender_forward.18} parent=0 // pred_region
    _
  $region13: #{recommender_forward.18} parent=0 // pred_fallthru
    _
  // Predicated region
  $region14: #{recommender_forward.18} parent=0 // pred_check
    _
  $region15: #{recommender_forward.18} parent=0 // pred_check_branch
    %16 = sbr.rel (0) target = $region17
  $region16: #{recommender_forward.18} parent=0 // pred_region
    _
  $region17: #{recommender_forward.18} parent=0 // pred_fallthru
    _
  %p18 = scmp.eq.s32.totalorder 0, 0
  // Predicated region
  $region18: #{recommender_forward.18} parent=0 // pred_check
    %p19 = pneg %p18
  $region19: #{recommender_forward.18} parent=0 // pred_check_branch
    %21 = sbr.rel (%p19) target = $region21
  $region20: #{recommender_forward.18} parent=0 // pred_region
    %vm22 = vcmask 261120
    %23 = vst.msk [vmem:[#allocation2] sm:$0xff] %vm22, 0.0
  $region21: #{recommender_forward.18} parent=0 // pred_fallthru
    _
  %v24 = vld [vmem:[#allocation2] sm:$0xff]
  %v25 = vld [vmem:[%s0] sm:$0xf]
  %v26 = vld [vmem:[%s1] sm:$0xf]
  %v27 = vld [vmem:[%s1 + $0x4] sm:$0xf]
  %v30 = vunpack.c.l.b16 %v26
  %v31 = vunpack.c.l.b16 %v27
  %v32 = vpack.c.b16 %v31, %v30
  %vm34 = vcmask 130048
  %v36 = vsel %vm34, %v25, 0
  %38 = vmatprep.subr.bf16.mxu0 0
  %39 = vmatpush1.bf16.msra.mxu0 %v32
  %40 = vmatprep.subr.bf16.mxu0 0
  %41 = vmatpush1.bf16.msra.mxu0 0
  %42 = vmatprep.subr.bf16.mxu0 0
  %43 = vmatpush1.bf16.msra.mxu0 0
  %44 = vmatprep.subr.bf16.mxu0 0
  %45 = vmatpush1.bf16.msra.mxu0 0
  %46 = vmatprep.subr.bf16.mxu0 0
  %47 = vmatpush1.bf16.msra.mxu0 0
  %48 = vmatprep.subr.bf16.mxu0 0
  %49 = vmatpush1.bf16.msra.mxu0 0
  %50 = vmatprep.subr.bf16.mxu0 0
  %51 = vmatpush1.bf16.msra.mxu0 0
  %52 = vmatprep.subr.bf16.mxu0 0
  %53 = vmatpush1.bf16.msra.mxu0 0
  %54 = vmatprep.subr.bf16.mxu0 0
  %55 = vmatpush1.bf16.msra.mxu0 0
  %56 = vmatprep.subr.bf16.mxu0 0
  %57 = vmatpush1.bf16.msra.mxu0 0
  %58 = vmatprep.subr.bf16.mxu0 0
  %59 = vmatpush1.bf16.msra.mxu0 0
  %60 = vmatprep.subr.bf16.mxu0 0
  %61 = vmatpush1.bf16.msra.mxu0 0
  %62 = vmatprep.subr.bf16.mxu0 0
  %63 = vmatpush1.bf16.msra.mxu0 0
  %64 = vmatprep.subr.bf16.mxu0 0
  %65 = vmatpush1.bf16.msra.mxu0 0
  %66 = vmatprep.subr.bf16.mxu0 0
  %67 = vmatpush1.bf16.msra.mxu0 0
  %68 = vmatprep.subr.bf16.mxu0 0
  %69 = vmatpush1.bf16.msra.mxu0 0
  %70 = vmatprep.mubr.bf16.mxu0 0
  %71 = vmatmul.mubr.bf16.gmra.mrb[0].mxu0 %v36
  %v72 = vpop.f32.mrb[0].mxu0
  %v73 = vadd.f32 0.0, %v72
  %v74 = vpop.f32.mrb[0].mxu0
  %v75 = vpop.f32.mrb[0].mxu0
  %v76 = vpop.f32.mrb[0].mxu0
  %77 = vdwg.mxu0
  %v78 = vadd.f32 %v24, %v73
  %vm79 = vcmask 261120
  %80 = vst.msk [vmem:[#allocation2] sm:$0xff] %vm79, %v78
  // Predicated region
  $region22: #{recommender_forward.18} parent=0 // pred_check
    %p81 = pneg %p18
  $region23: #{recommender_forward.18} parent=0 // pred_check_branch
    %83 = sbr.rel (%p81) target = $region25
  $region24: #{recommender_forward.18} parent=0 // pred_region
    %v84 = vld [vmem:[%s2] sm:$0xff]
    %v85 = vld [vmem:[%s3] sm:$0x7]
    %v87 = vsel %vm79, %v84, 0
    %v90 = vsel %vm79, %v85, 0
    %92 = vmatprep.subr.mxu0 0.0
    %93 = vmatpush1.xpose.msra.mxu0 %v90
    %94 = vmatprep.subr.mxu0 0.0
    %95 = vmatpush1.xpose.msra.mxu0 0.0
    %96 = vmatprep.subr.mxu0 0.0
    %97 = vmatpush1.xpose.msra.mxu0 0.0
    %98 = vmatprep.subr.mxu0 0.0
    %99 = vmatpush1.xpose.msra.mxu0 0.0
    %100 = vmatprep.subr.mxu0 0.0
    %101 = vmatpush1.xpose.msra.mxu0 0.0
    %102 = vmatprep.subr.mxu0 0.0
    %103 = vmatpush1.xpose.msra.mxu0 0.0
    %104 = vmatprep.subr.mxu0 0.0
    %105 = vmatpush1.xpose.msra.mxu0 0.0
    %106 = vmatprep.subr.mxu0 0.0
    %107 = vmatpush1.xpose.msra.mxu0 0.0
    %108 = vmatprep.subr.mxu0 0.0
    %109 = vmatpush1.xpose.msra.mxu0 0.0
    %110 = vmatprep.subr.mxu0 0.0
    %111 = vmatpush1.xpose.msra.mxu0 0.0
    %112 = vmatprep.subr.mxu0 0.0
    %113 = vmatpush1.xpose.msra.mxu0 0.0
    %114 = vmatprep.subr.mxu0 0.0
    %115 = vmatpush1.xpose.msra.mxu0 0.0
    %116 = vmatprep.subr.mxu0 0.0
    %117 = vmatpush1.xpose.msra.mxu0 0.0
    %118 = vmatprep.subr.mxu0 0.0
    %119 = vmatpush1.xpose.msra.mxu0 0.0
    %120 = vmatprep.subr.mxu0 0.0
    %121 = vmatpush1.xpose.msra.mxu0 0.0
    %122 = vmatprep.subr.mxu0 0.0
    %123 = vmatpush1.xpose.msra.mxu0 0.0
    %124 = vmatprep.subr.mxu0 0.0
    %125 = vmatpush1.xpose.msra.mxu0 0.0
    %126 = vmatprep.subr.mxu0 0.0
    %127 = vmatpush1.xpose.msra.mxu0 0.0
    %128 = vmatprep.subr.mxu0 0.0
    %129 = vmatpush1.xpose.msra.mxu0 0.0
    %130 = vmatprep.subr.mxu0 0.0
    %131 = vmatpush1.xpose.msra.mxu0 0.0
    %132 = vmatprep.subr.mxu0 0.0
    %133 = vmatpush1.xpose.msra.mxu0 0.0
    %134 = vmatprep.subr.mxu0 0.0
    %135 = vmatpush1.xpose.msra.mxu0 0.0
    %136 = vmatprep.subr.mxu0 0.0
    %137 = vmatpush1.xpose.msra.mxu0 0.0
    %138 = vmatprep.subr.mxu0 0.0
    %139 = vmatpush1.xpose.msra.mxu0 0.0
    %140 = vmatprep.subr.mxu0 0.0
    %141 = vmatpush1.xpose.msra.mxu0 0.0
    %142 = vmatprep.subr.mxu0 0.0
    %143 = vmatpush1.xpose.msra.mxu0 0.0
    %144 = vmatprep.subr.mxu0 0.0
    %145 = vmatpush1.xpose.msra.mxu0 0.0
    %146 = vmatprep.subr.mxu0 0.0
    %147 = vmatpush1.xpose.msra.mxu0 0.0
    %148 = vmatprep.subr.mxu0 0.0
    %149 = vmatpush1.xpose.msra.mxu0 0.0
    %150 = vmatprep.subr.mxu0 0.0
    %151 = vmatpush1.xpose.msra.mxu0 0.0
    %152 = vmatprep.subr.mxu0 0.0
    %153 = vmatpush1.xpose.msra.mxu0 0.0
    %154 = vmatprep.subr.mxu0 0.0
    %155 = vmatpush1.xpose.msra.mxu0 0.0
    %156 = vmatprep.mubr.f32.mxu0 0.0
    %157 = vmatmul.mubr.f32.gmra.mrb[0].mxu0 %v87
    %v158 = vpop.f32.mrb[0].mxu0
    %v159 = vadd.f32 0.0, %v158
    %v160 = vpop.f32.mrb[0].mxu0
    %161 = vdwg.mxu0
    %vm162 = vcmask 23552
    %v163 = vsel %vm162, %v159, -inf
    %164 = vmax.xlane.f32.xlu0 %v163
    %v165 = vpop.xlane.xlu0 %164
    %v166 = vsub.f32 %v159, %v165
    %v167 = vmul.f32 %v166, 1.442695
    %v168 = vpow.pop %v167
    %v169 = vsel %vm162, %v168, 0.0
    %170 = vadd.xlane.f32.xlu0 %v169
    %v171 = vpop.xlane.xlu0 %170
    %v172 = vrcp.pop %v171
    %v173 = vmul.f32 %v168, %v172
    %v175 = vsel %vm162, %v173, 0
    %vm177 = vcmask 1042432
    %v178 = vsel %vm177, %v85, 0
    %180 = vmatprep.subr.mxu0 0.0
    %181 = vmatpush1.msra.mxu0 %v178
    %182 = vmatprep.subr.mxu0 0.0
    %183 = vmatpush1.msra.mxu0 0.0
    %184 = vmatprep.subr.mxu0 0.0
    %185 = vmatpush1.msra.mxu0 0.0
    %186 = vmatprep.subr.mxu0 0.0
    %187 = vmatpush1.msra.mxu0 0.0
    %188 = vmatprep.subr.mxu0 0.0
    %189 = vmatpush1.msra.mxu0 0.0
    %190 = vmatprep.subr.mxu0 0.0
    %191 = vmatpush1.msra.mxu0 0.0
    %192 = vmatprep.subr.mxu0 0.0
    %193 = vmatpush1.msra.mxu0 0.0
    %194 = vmatprep.subr.mxu0 0.0
    %195 = vmatpush1.msra.mxu0 0.0
    %196 = vmatprep.subr.mxu0 0.0
    %197 = vmatpush1.msra.mxu0 0.0
    %198 = vmatprep.subr.mxu0 0.0
    %199 = vmatpush1.msra.mxu0 0.0
    %200 = vmatprep.subr.mxu0 0.0
    %201 = vmatpush1.msra.mxu0 0.0
    %202 = vmatprep.subr.mxu0 0.0
    %203 = vmatpush1.msra.mxu0 0.0
    %204 = vmatprep.subr.mxu0 0.0
    %205 = vmatpush1.msra.mxu0 0.0
    %206 = vmatprep.subr.mxu0 0.0
    %207 = vmatpush1.msra.mxu0 0.0
    %208 = vmatprep.subr.mxu0 0.0
    %209 = vmatpush1.msra.mxu0 0.0
    %210 = vmatprep.subr.mxu0 0.0
    %211 = vmatpush1.msra.mxu0 0.0
    %212 = vmatprep.subr.mxu0 0.0
    %213 = vmatpush1.msra.mxu0 0.0
    %214 = vmatprep.subr.mxu0 0.0
    %215 = vmatpush1.msra.mxu0 0.0
    %216 = vmatprep.subr.mxu0 0.0
    %217 = vmatpush1.msra.mxu0 0.0
    %218 = vmatprep.subr.mxu0 0.0
    %219 = vmatpush1.msra.mxu0 0.0
    %220 = vmatprep.subr.mxu0 0.0
    %221 = vmatpush1.msra.mxu0 0.0
    %222 = vmatprep.subr.mxu0 0.0
    %223 = vmatpush1.msra.mxu0 0.0
    %224 = vmatprep.subr.mxu0 0.0
    %225 = vmatpush1.msra.mxu0 0.0
    %226 = vmatprep.subr.mxu0 0.0
    %227 = vmatpush1.msra.mxu0 0.0
    %228 = vmatprep.subr.mxu0 0.0
    %229 = vmatpush1.msra.mxu0 0.0
    %230 = vmatprep.subr.mxu0 0.0
    %231 = vmatpush1.msra.mxu0 0.0
    %232 = vmatprep.subr.mxu0 0.0
    %233 = vmatpush1.msra.mxu0 0.0
    %234 = vmatprep.subr.mxu0 0.0
    %235 = vmatpush1.msra.mxu0 0.0
    %236 = vmatprep.subr.mxu0 0.0
    %237 = vmatpush1.msra.mxu0 0.0
    %238 = vmatprep.subr.mxu0 0.0
    %239 = vmatpush1.msra.mxu0 0.0
    %240 = vmatprep.subr.mxu0 0.0
    %241 = vmatpush1.msra.mxu0 0.0
    %242 = vmatprep.subr.mxu0 0.0
    %243 = vmatpush1.msra.mxu0 0.0
    %244 = vmatprep.mubr.f32.mxu0 0.0
    %245 = vmatmul.mubr.f32.gmra.mrb[0].mxu0 %v175
    %v246 = vpop.f32.mrb[0].mxu0
    %v247 = vadd.f32 0.0, %v246
    %v248 = vpop.f32.mrb[0].mxu0
    %249 = vdwg.mxu0
    %v250 = vld [vmem:[#allocation2] sm:$0xff]
    %v251 = vmul.f32 %v247, %v250
    %v252 = vadd.f32 %v250, %v251
    %v253 = vmul.f32 %v252, %v252
    %v254 = vsel %vm79, %v253, 0.0
    %255 = vadd.xlane.f32.xlu0 %v254
    %v256 = vpop.xlane.xlu0 %255
    %v257 = vrsqrt.pop %v256
    %v258 = vmul.f32 %v256, %v257
    %vm259 = vcmp.eq.f32.partialorder %v256, inf
    %v260 = vsel %vm259, %v256, %v258
    %vm261 = vcmp.eq.f32.partialorder %v256, 0.0
    %v262 = vand.u32 %v256, 2147483648
    %v263 = vsel %vm261, %v262, %v260
    %v264 = vmax.f32 %v263, 1e-12
    %v265 = vrcp.pop %v264
    %v266 = vmul.f32 %v252, %v265
    %267 = vst.msk [vmem:[%s4] sm:$0xff] %vm79, %v266
  $region25: #{recommender_forward.18} parent=0 // pred_fallthru
    _
  // Predicated region
  $region26: #{recommender_forward.18} parent=0 // pred_check
    _
  $region27: #{recommender_forward.18} parent=0 // pred_check_branch
    %269 = sbr.rel (0) target = $region29
  $region28: #{recommender_forward.18} parent=0 // pred_region
    _
  $region29: #{recommender_forward.18} parent=0 // pred_fallthru
    _
  // Predicated region
  $region30: #{recommender_forward.18} parent=0 // pred_check
    _
  $region31: #{recommender_forward.18} parent=0 // pred_check_branch
    %271 = sbr.rel (0) target = $region33
  $region32: #{recommender_forward.18} parent=0 // pred_region
    _
  $region33: #{recommender_forward.18} parent=0 // pred_fallthru
    _

// kernel: recommender_forward.33
$region0: #{recommender_forward.33}
  #allocation0 [shape = 'u32[]', space=smem, size = 0x4, offset = 0x4, fixed_abs, tag = 'smem constant byte address 0x4 - core index']
  #allocation1 [shape = 'u32[144,128]{1,0:T(1,128)}', space=vmem, size = 0x12000, scoped, tag = 'internal scratch']
  %s0 = inlined_call_operand.vmem [shape: f32[3,8,32], index: 0, kind: input, shape index: {}]
  %s1 = inlined_call_operand.vmem [shape: f32[3,8,32], index: 1, kind: input, shape index: {}]
  %s2 = inlined_call_operand.vmem [shape: f32[3,32,32], index: 2, kind: input, shape index: {}]
  %s3 = inlined_call_operand.vmem [shape: f32[3,1,32], index: 3, kind: input, shape index: {}]
  %s4 = inlined_call_operand.vmem [shape: f32[3,32,32], index: 4, kind: input, shape index: {}]
  %s5 = inlined_call_operand.vmem [shape: f32[3,1,32], index: 5, kind: input, shape index: {}]
  %s6 = inlined_call_operand.vmem [shape: f32[3,2], index: 6, kind: output, shape index: {}]
  %s7 = sld [smem:[#allocation0]]
  $region34: #{recommender_forward.33} parent=0
    _
  %s9 = ssub.s32 1, %s7
  %s10 = scalar_select 0, %s9, %s7
  $region1: #{recommender_forward.33} parent=0
    #allocation2 [shape = 'u8[2048]{0}', space=smem, size = 0x800, scoped, tag = 'output window, operand 0, single buffered']
    #allocation3 [shape = 's32[1]{0}', space=sflag, size = 0x4, scoped, tag = 'scoped memory for recommender_forward.33']
    %11 = vsyncpa [#allocation3], 0
    // Predicated region
    $region2: #{recommender_forward.33} parent=1 // pred_check
      _
    $region3: #{recommender_forward.33} parent=1 // pred_check_branch
      %13 = sbr.rel (0) target = $region5
    $region4: #{recommender_forward.33} parent=1 // pred_region
      _
    $region5: #{recommender_forward.33} parent=1 // pred_fallthru
      _
    // Predicated region
    $region6: #{recommender_forward.33} parent=1 // pred_check
      _
    $region7: #{recommender_forward.33} parent=1 // pred_check_branch
      %15 = sbr.rel (0) target = $region9
    $region8: #{recommender_forward.33} parent=1 // pred_region
      _
    $region9: #{recommender_forward.33} parent=1 // pred_fallthru
      _
    // Predicated region
    $region10: #{recommender_forward.33} parent=1 // pred_check
      _
    $region11: #{recommender_forward.33} parent=1 // pred_check_branch
      %17 = sbr.rel (0) target = $region13
    $region12: #{recommender_forward.33} parent=1 // pred_region
      _
    $region13: #{recommender_forward.33} parent=1 // pred_fallthru
      _
    // Predicated region
    $region14: #{recommender_forward.33} parent=1 // pred_check
      _
    $region15: #{recommender_forward.33} parent=1 // pred_check_branch
      %19 = sbr.rel (0) target = $region17
    $region16: #{recommender_forward.33} parent=1 // pred_region
      _
    $region17: #{recommender_forward.33} parent=1 // pred_fallthru
      _
    // Predicated region
    $region18: #{recommender_forward.33} parent=1 // pred_check
      _
    $region19: #{recommender_forward.33} parent=1 // pred_check_branch
      %21 = sbr.rel (0) target = $region21
    $region20: #{recommender_forward.33} parent=1 // pred_region
      _
    $region21: #{recommender_forward.33} parent=1 // pred_fallthru
      _
    // Predicated region
    $region22: #{recommender_forward.33} parent=1 // pred_check
      _
    $region23: #{recommender_forward.33} parent=1 // pred_check_branch
      %23 = sbr.rel (0) target = $region25
    $region24: #{recommender_forward.33} parent=1 // pred_region
      _
    $region25: #{recommender_forward.33} parent=1 // pred_fallthru
      _
    %v24 = vld [vmem:[%s2] sm:$0xff]
    %v25 = vld [vmem:[%s2 + $0x8] sm:$0xff]
    %v26 = vld [vmem:[%s2 + $0x10] sm:$0xff]
    %v27 = vld [vmem:[%s2 + $0x18] sm:$0xff]
    %v28 = vld [vmem:[%s3] sm:$0x1]
    %v29 = vld [vmem:[%s4] sm:$0xff]
    %v30 = vld [vmem:[%s4 + $0x8] sm:$0xff]
    %v31 = vld [vmem:[%s4 + $0x10] sm:$0xff]
    %v32 = vld [vmem:[%s4 + $0x18] sm:$0xff]
    %v33 = vld [vmem:[%s5] sm:$0x1]
    %v34 = vld [vmem:[%s0] sm:$0xff]
    %v36 = vlaneseq
    %v37 = vshrl.u32 %v36, 7
    %v38 = vsub.s32 0, %v37
    %v39 = vrot.slane %v28, %v38
    %vm41 = vcmask 261120
    %v43 = vsel %vm41, %v34, 0
    %45 = vmatprep.subr.mxu0 0.0
    %46 = vmatpush1.msra.mxu0 %v24
    %47 = vmatprep.subr.mxu0 0.0
    %48 = vmatpush1.msra.mxu0 %v25
    %49 = vmatprep.subr.mxu0 0.0
    %50 = vmatpush1.msra.mxu0 %v26
    %51 = vmatprep.subr.mxu0 0.0
    %52 = vmatpush1.msra.mxu0 %v27
    %53 = vmatprep.subr.mxu0 0.0
    %54 = vmatpush1.msra.mxu0 0.0
    %55 = vmatprep.subr.mxu0 0.0
    %56 = vmatpush1.msra.mxu0 0.0
    %57 = vmatprep.subr.mxu0 0.0
    %58 = vmatpush1.msra.mxu0 0.0
    %59 = vmatprep.subr.mxu0 0.0
    %60 = vmatpush1.msra.mxu0 0.0
    %61 = vmatprep.subr.mxu0 0.0
    %62 = vmatpush1.msra.mxu0 0.0
    %63 = vmatprep.subr.mxu0 0.0
    %64 = vmatpush1.msra.mxu0 0.0
    %65 = vmatprep.subr.mxu0 0.0
    %66 = vmatpush1.msra.mxu0 0.0
    %67 = vmatprep.subr.mxu0 0.0
    %68 = vmatpush1.msra.mxu0 0.0
    %69 = vmatprep.subr.mxu0 0.0
    %70 = vmatpush1.msra.mxu0 0.0
    %71 = vmatprep.subr.mxu0 0.0
    %72 = vmatpush1.msra.mxu0 0.0
    %73 = vmatprep.subr.mxu0 0.0
    %74 = vmatpush1.msra.mxu0 0.0
    %75 = vmatprep.subr.mxu0 0.0
    %76 = vmatpush1.msra.mxu0 0.0
    %77 = vmatprep.subr.mxu0 0.0
    %78 = vmatpush1.msra.mxu0 0.0
    %79 = vmatprep.subr.mxu0 0.0
    %80 = vmatpush1.msra.mxu0 0.0
    %81 = vmatprep.subr.mxu0 0.0
    %82 = vmatpush1.msra.mxu0 0.0
    %83 = vmatprep.subr.mxu0 0.0
    %84 = vmatpush1.msra.mxu0 0.0
    %85 = vmatprep.subr.mxu0 0.0
    %86 = vmatpush1.msra.mxu0 0.0
    %87 = vmatprep.subr.mxu0 0.0
    %88 = vmatpush1.msra.mxu0 0.0
    %89 = vmatprep.subr.mxu0 0.0
    %90 = vmatpush1.msra.mxu0 0.0
    %91 = vmatprep.subr.mxu0 0.0
    %92 = vmatpush1.msra.mxu0 0.0
    %93 = vmatprep.subr.mxu0 0.0
    %94 = vmatpush1.msra.mxu0 0.0
    %95 = vmatprep.subr.mxu0 0.0
    %96 = vmatpush1.msra.mxu0 0.0
    %97 = vmatprep.subr.mxu0 0.0
    %98 = vmatpush1.msra.mxu0 0.0
    %99 = vmatprep.subr.mxu0 0.0
    %100 = vmatpush1.msra.mxu0 0.0
    %101 = vmatprep.subr.mxu0 0.0
    %102 = vmatpush1.msra.mxu0 0.0
    %103 = vmatprep.subr.mxu0 0.0
    %104 = vmatpush1.msra.mxu0 0.0
    %105 = vmatprep.subr.mxu0 0.0
    %106 = vmatpush1.msra.mxu0 0.0
    %107 = vmatprep.subr.mxu0 0.0
    %108 = vmatpush1.msra.mxu0 0.0
    %109 = vmatprep.mubr.f32.mxu0 0.0
    %110 = vmatmul.mubr.f32.gmra.mrb[0].mxu0 %v43
    %v111 = vpop.f32.mrb[0].mxu0
    %v112 = vadd.f32 %v39, %v111
    %v113 = vpop.f32.mrb[0].mxu0
    %114 = vdwg.mxu0
    %v115 = vmax.f32 %v112, 0.0
    %v117 = vlaneseq
    %v118 = vshrl.u32 %v117, 7
    %v119 = vsub.s32 0, %v118
    %v120 = vrot.slane %v33, %v119
    %v123 = vsel %vm41, %v115, 0
    %125 = vmatprep.subr.mxu0 0.0
    %126 = vmatpush1.msra.mxu0 %v29
    %127 = vmatprep.subr.mxu0 0.0
    %128 = vmatpush1.msra.mxu0 %v30
    %129 = vmatprep.subr.mxu0 0.0
    %130 = vmatpush1.msra.mxu0 %v31
    %131 = vmatprep.subr.mxu0 0.0
    %132 = vmatpush1.msra.mxu0 %v32
    %133 = vmatprep.subr.mxu0 0.0
    %134 = vmatpush1.msra.mxu0 0.0
    %135 = vmatprep.subr.mxu0 0.0
    %136 = vmatpush1.msra.mxu0 0.0
    %137 = vmatprep.subr.mxu0 0.0
    %138 = vmatpush1.msra.mxu0 0.0
    %139 = vmatprep.subr.mxu0 0.0
    %140 = vmatpush1.msra.mxu0 0.0
    %141 = vmatprep.subr.mxu0 0.0
    %142 = vmatpush1.msra.mxu0 0.0
    %143 = vmatprep.subr.mxu0 0.0
    %144 = vmatpush1.msra.mxu0 0.0
    %145 = vmatprep.subr.mxu0 0.0
    %146 = vmatpush1.msra.mxu0 0.0
    %147 = vmatprep.subr.mxu0 0.0
    %148 = vmatpush1.msra.mxu0 0.0
    %149 = vmatprep.subr.mxu0 0.0
    %150 = vmatpush1.msra.mxu0 0.0
    %151 = vmatprep.subr.mxu0 0.0
    %152 = vmatpush1.msra.mxu0 0.0
    %153 = vmatprep.subr.mxu0 0.0
    %154 = vmatpush1.msra.mxu0 0.0
    %155 = vmatprep.subr.mxu0 0.0
    %156 = vmatpush1.msra.mxu0 0.0
    %157 = vmatprep.subr.mxu0 0.0
    %158 = vmatpush1.msra.mxu0 0.0
    %159 = vmatprep.subr.mxu0 0.0
    %160 = vmatpush1.msra.mxu0 0.0
    %161 = vmatprep.subr.mxu0 0.0
    %162 = vmatpush1.msra.mxu0 0.0
    %163 = vmatprep.subr.mxu0 0.0
    %164 = vmatpush1.msra.mxu0 0.0
    %165 = vmatprep.subr.mxu0 0.0
    %166 = vmatpush1.msra.mxu0 0.0
    %167 = vmatprep.subr.mxu0 0.0
    %168 = vmatpush1.msra.mxu0 0.0
    %169 = vmatprep.subr.mxu0 0.0
    %170 = vmatpush1.msra.mxu0 0.0
    %171 = vmatprep.subr.mxu0 0.0
    %172 = vmatpush1.msra.mxu0 0.0
    %173 = vmatprep.subr.mxu0 0.0
    %174 = vmatpush1.msra.mxu0 0.0
    %175 = vmatprep.subr.mxu0 0.0
    %176 = vmatpush1.msra.mxu0 0.0
    %177 = vmatprep.subr.mxu0 0.0
    %178 = vmatpush1.msra.mxu0 0.0
    %179 = vmatprep.subr.mxu0 0.0
    %180 = vmatpush1.msra.mxu0 0.0
    %181 = vmatprep.subr.mxu0 0.0
    %182 = vmatpush1.msra.mxu0 0.0
    %183 = vmatprep.subr.mxu0 0.0
    %184 = vmatpush1.msra.mxu0 0.0
    %185 = vmatprep.subr.mxu0 0.0
    %186 = vmatpush1.msra.mxu0 0.0
    %187 = vmatprep.subr.mxu0 0.0
    %188 = vmatpush1.msra.mxu0 0.0
    %189 = vmatprep.mubr.f32.mxu0 0.0
    %190 = vmatmul.mubr.f32.gmra.mrb[0].mxu0 %v123
    %v191 = vpop.f32.mrb[0].mxu0
    %v192 = vadd.f32 %v120, %v191
    %v193 = vpop.f32.mrb[0].mxu0
    %194 = vdwg.mxu0
    %v195 = vld [vmem:[%s1] sm:$0xff]
    %v197 = vsel %vm41, %v195, 0
    %199 = vmatprep.subr.mxu0 0.0
    %200 = vmatpush1.msra.mxu0 %v24
    %201 = vmatprep.subr.mxu0 0.0
    %202 = vmatpush1.msra.mxu0 %v25
    %203 = vmatprep.subr.mxu0 0.0
    %204 = vmatpush1.msra.mxu0 %v26
    %205 = vmatprep.subr.mxu0 0.0
    %206 = vmatpush1.msra.mxu0 %v27
    %207 = vmatprep.subr.mxu0 0.0
    %208 = vmatpush1.msra.mxu0 0.0
    %209 = vmatprep.subr.mxu0 0.0
    %210 = vmatpush1.msra.mxu0 0.0
    %211 = vmatprep.subr.mxu0 0.0
    %212 = vmatpush1.msra.mxu0 0.0
    %213 = vmatprep.subr.mxu0 0.0
    %214 = vmatpush1.msra.mxu0 0.0
    %215 = vmatprep.subr.mxu0 0.0
    %216 = vmatpush1.msra.mxu0 0.0
    %217 = vmatprep.subr.mxu0 0.0
    %218 = vmatpush1.msra.mxu0 0.0
    %219 = vmatprep.subr.mxu0 0.0
    %220 = vmatpush1.msra.mxu0 0.0
    %221 = vmatprep.subr.mxu0 0.0
    %222 = vmatpush1.msra.mxu0 0.0
    %223 = vmatprep.subr.mxu0 0.0
    %224 = vmatpush1.msra.mxu0 0.0
    %225 = vmatprep.subr.mxu0 0.0
    %226 = vmatpush1.msra.mxu0 0.0
    %227 = vmatprep.subr.mxu0 0.0
    %228 = vmatpush1.msra.mxu0 0.0
    %229 = vmatprep.subr.mxu0 0.0
    %230 = vmatpush1.msra.mxu0 0.0
    %231 = vmatprep.subr.mxu0 0.0
    %232 = vmatpush1.msra.mxu0 0.0
    %233 = vmatprep.subr.mxu0 0.0
    %234 = vmatpush1.msra.mxu0 0.0
    %235 = vmatprep.subr.mxu0 0.0
    %236 = vmatpush1.msra.mxu0 0.0
    %237 = vmatprep.subr.mxu0 0.0
    %238 = vmatpush1.msra.mxu0 0.0
    %239 = vmatprep.subr.mxu0 0.0
    %240 = vmatpush1.msra.mxu0 0.0
    %241 = vmatprep.subr.mxu0 0.0
    %242 = vmatpush1.msra.mxu0 0.0
    %243 = vmatprep.subr.mxu0 0.0
    %244 = vmatpush1.msra.mxu0 0.0
    %245 = vmatprep.subr.mxu0 0.0
    %246 = vmatpush1.msra.mxu0 0.0
    %247 = vmatprep.subr.mxu0 0.0
    %248 = vmatpush1.msra.mxu0 0.0
    %249 = vmatprep.subr.mxu0 0.0
    %250 = vmatpush1.msra.mxu0 0.0
    %251 = vmatprep.subr.mxu0 0.0
    %252 = vmatpush1.msra.mxu0 0.0
    %253 = vmatprep.subr.mxu0 0.0
    %254 = vmatpush1.msra.mxu0 0.0
    %255 = vmatprep.subr.mxu0 0.0
    %256 = vmatpush1.msra.mxu0 0.0
    %257 = vmatprep.subr.mxu0 0.0
    %258 = vmatpush1.msra.mxu0 0.0
    %259 = vmatprep.subr.mxu0 0.0
    %260 = vmatpush1.msra.mxu0 0.0
    %261 = vmatprep.subr.mxu0 0.0
    %262 = vmatpush1.msra.mxu0 0.0
    %263 = vmatprep.mubr.f32.mxu0 0.0
    %264 = vmatmul.mubr.f32.gmra.mrb[0].mxu0 %v197
    %v265 = vpop.f32.mrb[0].mxu0
    %v266 = vadd.f32 %v39, %v265
    %v267 = vpop.f32.mrb[0].mxu0
    %268 = vdwg.mxu0
    %v269 = vmax.f32 %v266, 0.0
    %v271 = vsel %vm41, %v269, 0
    %273 = vmatprep.subr.mxu0 0.0
    %274 = vmatpush1.msra.mxu0 %v29
    %275 = vmatprep.subr.mxu0 0.0
    %276 = vmatpush1.msra.mxu0 %v30
    %277 = vmatprep.subr.mxu0 0.0
    %278 = vmatpush1.msra.mxu0 %v31
    %279 = vmatprep.subr.mxu0 0.0
    %280 = vmatpush1.msra.mxu0 %v32
    %281 = vmatprep.subr.mxu0 0.0
    %282 = vmatpush1.msra.mxu0 0.0
    %283 = vmatprep.subr.mxu0 0.0
    %284 = vmatpush1.msra.mxu0 0.0
    %285 = vmatprep.subr.mxu0 0.0
    %286 = vmatpush1.msra.mxu0 0.0
    %287 = vmatprep.subr.mxu0 0.0
    %288 = vmatpush1.msra.mxu0 0.0
    %289 = vmatprep.subr.mxu0 0.0
    %290 = vmatpush1.msra.mxu0 0.0
    %291 = vmatprep.subr.mxu0 0.0
    %292 = vmatpush1.msra.mxu0 0.0
    %293 = vmatprep.subr.mxu0 0.0
    %294 = vmatpush1.msra.mxu0 0.0
    %295 = vmatprep.subr.mxu0 0.0
    %296 = vmatpush1.msra.mxu0 0.0
    %297 = vmatprep.subr.mxu0 0.0
    %298 = vmatpush1.msra.mxu0 0.0
    %299 = vmatprep.subr.mxu0 0.0
    %300 = vmatpush1.msra.mxu0 0.0
    %301 = vmatprep.subr.mxu0 0.0
    %302 = vmatpush1.msra.mxu0 0.0
    %303 = vmatprep.subr.mxu0 0.0
    %304 = vmatpush1.msra.mxu0 0.0
    %305 = vmatprep.subr.mxu0 0.0
    %306 = vmatpush1.msra.mxu0 0.0
    %307 = vmatprep.subr.mxu0 0.0
    %308 = vmatpush1.msra.mxu0 0.0
    %309 = vmatprep.subr.mxu0 0.0
    %310 = vmatpush1.msra.mxu0 0.0
    %311 = vmatprep.subr.mxu0 0.0
    %312 = vmatpush1.msra.mxu0 0.0
    %313 = vmatprep.subr.mxu0 0.0
    %314 = vmatpush1.msra.mxu0 0.0
    %315 = vmatprep.subr.mxu0 0.0
    %316 = vmatpush1.msra.mxu0 0.0
    %317 = vmatprep.subr.mxu0 0.0
    %318 = vmatpush1.msra.mxu0 0.0
    %319 = vmatprep.subr.mxu0 0.0
    %320 = vmatpush1.msra.mxu0 0.0
    %321 = vmatprep.subr.mxu0 0.0
    %322 = vmatpush1.msra.mxu0 0.0
    %323 = vmatprep.subr.mxu0 0.0
    %324 = vmatpush1.msra.mxu0 0.0
    %325 = vmatprep.subr.mxu0 0.0
    %326 = vmatpush1.msra.mxu0 0.0
    %327 = vmatprep.subr.mxu0 0.0
    %328 = vmatpush1.msra.mxu0 0.0
    %329 = vmatprep.subr.mxu0 0.0
    %330 = vmatpush1.msra.mxu0 0.0
    %331 = vmatprep.subr.mxu0 0.0
    %332 = vmatpush1.msra.mxu0 0.0
    %333 = vmatprep.subr.mxu0 0.0
    %334 = vmatpush1.msra.mxu0 0.0
    %335 = vmatprep.subr.mxu0 0.0
    %336 = vmatpush1.msra.mxu0 0.0
    %337 = vmatprep.mubr.f32.mxu0 0.0
    %338 = vmatmul.mubr.f32.gmra.mrb[0].mxu0 %v271
    %v339 = vpop.f32.mrb[0].mxu0
    %v340 = vadd.f32 %v120, %v339
    %v341 = vpop.f32.mrb[0].mxu0
    %342 = vdwg.mxu0
    %v343 = vmul.f32 %v192, %v192
    %v344 = vsel %vm41, %v343, 0.0
    %345 = vadd.xlane.f32.xlu0 %v344
    %v346 = vpop.xlane.xlu0 %345
    %v347 = vrsqrt.pop %v346
    %v348 = vmul.f32 %v346, %v347
    %vm349 = vcmp.eq.f32.partialorder %v346, inf
    %v350 = vsel %vm349, %v346, %v348
    %vm351 = vcmp.eq.f32.partialorder %v346, 0.0
    %v352 = vand.u32 %v346, 2147483648
    %v353 = vsel %vm351, %v352, %v350
    %v354 = vmax.f32 %v353, 1e-12
    %v355 = vrcp.pop %v354
    %v356 = vmul.f32 %v192, %v355
    %v357 = vmul.f32 %v340, %v340
    %v358 = vsel %vm41, %v357, 0.0
    %359 = vadd.xlane.f32.xlu0 %v358
    %v360 = vpop.xlane.xlu0 %359
    %v361 = vrsqrt.pop %v360
    %v362 = vmul.f32 %v360, %v361
    %vm363 = vcmp.eq.f32.partialorder %v360, inf
    %v364 = vsel %vm363, %v360, %v362
    %vm365 = vcmp.eq.f32.partialorder %v360, 0.0
    %v366 = vand.u32 %v360, 2147483648
    %v367 = vsel %vm365, %v366, %v364
    %v368 = vmax.f32 %v367, 1e-12
    %v369 = vrcp.pop %v368
    %v370 = vmul.f32 %v340, %v369
    %v372 = vsel %vm41, %v356, 0
    %v375 = vsel %vm41, %v370, 0
    %377 = vmatprep.subr.mxu0 0.0
    %378 = vmatpush1.xpose.msra.mxu0 %v375
    %379 = vmatprep.subr.mxu0 0.0
    %380 = vmatpush1.xpose.msra.mxu0 0.0
    %381 = vmatprep.subr.mxu0 0.0
    %382 = vmatpush1.xpose.msra.mxu0 0.0
    %383 = vmatprep.subr.mxu0 0.0
    %384 = vmatpush1.xpose.msra.mxu0 0.0
    %385 = vmatprep.subr.mxu0 0.0
    %386 = vmatpush1.xpose.msra.mxu0 0.0
    %387 = vmatprep.subr.mxu0 0.0
    %388 = vmatpush1.xpose.msra.mxu0 0.0
    %389 = vmatprep.subr.mxu0 0.0
    %390 = vmatpush1.xpose.msra.mxu0 0.0
    %391 = vmatprep.subr.mxu0 0.0
    %392 = vmatpush1.xpose.msra.mxu0 0.0
    %393 = vmatprep.subr.mxu0 0.0
    %394 = vmatpush1.xpose.msra.mxu0 0.0
    %395 = vmatprep.subr.mxu0 0.0
    %396 = vmatpush1.xpose.msra.mxu0 0.0
    %397 = vmatprep.subr.mxu0 0.0
    %398 = vmatpush1.xpose.msra.mxu0 0.0
    %399 = vmatprep.subr.mxu0 0.0
    %400 = vmatpush1.xpose.msra.mxu0 0.0
    %401 = vmatprep.subr.mxu0 0.0
    %402 = vmatpush1.xpose.msra.mxu0 0.0
    %403 = vmatprep.subr.mxu0 0.0
    %404 = vmatpush1.xpose.msra.mxu0 0.0
    %405 = vmatprep.subr.mxu0 0.0
    %406 = vmatpush1.xpose.msra.mxu0 0.0
    %407 = vmatprep.subr.mxu0 0.0
    %408 = vmatpush1.xpose.msra.mxu0 0.0
    %409 = vmatprep.subr.mxu0 0.0
    %410 = vmatpush1.xpose.msra.mxu0 0.0
    %411 = vmatprep.subr.mxu0 0.0
    %412 = vmatpush1.xpose.msra.mxu0 0.0
    %413 = vmatprep.subr.mxu0 0.0
    %414 = vmatpush1.xpose.msra.mxu0 0.0
    %415 = vmatprep.subr.mxu0 0.0
    %416 = vmatpush1.xpose.msra.mxu0 0.0
    %417 = vmatprep.subr.mxu0 0.0
    %418 = vmatpush1.xpose.msra.mxu0 0.0
    %419 = vmatprep.subr.mxu0 0.0
    %420 = vmatpush1.xpose.msra.mxu0 0.0
    %421 = vmatprep.subr.mxu0 0.0
    %422 = vmatpush1.xpose.msra.mxu0 0.0
    %423 = vmatprep.subr.mxu0 0.0
    %424 = vmatpush1.xpose.msra.mxu0 0.0
    %425 = vmatprep.subr.mxu0 0.0
    %426 = vmatpush1.xpose.msra.mxu0 0.0
    %427 = vmatprep.subr.mxu0 0.0
    %428 = vmatpush1.xpose.msra.mxu0 0.0
    %429 = vmatprep.subr.mxu0 0.0
    %430 = vmatpush1.xpose.msra.mxu0 0.0
    %431 = vmatprep.subr.mxu0 0.0
    %432 = vmatpush1.xpose.msra.mxu0 0.0
    %433 = vmatprep.subr.mxu0 0.0
    %434 = vmatpush1.xpose.msra.mxu0 0.0
    %435 = vmatprep.subr.mxu0 0.0
    %436 = vmatpush1.xpose.msra.mxu0 0.0
    %437 = vmatprep.subr.mxu0 0.0
    %438 = vmatpush1.xpose.msra.mxu0 0.0
    %439 = vmatprep.subr.mxu0 0.0
    %440 = vmatpush1.xpose.msra.mxu0 0.0
    %441 = vmatprep.mubr.f32.mxu0 0.0
    %442 = vmatmul.mubr.f32.gmra.mrb[0].mxu0 %v372
    %v443 = vpop.f32.mrb[0].mxu0
    %v444 = vadd.f32 0.0, %v443
    %v445 = vpop.f32.mrb[0].mxu0
    %446 = vdwg.mxu0
    %v447 = vmul.f32 %v444, 1.6666666
    %v448 = vmul.f32 %v447, 1.442695
    %v449 = vpow.pop %v448
    %450 = vmatprep.subr.mxu0 0.0
    %451 = vmatpush1.xpose.msra.mxu0 %v372
    %452 = vmatprep.subr.mxu0 0.0
    %453 = vmatpush1.xpose.msra.mxu0 0.0
    %454 = vmatprep.subr.mxu0 0.0
    %455 = vmatpush1.xpose.msra.mxu0 0.0
    %456 = vmatprep.subr.mxu0 0.0
    %457 = vmatpush1.xpose.msra.mxu0 0.0
    %458 = vmatprep.subr.mxu0 0.0
    %459 = vmatpush1.xpose.msra.mxu0 0.0
    %460 = vmatprep.subr.mxu0 0.0
    %461 = vmatpush1.xpose.msra.mxu0 0.0
    %462 = vmatprep.subr.mxu0 0.0
    %463 = vmatpush1.xpose.msra.mxu0 0.0
    %464 = vmatprep.subr.mxu0 0.0
    %465 = vmatpush1.xpose.msra.mxu0 0.0
    %466 = vmatprep.subr.mxu0 0.0
    %467 = vmatpush1.xpose.msra.mxu0 0.0
    %468 = vmatprep.subr.mxu0 0.0
    %469 = vmatpush1.xpose.msra.mxu0 0.0
    %470 = vmatprep.subr.mxu0 0.0
    %471 = vmatpush1.xpose.msra.mxu0 0.0
    %472 = vmatprep.subr.mxu0 0.0
    %473 = vmatpush1.xpose.msra.mxu0 0.0
    %474 = vmatprep.subr.mxu0 0.0
    %475 = vmatpush1.xpose.msra.mxu0 0.0
    %476 = vmatprep.subr.mxu0 0.0
    %477 = vmatpush1.xpose.msra.mxu0 0.0
    %478 = vmatprep.subr.mxu0 0.0
    %479 = vmatpush1.xpose.msra.mxu0 0.0
    %480 = vmatprep.subr.mxu0 0.0
    %481 = vmatpush1.xpose.msra.mxu0 0.0
    %482 = vmatprep.subr.mxu0 0.0
    %483 = vmatpush1.xpose.msra.mxu0 0.0
    %484 = vmatprep.subr.mxu0 0.0
    %485 = vmatpush1.xpose.msra.mxu0 0.0
    %486 = vmatprep.subr.mxu0 0.0
    %487 = vmatpush1.xpose.msra.mxu0 0.0
    %488 = vmatprep.subr.mxu0 0.0
    %489 = vmatpush1.xpose.msra.mxu0 0.0
    %490 = vmatprep.subr.mxu0 0.0
    %491 = vmatpush1.xpose.msra.mxu0 0.0
    %492 = vmatprep.subr.mxu0 0.0
    %493 = vmatpush1.xpose.msra.mxu0 0.0
    %494 = vmatprep.subr.mxu0 0.0
    %495 = vmatpush1.xpose.msra.mxu0 0.0
    %496 = vmatprep.subr.mxu0 0.0
    %497 = vmatpush1.xpose.msra.mxu0 0.0
    %498 = vmatprep.subr.mxu0 0.0
    %499 = vmatpush1.xpose.msra.mxu0 0.0
    %500 = vmatprep.subr.mxu0 0.0
    %501 = vmatpush1.xpose.msra.mxu0 0.0
    %502 = vmatprep.subr.mxu0 0.0
    %503 = vmatpush1.xpose.msra.mxu0 0.0
    %504 = vmatprep.subr.mxu0 0.0
    %505 = vmatpush1.xpose.msra.mxu0 0.0
    %506 = vmatprep.subr.mxu0 0.0
    %507 = vmatpush1.xpose.msra.mxu0 0.0
    %508 = vmatprep.subr.mxu0 0.0
    %509 = vmatpush1.xpose.msra.mxu0 0.0
    %510 = vmatprep.subr.mxu0 0.0
    %511 = vmatpush1.xpose.msra.mxu0 0.0
    %512 = vmatprep.subr.mxu0 0.0
    %513 = vmatpush1.xpose.msra.mxu0 0.0
    %514 = vmatprep.mubr.f32.mxu0 0.0
    %515 = vmatmul.mubr.f32.gmra.mrb[0].mxu0 %v372
    %v516 = vpop.f32.mrb[0].mxu0
    %v517 = vadd.f32 0.0, %v516
    %v518 = vpop.f32.mrb[0].mxu0
    %519 = vdwg.mxu0
    %v520 = vmul.f32 %v517, 1.6666666
    %v521 = vmul.f32 %v520, 1.442695
    %v522 = vpow.pop %v521
    %523 = vmatprep.subr.mxu0 0.0
    %524 = vmatpush1.xpose.msra.mxu0 %v375
    %525 = vmatprep.subr.mxu0 0.0
    %526 = vmatpush1.xpose.msra.mxu0 0.0
    %527 = vmatprep.subr.mxu0 0.0
    %528 = vmatpush1.xpose.msra.mxu0 0.0
    %529 = vmatprep.subr.mxu0 0.0
    %530 = vmatpush1.xpose.msra.mxu0 0.0
    %531 = vmatprep.subr.mxu0 0.0
    %532 = vmatpush1.xpose.msra.mxu0 0.0
    %533 = vmatprep.subr.mxu0 0.0
    %534 = vmatpush1.xpose.msra.mxu0 0.0
    %535 = vmatprep.subr.mxu0 0.0
    %536 = vmatpush1.xpose.msra.mxu0 0.0
    %537 = vmatprep.subr.mxu0 0.0
    %538 = vmatpush1.xpose.msra.mxu0 0.0
    %539 = vmatprep.subr.mxu0 0.0
    %540 = vmatpush1.xpose.msra.mxu0 0.0
    %541 = vmatprep.subr.mxu0 0.0
    %542 = vmatpush1.xpose.msra.mxu0 0.0
    %543 = vmatprep.subr.mxu0 0.0
    %544 = vmatpush1.xpose.msra.mxu0 0.0
    %545 = vmatprep.subr.mxu0 0.0
    %546 = vmatpush1.xpose.msra.mxu0 0.0
    %547 = vmatprep.subr.mxu0 0.0
    %548 = vmatpush1.xpose.msra.mxu0 0.0
    %549 = vmatprep.subr.mxu0 0.0
    %550 = vmatpush1.xpose.msra.mxu0 0.0
    %551 = vmatprep.subr.mxu0 0.0
    %552 = vmatpush1.xpose.msra.mxu0 0.0
    %553 = vmatprep.subr.mxu0 0.0
    %554 = vmatpush1.xpose.msra.mxu0 0.0
    %555 = vmatprep.subr.mxu0 0.0
    %556 = vmatpush1.xpose.msra.mxu0 0.0
    %557 = vmatprep.subr.mxu0 0.0
    %558 = vmatpush1.xpose.msra.mxu0 0.0
    %559 = vmatprep.subr.mxu0 0.0
    %560 = vmatpush1.xpose.msra.mxu0 0.0
    %561 = vmatprep.subr.mxu0 0.0
    %562 = vmatpush1.xpose.msra.mxu0 0.0
    %563 = vmatprep.subr.mxu0 0.0
    %564 = vmatpush1.xpose.msra.mxu0 0.0
    %565 = vmatprep.subr.mxu0 0.0
    %566 = vmatpush1.xpose.msra.mxu0 0.0
    %567 = vmatprep.subr.mxu0 0.0
    %568 = vmatpush1.xpose.msra.mxu0 0.0
    %569 = vmatprep.subr.mxu0 0.0
    %570 = vmatpush1.xpose.msra.mxu0 0.0
    %571 = vmatprep.subr.mxu0 0.0
    %572 = vmatpush1.xpose.msra.mxu0 0.0
    %573 = vmatprep.subr.mxu0 0.0
    %574 = vmatpush1.xpose.msra.mxu0 0.0
    %575 = vmatprep.subr.mxu0 0.0
    %576 = vmatpush1.xpose.msra.mxu0 0.0
    %577 = vmatprep.subr.mxu0 0.0
    %578 = vmatpush1.xpose.msra.mxu0 0.0
    %579 = vmatprep.subr.mxu0 0.0
    %580 = vmatpush1.xpose.msra.mxu0 0.0
    %581 = vmatprep.subr.mxu0 0.0
    %582 = vmatpush1.xpose.msra.mxu0 0.0
    %583 = vmatprep.subr.mxu0 0.0
    %584 = vmatpush1.xpose.msra.mxu0 0.0
    %585 = vmatprep.subr.mxu0 0.0
    %586 = vmatpush1.xpose.msra.mxu0 0.0
    %587 = vmatprep.mubr.f32.mxu0 0.0
    %588 = vmatmul.mubr.f32.gmra.mrb[0].mxu0 %v375
    %v589 = vpop.f32.mrb[0].mxu0
    %v590 = vadd.f32 0.0, %v589
    %v591 = vpop.f32.mrb[0].mxu0
    %592 = vdwg.mxu0
    %v593 = vmul.f32 %v590, 1.6666666
    %v594 = vmul.f32 %v593, 1.442695
    %v595 = vpow.pop %v594
    %v596 = vmul.f32 %v356, %v370
    %v597 = vsel %vm41, %v596, 0.0
    %598 = vadd.xlane.f32.xlu0 %v597
    %v599 = vpop.xlane.xlu0 %598
    %v600 = vmul.f32 %v599, 1.6666666
    %v601 = vmul.f32 %v600, 1.442695
    %v602 = vpow.pop %v601
    %v603 = vmul.f32 %v356, %v356
    %v604 = vsel %vm41, %v603, 0.0
    %605 = vadd.xlane.f32.xlu0 %v604
    %v606 = vpop.xlane.xlu0 %605
    %v607 = vmul.f32 %v606, 1.6666666
    %v608 = vmul.f32 %v607, 1.442695
    %v609 = vpow.pop %v608
    %v610 = vmul.f32 %v370, %v370
    %v611 = vsel %vm41, %v610, 0.0
    %612 = vadd.xlane.f32.xlu0 %v611
    %v613 = vpop.xlane.xlu0 %612
    %v614 = vmul.f32 %v613, 1.6666666
    %v615 = vmul.f32 %v614, 1.442695
    %v616 = vpow.pop %v615
    %vm617 = vcmask 64512
    %v618 = vsel %vm617, %v522, 0.0
    %619 = vadd.xlane.f32.xlu0 %v618
    %v620 = vpop.xlane.xlu0 %619
    %v621 = vsel %vm617, %v595, 0.0
    %622 = vadd.xlane.f32.xlu0 %v621
    %v623 = vpop.xlane.xlu0 %622
    %v624 = vsel %vm617, %v449, 0.0
    %625 = vadd.xlane.f32.xlu0 %v624
    %v626 = vpop.xlane.xlu0 %625
    %627 = vxpose.xlu0.b32.start [1/16] %v449, 128
    %628 = vxpose.xlu0.b32.cont [2/16] 0.0, 128
    %629 = vxpose.xlu0.b32.cont [3/16] 0.0, 128
    %630 = vxpose.xlu0.b32.cont [4/16] 0.0, 128
    %631 = vxpose.xlu0.b32.cont [5/16] 0.0, 128
    %632 = vxpose.xlu0.b32.cont [6/16] 0.0, 128
    %633 = vxpose.xlu0.b32.cont [7/16] 0.0, 128
    %634 = vxpose.xlu0.b32.cont [8/16] 0.0, 128
    %635 = vxpose.xlu0.b32.cont [9/16] 0.0, 128
    %636 = vxpose.xlu0.b32.cont [10/16] 0.0, 128
    %637 = vxpose.xlu0.b32.cont [11/16] 0.0, 128
    %638 = vxpose.xlu0.b32.cont [12/16] 0.0, 128
    %639 = vxpose.xlu0.b32.cont [13/16] 0.0, 128
    %640 = vxpose.xlu0.b32.cont [14/16] 0.0, 128
    %641 = vxpose.xlu0.b32.cont [15/16] 0.0, 128
    %642 = vxpose.xlu0.b32.end [16/16] 0.0, 128
    %v643 = vpop.trf.xlu0
    %v644 = vpop.trf.xlu0
    %v645 = vpop.trf.xlu0
    %v646 = vpop.trf.xlu0
    %v647 = vpop.trf.xlu0
    %v648 = vpop.trf.xlu0
    %v649 = vpop.trf.xlu0
    %v650 = vpop.trf.xlu0
    %v651 = vpop.trf.xlu0
    %v652 = vpop.trf.xlu0
    %v653 = vpop.trf.xlu0
    %v654 = vpop.trf.xlu0
    %v655 = vpop.trf.xlu0
    %v656 = vpop.trf.xlu0
    %v657 = vpop.trf.xlu0
    %v658 = vpop.trf.xlu0
    %v660 = vsel %vm617, %v643, 0
    %662 = vmatprep.subr.mxu0 0.0
    %663 = vmatpush1.msra.mxu0 1.0
    %664 = vmatprep.subr.mxu0 0.0
    %665 = vmatpush1.msra.mxu0 0.0
    %666 = vmatprep.subr.mxu0 0.0
    %667 = vmatpush1.msra.mxu0 0.0
    %668 = vmatprep.subr.mxu0 0.0
    %669 = vmatpush1.msra.mxu0 0.0
    %670 = vmatprep.subr.mxu0 0.0
    %671 = vmatpush1.msra.mxu0 0.0
    %672 = vmatprep.subr.mxu0 0.0
    %673 = vmatpush1.msra.mxu0 0.0
    %674 = vmatprep.subr.mxu0 0.0
    %675 = vmatpush1.msra.mxu0 0.0
    %676 = vmatprep.subr.mxu0 0.0
    %677 = vmatpush1.msra.mxu0 0.0
    %678 = vmatprep.subr.mxu0 0.0
    %679 = vmatpush1.msra.mxu0 0.0
    %680 = vmatprep.subr.mxu0 0.0
    %681 = vmatpush1.msra.mxu0 0.0
    %682 = vmatprep.subr.mxu0 0.0
    %683 = vmatpush1.msra.mxu0 0.0
    %684 = vmatprep.subr.mxu0 0.0
    %685 = vmatpush1.msra.mxu0 0.0
    %686 = vmatprep.subr.mxu0 0.0
    %687 = vmatpush1.msra.mxu0 0.0
    %688 = vmatprep.subr.mxu0 0.0
    %689 = vmatpush1.msra.mxu0 0.0
    %690 = vmatprep.subr.mxu0 0.0
    %691 = vmatpush1.msra.mxu0 0.0
    %692 = vmatprep.subr.mxu0 0.0
    %693 = vmatpush1.msra.mxu0 0.0
    %694 = vmatprep.subr.mxu0 0.0
    %695 = vmatpush1.msra.mxu0 0.0
    %696 = vmatprep.subr.mxu0 0.0
    %697 = vmatpush1.msra.mxu0 0.0
    %698 = vmatprep.subr.mxu0 0.0
    %699 = vmatpush1.msra.mxu0 0.0
    %700 = vmatprep.subr.mxu0 0.0
    %701 = vmatpush1.msra.mxu0 0.0
    %702 = vmatprep.subr.mxu0 0.0
    %703 = vmatpush1.msra.mxu0 0.0
    %704 = vmatprep.subr.mxu0 0.0
    %705 = vmatpush1.msra.mxu0 0.0
    %706 = vmatprep.subr.mxu0 0.0
    %707 = vmatpush1.msra.mxu0 0.0
    %708 = vmatprep.subr.mxu0 0.0
    %709 = vmatpush1.msra.mxu0 0.0
    %710 = vmatprep.subr.mxu0 0.0
    %711 = vmatpush1.msra.mxu0 0.0
    %712 = vmatprep.subr.mxu0 0.0
    %713 = vmatpush1.msra.mxu0 0.0
    %714 = vmatprep.subr.mxu0 0.0
    %715 = vmatpush1.msra.mxu0 0.0
    %716 = vmatprep.subr.mxu0 0.0
    %717 = vmatpush1.msra.mxu0 0.0
    %718 = vmatprep.subr.mxu0 0.0
    %719 = vmatpush1.msra.mxu0 0.0
    %720 = vmatprep.subr.mxu0 0.0
    %721 = vmatpush1.msra.mxu0 0.0
    %722 = vmatprep.subr.mxu0 0.0
    %723 = vmatpush1.msra.mxu0 0.0
    %724 = vmatprep.subr.mxu0 0.0
    %725 = vmatpush1.msra.mxu0 0.0
    %726 = vmatprep.mubr.f32.mxu0 0.0
    %727 = vmatmul.mubr.f32.gmra.mrb[0].mxu0 %v660
    %v728 = vpop.f32.mrb[0].mxu0
    %v729 = vadd.f32 0.0, %v728
    %v730 = vpop.f32.mrb[0].mxu0
    %731 = vdwg.mxu0
    %v732 = vadd.f32 %v620, %v626
    %v733 = vsub.f32 %v732, %v609
    %v734 = vrcp.pop %v733
    %v735 = vmul.f32 %v602, %v734
    %v736 = vlog2.pop %v735
    %v737 = vmul.f32 %v736, 0.6931472
    %v738 = vsub.f32 0.0, %v737
    %v739 = vadd.f32 %v623, %v729
    %v740 = vsub.f32 %v739, %v616
    %v741 = vrcp.pop %v740
    %v742 = vmul.f32 %v602, %v741
    %v743 = vlog2.pop %v742
    %v744 = vmul.f32 %v743, 0.6931472
    %v745 = vsub.f32 0.0, %v744
    %vm746 = vcmask 7168
    %v747 = vsel %vm746, %v738, 0.0
    %748 = vadd.xlane.f32.xlu0 %v747
    %v749 = vpop.xlane.xlu0 %748
    %v750 = vrot.slane %v749, 4
    %v751 = vadd.f32 %v749, %v750
    %v752 = vrot.slane %v751, 2
    %v753 = vadd.f32 %v751, %v752
    %v754 = vrot.slane %v753, 1
    %v755 = vadd.f32 %v753, %v754
    %s756 = vtos %v755
    %s757 = scalar_lea.smem [#allocation2], 0
    %758 = sst [smem:[%s757]] %s756
    %v759 = vsel %vm746, %v745, 0.0
    %760 = vadd.xlane.f32.xlu0 %v759
    %v761 = vpop.xlane.xlu0 %760
    %v762 = vrot.slane %v761, 4
    %v763 = vadd.f32 %v761, %v762
    %v764 = vrot.slane %v763, 2
    %v765 = vadd.f32 %v763, %v764
    %v766 = vrot.slane %v765, 1
    %v767 = vadd.f32 %v765, %v766
    %s768 = vtos %v767
    %s769 = scalar_lea.smem [#allocation2], 1
    %770 = sst [smem:[%s769]] %s768
    %s771 = scalar_lea.vmem %s2, 32
    %v772 = vld [vmem:[%s771] sm:$0xff]
    %v773 = vld [vmem:[%s771 + $0x8] sm:$0xff]
    %v774 = vld [vmem:[%s771 + $0x10] sm:$0xff]
    %v775 = vld [vmem:[%s771 + $0x18] sm:$0xff]
    %s776 = scalar_lea.vmem %s3, 1
    %v777 = vld [vmem:[%s776] sm:$0x1]
    %s778 = scalar_lea.vmem %s4, 32
    %v779 = vld [vmem:[%s778] sm:$0xff]
    %v780 = vld [vmem:[%s778 + $0x8] sm:$0xff]
    %v781 = vld [vmem:[%s778 + $0x10] sm:$0xff]
    %v782 = vld [vmem:[%s778 + $0x18] sm:$0xff]
    %s783 = scalar_lea.vmem %s5, 1
    %v784 = vld [vmem:[%s783] sm:$0x1]
    %s785 = scalar_lea.vmem %s0, 8
    %v786 = vld [vmem:[%s785] sm:$0xff]
    %v788 = vlaneseq
    %v789 = vshrl.u32 %v788, 7
    %v790 = vsub.s32 0, %v789
    %v791 = vrot.slane %v777, %v790
    %v794 = vsel %vm41, %v786, 0
    %796 = vmatprep.subr.mxu0 0.0
    %797 = vmatpush1.msra.mxu0 %v772
    %798 = vmatprep.subr.mxu0 0.0
    %799 = vmatpush1.msra.mxu0 %v773
    %800 = vmatprep.subr.mxu0 0.0
    %801 = vmatpush1.msra.mxu0 %v774
    %802 = vmatprep.subr.mxu0 0.0
    %803 = vmatpush1.msra.mxu0 %v775
    %804 = vmatprep.subr.mxu0 0.0
    %805 = vmatpush1.msra.mxu0 0.0
    %806 = vmatprep.subr.mxu0 0.0
    %807 = vmatpush1.msra.mxu0 0.0
    %808 = vmatprep.subr.mxu0 0.0
    %809 = vmatpush1.msra.mxu0 0.0
    %810 = vmatprep.subr.mxu0 0.0
    %811 = vmatpush1.msra.mxu0 0.0
    %812 = vmatprep.subr.mxu0 0.0
    %813 = vmatpush1.msra.mxu0 0.0
    %814 = vmatprep.subr.mxu0 0.0
    %815 = vmatpush1.msra.mxu0 0.0
    %816 = vmatprep.subr.mxu0 0.0
    %817 = vmatpush1.msra.mxu0 0.0
    %818 = vmatprep.subr.mxu0 0.0
    %819 = vmatpush1.msra.mxu0 0.0
    %820 = vmatprep.subr.mxu0 0.0
    %821 = vmatpush1.msra.mxu0 0.0
    %822 = vmatprep.subr.mxu0 0.0
    %823 = vmatpush1.msra.mxu0 0.0
    %824 = vmatprep.subr.mxu0 0.0
    %825 = vmatpush1.msra.mxu0 0.0
    %826 = vmatprep.subr.mxu0 0.0
    %827 = vmatpush1.msra.mxu0 0.0
    %828 = vmatprep.subr.mxu0 0.0
    %829 = vmatpush1.msra.mxu0 0.0
    %830 = vmatprep.subr.mxu0 0.0
    %831 = vmatpush1.msra.mxu0 0.0
    %832 = vmatprep.subr.mxu0 0.0
    %833 = vmatpush1.msra.mxu0 0.0
    %834 = vmatprep.subr.mxu0 0.0
    %835 = vmatpush1.msra.mxu0 0.0
    %836 = vmatprep.subr.mxu0 0.0
    %837 = vmatpush1.msra.mxu0 0.0
    %838 = vmatprep.subr.mxu0 0.0
    %839 = vmatpush1.msra.mxu0 0.0
    %840 = vmatprep.subr.mxu0 0.0
    %841 = vmatpush1.msra.mxu0 0.0
    %842 = vmatprep.subr.mxu0 0.0
    %843 = vmatpush1.msra.mxu0 0.0
    %844 = vmatprep.subr.mxu0 0.0
    %845 = vmatpush1.msra.mxu0 0.0
    %846 = vmatprep.subr.mxu0 0.0
    %847 = vmatpush1.msra.mxu0 0.0
    %848 = vmatprep.subr.mxu0 0.0
    %849 = vmatpush1.msra.mxu0 0.0
    %850 = vmatprep.subr.mxu0 0.0
    %851 = vmatpush1.msra.mxu0 0.0
    %852 = vmatprep.subr.mxu0 0.0
    %853 = vmatpush1.msra.mxu0 0.0
    %854 = vmatprep.subr.mxu0 0.0
    %855 = vmatpush1.msra.mxu0 0.0
    %856 = vmatprep.subr.mxu0 0.0
    %857 = vmatpush1.msra.mxu0 0.0
    %858 = vmatprep.subr.mxu0 0.0
    %859 = vmatpush1.msra.mxu0 0.0
    %860 = vmatprep.mubr.f32.mxu0 0.0
    %861 = vmatmul.mubr.f32.gmra.mrb[0].mxu0 %v794
    %v862 = vpop.f32.mrb[0].mxu0
    %v863 = vadd.f32 %v791, %v862
    %v864 = vpop.f32.mrb[0].mxu0
    %865 = vdwg.mxu0
    %v866 = vmax.f32 %v863, 0.0
    %v868 = vlaneseq
    %v869 = vshrl.u32 %v868, 7
    %v870 = vsub.s32 0, %v869
    %v871 = vrot.slane %v784, %v870
    %v874 = vsel %vm41, %v866, 0
    %876 = vmatprep.subr.mxu0 0.0
    %877 = vmatpush1.msra.mxu0 %v779
    %878 = vmatprep.subr.mxu0 0.0
    %879 = vmatpush1.msra.mxu0 %v780
    %880 = vmatprep.subr.mxu0 0.0
    %881 = vmatpush1.msra.mxu0 %v781
    %882 = vmatprep.subr.mxu0 0.0
    %883 = vmatpush1.msra.mxu0 %v782
    %884 = vmatprep.subr.mxu0 0.0
    %885 = vmatpush1.msra.mxu0 0.0
    %886 = vmatprep.subr.mxu0 0.0
    %887 = vmatpush1.msra.mxu0 0.0
    %888 = vmatprep.subr.mxu0 0.0
    %889 = vmatpush1.msra.mxu0 0.0
    %890 = vmatprep.subr.mxu0 0.0
    %891 = vmatpush1.msra.mxu0 0.0
    %892 = vmatprep.subr.mxu0 0.0
    %893 = vmatpush1.msra.mxu0 0.0
    %894 = vmatprep.subr.mxu0 0.0
    %895 = vmatpush1.msra.mxu0 0.0
    %896 = vmatprep.subr.mxu0 0.0
    %897 = vmatpush1.msra.mxu0 0.0
    %898 = vmatprep.subr.mxu0 0.0
    %899 = vmatpush1.msra.mxu0 0.0
    %900 = vmatprep.subr.mxu0 0.0
    %901 = vmatpush1.msra.mxu0 0.0
    %902 = vmatprep.subr.mxu0 0.0
    %903 = vmatpush1.msra.mxu0 0.0
    %904 = vmatprep.subr.mxu0 0.0
    %905 = vmatpush1.msra.mxu0 0.0
    %906 = vmatprep.subr.mxu0 0.0
    %907 = vmatpush1.msra.mxu0 0.0
    %908 = vmatprep.subr.mxu0 0.0
    %909 = vmatpush1.msra.mxu0 0.0
    %910 = vmatprep.subr.mxu0 0.0
    %911 = vmatpush1.msra.mxu0 0.0
    %912 = vmatprep.subr.mxu0 0.0
    %913 = vmatpush1.msra.mxu0 0.0
    %914 = vmatprep.subr.mxu0 0.0
    %915 = vmatpush1.msra.mxu0 0.0
    %916 = vmatprep.subr.mxu0 0.0
    %917 = vmatpush1.msra.mxu0 0.0
    %918 = vmatprep.subr.mxu0 0.0
    %919 = vmatpush1.msra.mxu0 0.0
    %920 = vmatprep.subr.mxu0 0.0
    %921 = vmatpush1.msra.mxu0 0.0
    %922 = vmatprep.subr.mxu0 0.0
    %923 = vmatpush1.msra.mxu0 0.0
    %924 = vmatprep.subr.mxu0 0.0
    %925 = vmatpush1.msra.mxu0 0.0
    %926 = vmatprep.subr.mxu0 0.0
    %927 = vmatpush1.msra.mxu0 0.0
    %928 = vmatprep.subr.mxu0 0.0
    %929 = vmatpush1.msra.mxu0 0.0
    %930 = vmatprep.subr.mxu0 0.0
    %931 = vmatpush1.msra.mxu0 0.0
    %932 = vmatprep.subr.mxu0 0.0
    %933 = vmatpush1.msra.mxu0 0.0
    %934 = vmatprep.subr.mxu0 0.0
    %935 = vmatpush1.msra.mxu0 0.0
    %936 = vmatprep.subr.mxu0 0.0
    %937 = vmatpush1.msra.mxu0 0.0
    %938 = vmatprep.subr.mxu0 0.0
    %939 = vmatpush1.msra.mxu0 0.0
    %940 = vmatprep.mubr.f32.mxu0 0.0
    %941 = vmatmul.mubr.f32.gmra.mrb[0].mxu0 %v874
    %v942 = vpop.f32.mrb[0].mxu0
    %v943 = vadd.f32 %v871, %v942
    %v944 = vpop.f32.mrb[0].mxu0
    %945 = vdwg.mxu0
    %s946 = scalar_lea.vmem %s1, 8
    %v947 = vld [vmem:[%s946] sm:$0xff]
    %v949 = vsel %vm41, %v947, 0
    %951 = vmatprep.subr.mxu0 0.0
    %952 = vmatpush1.msra.mxu0 %v772
    %953 = vmatprep.subr.mxu0 0.0
    %954 = vmatpush1.msra.mxu0 %v773
    %955 = vmatprep.subr.mxu0 0.0
    %956 = vmatpush1.msra.mxu0 %v774
    %957 = vmatprep.subr.mxu0 0.0
    %958 = vmatpush1.msra.mxu0 %v775
    %959 = vmatprep.subr.mxu0 0.0
    %960 = vmatpush1.msra.mxu0 0.0
    %961 = vmatprep.subr.mxu0 0.0
    %962 = vmatpush1.msra.mxu0 0.0
    %963 = vmatprep.subr.mxu0 0.0
    %964 = vmatpush1.msra.mxu0 0.0
    %965 = vmatprep.subr.mxu0 0.0
    %966 = vmatpush1.msra.mxu0 0.0
    %967 = vmatprep.subr.mxu0 0.0
    %968 = vmatpush1.msra.mxu0 0.0
    %969 = vmatprep.subr.mxu0 0.0
    %970 = vmatpush1.msra.mxu0 0.0
    %971 = vmatprep.subr.mxu0 0.0
    %972 = vmatpush1.msra.mxu0 0.0
    %973 = vmatprep.subr.mxu0 0.0
    %974 = vmatpush1.msra.mxu0 0.0
    %975 = vmatprep.subr.mxu0 0.0
    %976 = vmatpush1.msra.mxu0 0.0
    %977 = vmatprep.subr.mxu0 0.0
    %978 = vmatpush1.msra.mxu0 0.0
    %979 = vmatprep.subr.mxu0 0.0
    %980 = vmatpush1.msra.mxu0 0.0
    %981 = vmatprep.subr.mxu0 0.0
    %982 = vmatpush1.msra.mxu0 0.0
    %983 = vmatprep.subr.mxu0 0.0
    %984 = vmatpush1.msra.mxu0 0.0
    %985 = vmatprep.subr.mxu0 0.0
    %986 = vmatpush1.msra.mxu0 0.0
    %987 = vmatprep.subr.mxu0 0.0
    %988 = vmatpush1.msra.mxu0 0.0
    %989 = vmatprep.subr.mxu0 0.0
    %990 = vmatpush1.msra.mxu0 0.0
    %991 = vmatprep.subr.mxu0 0.0
    %992 = vmatpush1.msra.mxu0 0.0
    %993 = vmatprep.subr.mxu0 0.0
    %994 = vmatpush1.msra.mxu0 0.0
    %995 = vmatprep.subr.mxu0 0.0
    %996 = vmatpush1.msra.mxu0 0.0
    %997 = vmatprep.subr.mxu0 0.0
    %998 = vmatpush1.msra.mxu0 0.0
    %999 = vmatprep.subr.mxu0 0.0
    %1000 = vmatpush1.msra.mxu0 0.0
    %1001 = vmatprep.subr.mxu0 0.0
    %1002 = vmatpush1.msra.mxu0 0.0
    %1003 = vmatprep.subr.mxu0 0.0
    %1004 = vmatpush1.msra.mxu0 0.0
    %1005 = vmatprep.subr.mxu0 0.0
    %1006 = vmatpush1.msra.mxu0 0.0
    %1007 = vmatprep.subr.mxu0 0.0
    %1008 = vmatpush1.msra.mxu0 0.0
    %1009 = vmatprep.subr.mxu0 0.0
    %1010 = vmatpush1.msra.mxu0 0.0
    %1011 = vmatprep.subr.mxu0 0.0
    %1012 = vmatpush1.msra.mxu0 0.0
    %1013 = vmatprep.subr.mxu0 0.0
    %1014 = vmatpush1.msra.mxu0 0.0
    %1015 = vmatprep.mubr.f32.mxu0 0.0
    %1016 = vmatmul.mubr.f32.gmra.mrb[0].mxu0 %v949
    %v1017 = vpop.f32.mrb[0].mxu0
    %v1018 = vadd.f32 %v791, %v1017
    %v1019 = vpop.f32.mrb[0].mxu0
    %1020 = vdwg.mxu0
    %v1021 = vmax.f32 %v1018, 0.0
    %v1023 = vsel %vm41, %v1021, 0
    %1025 = vmatprep.subr.mxu0 0.0
    %1026 = vmatpush1.msra.mxu0 %v779
    %1027 = vmatprep.subr.mxu0 0.0
    %1028 = vmatpush1.msra.mxu0 %v780
    %1029 = vmatprep.subr.mxu0 0.0
    %1030 = vmatpush1.msra.mxu0 %v781
    %1031 = vmatprep.subr.mxu0 0.0
    %1032 = vmatpush1.msra.mxu0 %v782
    %1033 = vmatprep.subr.mxu0 0.0
    %1034 = vmatpush1.msra.mxu0 0.0
    %1035 = vmatprep.subr.mxu0 0.0
    %1036 = vmatpush1.msra.mxu0 0.0
    %1037 = vmatprep.subr.mxu0 0.0
    %1038 = vmatpush1.msra.mxu0 0.0
    %1039 = vmatprep.subr.mxu0 0.0
    %1040 = vmatpush1.msra.mxu0 0.0
    %1041 = vmatprep.subr.mxu0 0.0
    %1042 = vmatpush1.msra.mxu0 0.0
    %1043 = vmatprep.subr.mxu0 0.0
    %1044 = vmatpush1.msra.mxu0 0.0
    %1045 = vmatprep.subr.mxu0 0.0
    %1046 = vmatpush1.msra.mxu0 0.0
    %1047 = vmatprep.subr.mxu0 0.0
    %1048 = vmatpush1.msra.mxu0 0.0
    %1049 = vmatprep.subr.mxu0 0.0
    %1050 = vmatpush1.msra.mxu0 0.0
    %1051 = vmatprep.subr.mxu0 0.0
    %1052 = vmatpush1.msra.mxu0 0.0
    %1053 = vmatprep.subr.mxu0 0.0
    %1054 = vmatpush1.msra.mxu0 0.0
    %1055 = vmatprep.subr.mxu0 0.0
    %1056 = vmatpush1.msra.mxu0 0.0
    %1057 = vmatprep.subr.mxu0 0.0
    %1058 = vmatpush1.msra.mxu0 0.0
    %1059 = vmatprep.subr.mxu0 0.0
    %1060 = vmatpush1.msra.mxu0 0.0
    %1061 = vmatprep.subr.mxu0 0.0
    %1062 = vmatpush1.msra.mxu0 0.0
    %1063 = vmatprep.subr.mxu0 0.0
    %1064 = vmatpush1.msra.mxu0 0.0
    %1065 = vmatprep.subr.mxu0 0.0
    %1066 = vmatpush1.msra.mxu0 0.0
    %1067 = vmatprep.subr.mxu0 0.0
    %1068 = vmatpush1.msra.mxu0 0.0
    %1069 = vmatprep.subr.mxu0 0.0
    %1070 = vmatpush1.msra.mxu0 0.0
    %1071 = vmatprep.subr.mxu0 0.0
    %1072 = vmatpush1.msra.mxu0 0.0
    %1073 = vmatprep.subr.mxu0 0.0
    %1074 = vmatpush1.msra.mxu0 0.0
    %1075 = vmatprep.subr.mxu0 0.0
    %1076 = vmatpush1.msra.mxu0 0.0
    %1077 = vmatprep.subr.mxu0 0.0
    %1078 = vmatpush1.msra.mxu0 0.0
    %1079 = vmatprep.subr.mxu0 0.0
    %1080 = vmatpush1.msra.mxu0 0.0
    %1081 = vmatprep.subr.mxu0 0.0
    %1082 = vmatpush1.msra.mxu0 0.0
    %1083 = vmatprep.subr.mxu0 0.0
    %1084 = vmatpush1.msra.mxu0 0.0
    %1085 = vmatprep.subr.mxu0 0.0
    %1086 = vmatpush1.msra.mxu0 0.0
    %1087 = vmatprep.subr.mxu0 0.0
    %1088 = vmatpush1.msra.mxu0 0.0
    %1089 = vmatprep.mubr.f32.mxu0 0.0
    %1090 = vmatmul.mubr.f32.gmra.mrb[0].mxu0 %v1023
    %v1091 = vpop.f32.mrb[0].mxu0
    %v1092 = vadd.f32 %v871, %v1091
    %v1093 = vpop.f32.mrb[0].mxu0
    %1094 = vdwg.mxu0
    %v1095 = vmul.f32 %v943, %v943
    %v1096 = vsel %vm41, %v1095, 0.0
    %1097 = vadd.xlane.f32.xlu0 %v1096
    %v1098 = vpop.xlane.xlu0 %1097
    %v1099 = vrsqrt.pop %v1098
    %v1100 = vmul.f32 %v1098, %v1099
    %vm1101 = vcmp.eq.f32.partialorder %v1098, inf
    %v1102 = vsel %vm1101, %v1098, %v1100
    %vm1103 = vcmp.eq.f32.partialorder %v1098, 0.0
    %v1104 = vand.u32 %v1098, 2147483648
    %v1105 = vsel %vm1103, %v1104, %v1102
    %v1106 = vmax.f32 %v1105, 1e-12
    %v1107 = vrcp.pop %v1106
    %v1108 = vmul.f32 %v943, %v1107
    %v1109 = vmul.f32 %v1092, %v1092
    %v1110 = vsel %vm41, %v1109, 0.0
    %1111 = vadd.xlane.f32.xlu0 %v1110
    %v1112 = vpop.xlane.xlu0 %1111
    %v1113 = vrsqrt.pop %v1112
    %v1114 = vmul.f32 %v1112, %v1113
    %vm1115 = vcmp.eq.f32.partialorder %v1112, inf
    %v1116 = vsel %vm1115, %v1112, %v1114
    %vm1117 = vcmp.eq.f32.partialorder %v1112, 0.0
    %v1118 = vand.u32 %v1112, 2147483648
    %v1119 = vsel %vm1117, %v1118, %v1116
    %v1120 = vmax.f32 %v1119, 1e-12
    %v1121 = vrcp.pop %v1120
    %v1122 = vmul.f32 %v1092, %v1121
    %v1124 = vsel %vm41, %v1108, 0
    %v1127 = vsel %vm41, %v1122, 0
    %1129 = vmatprep.subr.mxu0 0.0
    %1130 = vmatpush1.xpose.msra.mxu0 %v1127
    %1131 = vmatprep.subr.mxu0 0.0
    %1132 = vmatpush1.xpose.msra.mxu0 0.0
    %1133 = vmatprep.subr.mxu0 0.0
    %1134 = vmatpush1.xpose.msra.mxu0 0.0
    %1135 = vmatprep.subr.mxu0 0.0
    %1136 = vmatpush1.xpose.msra.mxu0 0.0
    %1137 = vmatprep.subr.mxu0 0.0
    %1138 = vmatpush1.xpose.msra.mxu0 0.0
    %1139 = vmatprep.subr.mxu0 0.0
    %1140 = vmatpush1.xpose.msra.mxu0 0.0
    %1141 = vmatprep.subr.mxu0 0.0
    %1142 = vmatpush1.xpose.msra.mxu0 0.0
    %1143 = vmatprep.subr.mxu0 0.0
    %1144 = vmatpush1.xpose.msra.mxu0 0.0
    %1145 = vmatprep.subr.mxu0 0.0
    %1146 = vmatpush1.xpose.msra.mxu0 0.0
    %1147 = vmatprep.subr.mxu0 0.0
    %1148 = vmatpush1.xpose.msra.mxu0 0.0
    %1149 = vmatprep.subr.mxu0 0.0
    %1150 = vmatpush1.xpose.msra.mxu0 0.0
    %1151 = vmatprep.subr.mxu0 0.0
    %1152 = vmatpush1.xpose.msra.mxu0 0.0
    %1153 = vmatprep.subr.mxu0 0.0
    %1154 = vmatpush1.xpose.msra.mxu0 0.0
    %1155 = vmatprep.subr.mxu0 0.0
    %1156 = vmatpush1.xpose.msra.mxu0 0.0
    %1157 = vmatprep.subr.mxu0 0.0
    %1158 = vmatpush1.xpose.msra.mxu0 0.0
    %1159 = vmatprep.subr.mxu0 0.0
    %1160 = vmatpush1.xpose.msra.mxu0 0.0
    %1161 = vmatprep.subr.mxu0 0.0
    %1162 = vmatpush1.xpose.msra.mxu0 0.0
    %1163 = vmatprep.subr.mxu0 0.0
    %1164 = vmatpush1.xpose.msra.mxu0 0.0
    %1165 = vmatprep.subr.mxu0 0.0
    %1166 = vmatpush1.xpose.msra.mxu0 0.0
    %1167 = vmatprep.subr.mxu0 0.0
    %1168 = vmatpush1.xpose.msra.mxu0 0.0
    %1169 = vmatprep.subr.mxu0 0.0
    %1170 = vmatpush1.xpose.msra.mxu0 0.0
    %1171 = vmatprep.subr.mxu0 0.0
    %1172 = vmatpush1.xpose.msra.mxu0 0.0
    %1173 = vmatprep.subr.mxu0 0.0
    %1174 = vmatpush1.xpose.msra.mxu0 0.0
    %1175 = vmatprep.subr.mxu0 0.0
    %1176 = vmatpush1.xpose.msra.mxu0 0.0
    %1177 = vmatprep.subr.mxu0 0.0
    %1178 = vmatpush1.xpose.msra.mxu0 0.0
    %1179 = vmatprep.subr.mxu0 0.0
    %1180 = vmatpush1.xpose.msra.mxu0 0.0
    %1181 = vmatprep.subr.mxu0 0.0
    %1182 = vmatpush1.xpose.msra.mxu0 0.0
    %1183 = vmatprep.subr.mxu0 0.0
    %1184 = vmatpush1.xpose.msra.mxu0 0.0
    %1185 = vmatprep.subr.mxu0 0.0
    %1186 = vmatpush1.xpose.msra.mxu0 0.0
    %1187 = vmatprep.subr.mxu0 0.0
    %1188 = vmatpush1.xpose.msra.mxu0 0.0
    %1189 = vmatprep.subr.mxu0 0.0
    %1190 = vmatpush1.xpose.msra.mxu0 0.0
    %1191 = vmatprep.subr.mxu0 0.0
    %1192 = vmatpush1.xpose.msra.mxu0 0.0
    %1193 = vmatprep.mubr.f32.mxu0 0.0
    %1194 = vmatmul.mubr.f32.gmra.mrb[0].mxu0 %v1124
    %v1195 = vpop.f32.mrb[0].mxu0
    %v1196 = vadd.f32 0.0, %v1195
    %v1197 = vpop.f32.mrb[0].mxu0
    %1198 = vdwg.mxu0
    %v1199 = vmul.f32 %v1196, 1.6666666
    %v1200 = vmul.f32 %v1199, 1.442695
    %v1201 = vpow.pop %v1200
    %1202 = vmatprep.subr.mxu0 0.0
    %1203 = vmatpush1.xpose.msra.mxu0 %v1124
    %1204 = vmatprep.subr.mxu0 0.0
    %1205 = vmatpush1.xpose.msra.mxu0 0.0
    %1206 = vmatprep.subr.mxu0 0.0
    %1207 = vmatpush1.xpose.msra.mxu0 0.0
    %1208 = vmatprep.subr.mxu0 0.0
    %1209 = vmatpush1.xpose.msra.mxu0 0.0
    %1210 = vmatprep.subr.mxu0 0.0
    %1211 = vmatpush1.xpose.msra.mxu0 0.0
    %1212 = vmatprep.subr.mxu0 0.0
    %1213 = vmatpush1.xpose.msra.mxu0 0.0
    %1214 = vmatprep.subr.mxu0 0.0
    %1215 = vmatpush1.xpose.msra.mxu0 0.0
    %1216 = vmatprep.subr.mxu0 0.0
    %1217 = vmatpush1.xpose.msra.mxu0 0.0
    %1218 = vmatprep.subr.mxu0 0.0
    %1219 = vmatpush1.xpose.msra.mxu0 0.0
    %1220 = vmatprep.subr.mxu0 0.0
    %1221 = vmatpush1.xpose.msra.mxu0 0.0
    %1222 = vmatprep.subr.mxu0 0.0
    %1223 = vmatpush1.xpose.msra.mxu0 0.0
    %1224 = vmatprep.subr.mxu0 0.0
    %1225 = vmatpush1.xpose.msra.mxu0 0.0
    %1226 = vmatprep.subr.mxu0 0.0
    %1227 = vmatpush1.xpose.msra.mxu0 0.0
    %1228 = vmatprep.subr.mxu0 0.0
    %1229 = vmatpush1.xpose.msra.mxu0 0.0
    %1230 = vmatprep.subr.mxu0 0.0
    %1231 = vmatpush1.xpose.msra.mxu0 0.0
    %1232 = vmatprep.subr.mxu0 0.0
    %1233 = vmatpush1.xpose.msra.mxu0 0.0
    %1234 = vmatprep.subr.mxu0 0.0
    %1235 = vmatpush1.xpose.msra.mxu0 0.0
    %1236 = vmatprep.subr.mxu0 0.0
    %1237 = vmatpush1.xpose.msra.mxu0 0.0
    %1238 = vmatprep.subr.mxu0 0.0
    %1239 = vmatpush1.xpose.msra.mxu0 0.0
    %1240 = vmatprep.subr.mxu0 0.0
    %1241 = vmatpush1.xpose.msra.mxu0 0.0
    %1242 = vmatprep.subr.mxu0 0.0
    %1243 = vmatpush1.xpose.msra.mxu0 0.0
    %1244 = vmatprep.subr.mxu0 0.0
    %1245 = vmatpush1.xpose.msra.mxu0 0.0
    %1246 = vmatprep.subr.mxu0 0.0
    %1247 = vmatpush1.xpose.msra.mxu0 0.0
    %1248 = vmatprep.subr.mxu0 0.0
    %1249 = vmatpush1.xpose.msra.mxu0 0.0
    %1250 = vmatprep.subr.mxu0 0.0
    %1251 = vmatpush1.xpose.msra.mxu0 0.0
    %1252 = vmatprep.subr.mxu0 0.0
    %1253 = vmatpush1.xpose.msra.mxu0 0.0
    %1254 = vmatprep.subr.mxu0 0.0
    %1255 = vmatpush1.xpose.msra.mxu0 0.0
    %1256 = vmatprep.subr.mxu0 0.0
    %1257 = vmatpush1.xpose.msra.mxu0 0.0
    %1258 = vmatprep.subr.mxu0 0.0
    %1259 = vmatpush1.xpose.msra.mxu0 0.0
    %1260 = vmatprep.subr.mxu0 0.0
    %1261 = vmatpush1.xpose.msra.mxu0 0.0
    %1262 = vmatprep.subr.mxu0 0.0
    %1263 = vmatpush1.xpose.msra.mxu0 0.0
    %1264 = vmatprep.subr.mxu0 0.0
    %1265 = vmatpush1.xpose.msra.mxu0 0.0
    %1266 = vmatprep.mubr.f32.mxu0 0.0
    %1267 = vmatmul.mubr.f32.gmra.mrb[0].mxu0 %v1124
    %v1268 = vpop.f32.mrb[0].mxu0
    %v1269 = vadd.f32 0.0, %v1268
    %v1270 = vpop.f32.mrb[0].mxu0
    %1271 = vdwg.mxu0
    %v1272 = vmul.f32 %v1269, 1.6666666
    %v1273 = vmul.f32 %v1272, 1.442695
    %v1274 = vpow.pop %v1273
    %1275 = vmatprep.subr.mxu0 0.0
    %1276 = vmatpush1.xpose.msra.mxu0 %v1127
    %1277 = vmatprep.subr.mxu0 0.0
    %1278 = vmatpush1.xpose.msra.mxu0 0.0
    %1279 = vmatprep.subr.mxu0 0.0
    %1280 = vmatpush1.xpose.msra.mxu0 0.0
    %1281 = vmatprep.subr.mxu0 0.0
    %1282 = vmatpush1.xpose.msra.mxu0 0.0
    %1283 = vmatprep.subr.mxu0 0.0
    %1284 = vmatpush1.xpose.msra.mxu0 0.0
    %1285 = vmatprep.subr.mxu0 0.0
    %1286 = vmatpush1.xpose.msra.mxu0 0.0
    %1287 = vmatprep.subr.mxu0 0.0
    %1288 = vmatpush1.xpose.msra.mxu0 0.0
    %1289 = vmatprep.subr.mxu0 0.0
    %1290 = vmatpush1.xpose.msra.mxu0 0.0
    %1291 = vmatprep.subr.mxu0 0.0
    %1292 = vmatpush1.xpose.msra.mxu0 0.0
    %1293 = vmatprep.subr.mxu0 0.0
    %1294 = vmatpush1.xpose.msra.mxu0 0.0
    %1295 = vmatprep.subr.mxu0 0.0
    %1296 = vmatpush1.xpose.msra.mxu0 0.0
    %1297 = vmatprep.subr.mxu0 0.0
    %1298 = vmatpush1.xpose.msra.mxu0 0.0
    %1299 = vmatprep.subr.mxu0 0.0
    %1300 = vmatpush1.xpose.msra.mxu0 0.0
    %1301 = vmatprep.subr.mxu0 0.0
    %1302 = vmatpush1.xpose.msra.mxu0 0.0
    %1303 = vmatprep.subr.mxu0 0.0
    %1304 = vmatpush1.xpose.msra.mxu0 0.0
    %1305 = vmatprep.subr.mxu0 0.0
    %1306 = vmatpush1.xpose.msra.mxu0 0.0
    %1307 = vmatprep.subr.mxu0 0.0
    %1308 = vmatpush1.xpose.msra.mxu0 0.0
    %1309 = vmatprep.subr.mxu0 0.0
    %1310 = vmatpush1.xpose.msra.mxu0 0.0
    %1311 = vmatprep.subr.mxu0 0.0
    %1312 = vmatpush1.xpose.msra.mxu0 0.0
    %1313 = vmatprep.subr.mxu0 0.0
    %1314 = vmatpush1.xpose.msra.mxu0 0.0
    %1315 = vmatprep.subr.mxu0 0.0
    %1316 = vmatpush1.xpose.msra.mxu0 0.0
    %1317 = vmatprep.subr.mxu0 0.0
    %1318 = vmatpush1.xpose.msra.mxu0 0.0
    %1319 = vmatprep.subr.mxu0 0.0
    %1320 = vmatpush1.xpose.msra.mxu0 0.0
    %1321 = vmatprep.subr.mxu0 0.0
    %1322 = vmatpush1.xpose.msra.mxu0 0.0
    %1323 = vmatprep.subr.mxu0 0.0
    %1324 = vmatpush1.xpose.msra.mxu0 0.0
    %1325 = vmatprep.subr.mxu0 0.0
    %1326 = vmatpush1.xpose.msra.mxu0 0.0
    %1327 = vmatprep.subr.mxu0 0.0
    %1328 = vmatpush1.xpose.msra.mxu0 0.0
    %1329 = vmatprep.subr.mxu0 0.0
    %1330 = vmatpush1.xpose.msra.mxu0 0.0
    %1331 = vmatprep.subr.mxu0 0.0
    %1332 = vmatpush1.xpose.msra.mxu0 0.0
    %1333 = vmatprep.subr.mxu0 0.0
    %1334 = vmatpush1.xpose.msra.mxu0 0.0
    %1335 = vmatprep.subr.mxu0 0.0
    %1336 = vmatpush1.xpose.msra.mxu0 0.0
    %1337 = vmatprep.subr.mxu0 0.0
    %1338 = vmatpush1.xpose.msra.mxu0 0.0
    %1339 = vmatprep.mubr.f32.mxu0 0.0
    %1340 = vmatmul.mubr.f32.gmra.mrb[0].mxu0 %v1127
    %v1341 = vpop.f32.mrb[0].mxu0
    %v1342 = vadd.f32 0.0, %v1341
    %v1343 = vpop.f32.mrb[0].mxu0
    %1344 = vdwg.mxu0
    %v1345 = vmul.f32 %v1342, 1.6666666
    %v1346 = vmul.f32 %v1345, 1.442695
    %v1347 = vpow.pop %v1346
    %v1348 = vmul.f32 %v1108, %v1122
    %v1349 = vsel %vm41, %v1348, 0.0
    %1350 = vadd.xlane.f32.xlu0 %v1349
    %v1351 = vpop.xlane.xlu0 %1350
    %v1352 = vmul.f32 %v1351, 1.6666666
    %v1353 = vmul.f32 %v1352, 1.442695
    %v1354 = vpow.pop %v1353
    %v1355 = vmul.f32 %v1108, %v1108
    %v1356 = vsel %vm41, %v1355, 0.0
    %1357 = vadd.xlane.f32.xlu0 %v1356
    %v1358 = vpop.xlane.xlu0 %1357
    %v1359 = vmul.f32 %v1358, 1.6666666
    %v1360 = vmul.f32 %v1359, 1.442695
    %v1361 = vpow.pop %v1360
    %v1362 = vmul.f32 %v1122, %v1122
    %v1363 = vsel %vm41, %v1362, 0.0
    %1364 = vadd.xlane.f32.xlu0 %v1363
    %v1365 = vpop.xlane.xlu0 %1364
    %v1366 = vmul.f32 %v1365, 1.6666666
    %v1367 = vmul.f32 %v1366, 1.442695
    %v1368 = vpow.pop %v1367
    %v1369 = vsel %vm617, %v1274, 0.0
    %1370 = vadd.xlane.f32.xlu0 %v1369
    %v1371 = vpop.xlane.xlu0 %1370
    %v1372 = vsel %vm617, %v1347, 0.0
    %1373 = vadd.xlane.f32.xlu0 %v1372
    %v1374 = vpop.xlane.xlu0 %1373
    %v1375 = vsel %vm617, %v1201, 0.0
    %1376 = vadd.xlane.f32.xlu0 %v1375
    %v1377 = vpop.xlane.xlu0 %1376
    %1378 = vxpose.xlu0.b32.start [1/16] %v1201, 128
    %1379 = vxpose.xlu0.b32.cont [2/16] 0.0, 128
    %1380 = vxpose.xlu0.b32.cont [3/16] 0.0, 128
    %1381 = vxpose.xlu0.b32.cont [4/16] 0.0, 128
    %1382 = vxpose.xlu0.b32.cont [5/16] 0.0, 128
    %1383 = vxpose.xlu0.b32.cont [6/16] 0.0, 128
    %1384 = vxpose.xlu0.b32.cont [7/16] 0.0, 128
    %1385 = vxpose.xlu0.b32.cont [8/16] 0.0, 128
    %1386 = vxpose.xlu0.b32.cont [9/16] 0.0, 128
    %1387 = vxpose.xlu0.b32.cont [10/16] 0.0, 128
    %1388 = vxpose.xlu0.b32.cont [11/16] 0.0, 128
    %1389 = vxpose.xlu0.b32.cont [12/16] 0.0, 128
    %1390 = vxpose.xlu0.b32.cont [13/16] 0.0, 128
    %1391 = vxpose.xlu0.b32.cont [14/16] 0.0, 128
    %1392 = vxpose.xlu0.b32.cont [15/16] 0.0, 128
    %1393 = vxpose.xlu0.b32.end [16/16] 0.0, 128
    %v1394 = vpop.trf.xlu0
    %v1395 = vpop.trf.xlu0
    %v1396 = vpop.trf.xlu0
    %v1397 = vpop.trf.xlu0
    %v1398 = vpop.trf.xlu0
    %v1399 = vpop.trf.xlu0
    %v1400 = vpop.trf.xlu0
    %v1401 = vpop.trf.xlu0
    %v1402 = vpop.trf.xlu0
    %v1403 = vpop.trf.xlu0
    %v1404 = vpop.trf.xlu0
    %v1405 = vpop.trf.xlu0
    %v1406 = vpop.trf.xlu0
    %v1407 = vpop.trf.xlu0
    %v1408 = vpop.trf.xlu0
    %v1409 = vpop.trf.xlu0
    %v1411 = vsel %vm617, %v1394, 0
    %1413 = vmatprep.subr.mxu0 0.0
    %1414 = vmatpush1.msra.mxu0 1.0
    %1415 = vmatprep.subr.mxu0 0.0
    %1416 = vmatpush1.msra.mxu0 0.0
    %1417 = vmatprep.subr.mxu0 0.0
    %1418 = vmatpush1.msra.mxu0 0.0
    %1419 = vmatprep.subr.mxu0 0.0
    %1420 = vmatpush1.msra.mxu0 0.0
    %1421 = vmatprep.subr.mxu0 0.0
    %1422 = vmatpush1.msra.mxu0 0.0
    %1423 = vmatprep.subr.mxu0 0.0
    %1424 = vmatpush1.msra.mxu0 0.0
    %1425 = vmatprep.subr.mxu0 0.0
    %1426 = vmatpush1.msra.mxu0 0.0
    %1427 = vmatprep.subr.mxu0 0.0
    %1428 = vmatpush1.msra.mxu0 0.0
    %1429 = vmatprep.subr.mxu0 0.0
    %1430 = vmatpush1.msra.mxu0 0.0
    %1431 = vmatprep.subr.mxu0 0.0
    %1432 = vmatpush1.msra.mxu0 0.0
    %1433 = vmatprep.subr.mxu0 0.0
    %1434 = vmatpush1.msra.mxu0 0.0
    %1435 = vmatprep.subr.mxu0 0.0
    %1436 = vmatpush1.msra.mxu0 0.0
    %1437 = vmatprep.subr.mxu0 0.0
    %1438 = vmatpush1.msra.mxu0 0.0
    %1439 = vmatprep.subr.mxu0 0.0
    %1440 = vmatpush1.msra.mxu0 0.0
    %1441 = vmatprep.subr.mxu0 0.0
    %1442 = vmatpush1.msra.mxu0 0.0
    %1443 = vmatprep.subr.mxu0 0.0
    %1444 = vmatpush1.msra.mxu0 0.0
    %1445 = vmatprep.subr.mxu0 0.0
    %1446 = vmatpush1.msra.mxu0 0.0
    %1447 = vmatprep.subr.mxu0 0.0
    %1448 = vmatpush1.msra.mxu0 0.0
    %1449 = vmatprep.subr.mxu0 0.0
    %1450 = vmatpush1.msra.mxu0 0.0
    %1451 = vmatprep.subr.mxu0 0.0
    %1452 = vmatpush1.msra.mxu0 0.0
    %1453 = vmatprep.subr.mxu0 0.0
    %1454 = vmatpush1.msra.mxu0 0.0
    %1455 = vmatprep.subr.mxu0 0.0
    %1456 = vmatpush1.msra.mxu0 0.0
    %1457 = vmatprep.subr.mxu0 0.0
    %1458 = vmatpush1.msra.mxu0 0.0
    %1459 = vmatprep.subr.mxu0 0.0
    %1460 = vmatpush1.msra.mxu0 0.0
    %1461 = vmatprep.subr.mxu0 0.0
    %1462 = vmatpush1.msra.mxu0 0.0
    %1463 = vmatprep.subr.mxu0 0.0
    %1464 = vmatpush1.msra.mxu0 0.0
    %1465 = vmatprep.subr.mxu0 0.0
    %1466 = vmatpush1.msra.mxu0 0.0
    %1467 = vmatprep.subr.mxu0 0.0
    %1468 = vmatpush1.msra.mxu0 0.0
    %1469 = vmatprep.subr.mxu0 0.0
    %1470 = vmatpush1.msra.mxu0 0.0
    %1471 = vmatprep.subr.mxu0 0.0
    %1472 = vmatpush1.msra.mxu0 0.0
    %1473 = vmatprep.subr.mxu0 0.0
    %1474 = vmatpush1.msra.mxu0 0.0
    %1475 = vmatprep.subr.mxu0 0.0
    %1476 = vmatpush1.msra.mxu0 0.0
    %1477 = vmatprep.mubr.f32.mxu0 0.0
    %1478 = vmatmul.mubr.f32.gmra.mrb[0].mxu0 %v1411
    %v1479 = vpop.f32.mrb[0].mxu0
    %v1480 = vadd.f32 0.0, %v1479
    %v1481 = vpop.f32.mrb[0].mxu0
    %1482 = vdwg.mxu0
    %v1483 = vadd.f32 %v1371, %v1377
    %v1484 = vsub.f32 %v1483, %v1361
    %v1485 = vrcp.pop %v1484
    %v1486 = vmul.f32 %v1354, %v1485
    %v1487 = vlog2.pop %v1486
    %v1488 = vmul.f32 %v1487, 0.6931472
    %v1489 = vsub.f32 0.0, %v1488
    %v1490 = vadd.f32 %v1374, %v1480
    %v1491 = vsub.f32 %v1490, %v1368
    %v1492 = vrcp.pop %v1491
    %v1493 = vmul.f32 %v1354, %v1492
    %v1494 = vlog2.pop %v1493
    %v1495 = vmul.f32 %v1494, 0.6931472
    %v1496 = vsub.f32 0.0, %v1495
    %v1497 = vsel %vm746, %v1489, 0.0
    %1498 = vadd.xlane.f32.xlu0 %v1497
    %v1499 = vpop.xlane.xlu0 %1498
    %v1500 = vrot.slane %v1499, 4
    %v1501 = vadd.f32 %v1499, %v1500
    %v1502 = vrot.slane %v1501, 2
    %v1503 = vadd.f32 %v1501, %v1502
    %v1504 = vrot.slane %v1503, 1
    %v1505 = vadd.f32 %v1503, %v1504
    %s1506 = vtos %v1505
    %s1507 = scalar_lea.smem [#allocation2], 128
    %1508 = sst [smem:[%s1507]] %s1506
    %v1509 = vsel %vm746, %v1496, 0.0
    %1510 = vadd.xlane.f32.xlu0 %v1509
    %v1511 = vpop.xlane.xlu0 %1510
    %v1512 = vrot.slane %v1511, 4
    %v1513 = vadd.f32 %v1511, %v1512
    %v1514 = vrot.slane %v1513, 2
    %v1515 = vadd.f32 %v1513, %v1514
    %v1516 = vrot.slane %v1515, 1
    %v1517 = vadd.f32 %v1515, %v1516
    %s1518 = vtos %v1517
    %s1519 = scalar_lea.smem [#allocation2], 129
    %1520 = sst [smem:[%s1519]] %s1518
    %s1521 = scalar_lea.vmem %s2, 64
    %v1522 = vld [vmem:[%s1521] sm:$0xff]
    %v1523 = vld [vmem:[%s1521 + $0x8] sm:$0xff]
    %v1524 = vld [vmem:[%s1521 + $0x10] sm:$0xff]
    %v1525 = vld [vmem:[%s1521 + $0x18] sm:$0xff]
    %s1526 = scalar_lea.vmem %s3, 2
    %v1527 = vld [vmem:[%s1526] sm:$0x1]
    %s1528 = scalar_lea.vmem %s4, 64
    %v1529 = vld [vmem:[%s1528] sm:$0xff]
    %v1530 = vld [vmem:[%s1528 + $0x8] sm:$0xff]
    %v1531 = vld [vmem:[%s1528 + $0x10] sm:$0xff]
    %v1532 = vld [vmem:[%s1528 + $0x18] sm:$0xff]
    %s1533 = scalar_lea.vmem %s5, 2
    %v1534 = vld [vmem:[%s1533] sm:$0x1]
    %s1535 = scalar_lea.vmem %s0, 16
    %v1536 = vld [vmem:[%s1535] sm:$0xff]
    %v1538 = vlaneseq
    %v1539 = vshrl.u32 %v1538, 7
    %v1540 = vsub.s32 0, %v1539
    %v1541 = vrot.slane %v1527, %v1540
    %v1544 = vsel %vm41, %v1536, 0
    %1546 = vmatprep.subr.mxu0 0.0
    %1547 = vmatpush1.msra.mxu0 %v1522
    %1548 = vmatprep.subr.mxu0 0.0
    %1549 = vmatpush1.msra.mxu0 %v1523
    %1550 = vmatprep.subr.mxu0 0.0
    %1551 = vmatpush1.msra.mxu0 %v1524
    %1552 = vmatprep.subr.mxu0 0.0
    %1553 = vmatpush1.msra.mxu0 %v1525
    %1554 = vmatprep.subr.mxu0 0.0
    %1555 = vmatpush1.msra.mxu0 0.0
    %1556 = vmatprep.subr.mxu0 0.0
    %1557 = vmatpush1.msra.mxu0 0.0
    %1558 = vmatprep.subr.mxu0 0.0
    %1559 = vmatpush1.msra.mxu0 0.0
    %1560 = vmatprep.subr.mxu0 0.0
    %1561 = vmatpush1.msra.mxu0 0.0
    %1562 = vmatprep.subr.mxu0 0.0
    %1563 = vmatpush1.msra.mxu0 0.0
    %1564 = vmatprep.subr.mxu0 0.0
    %1565 = vmatpush1.msra.mxu0 0.0
    %1566 = vmatprep.subr.mxu0 0.0
    %1567 = vmatpush1.msra.mxu0 0.0
    %1568 = vmatprep.subr.mxu0 0.0
    %1569 = vmatpush1.msra.mxu0 0.0
    %1570 = vmatprep.subr.mxu0 0.0
    %1571 = vmatpush1.msra.mxu0 0.0
    %1572 = vmatprep.subr.mxu0 0.0
    %1573 = vmatpush1.msra.mxu0 0.0
    %1574 = vmatprep.subr.mxu0 0.0
    %1575 = vmatpush1.msra.mxu0 0.0
    %1576 = vmatprep.subr.mxu0 0.0
    %1577 = vmatpush1.msra.mxu0 0.0
    %1578 = vmatprep.subr.mxu0 0.0
    %1579 = vmatpush1.msra.mxu0 0.0
    %1580 = vmatprep.subr.mxu0 0.0
    %1581 = vmatpush1.msra.mxu0 0.0
    %1582 = vmatprep.subr.mxu0 0.0
    %1583 = vmatpush1.msra.mxu0 0.0
    %1584 = vmatprep.subr.mxu0 0.0
    %1585 = vmatpush1.msra.mxu0 0.0
    %1586 = vmatprep.subr.mxu0 0.0
    %1587 = vmatpush1.msra.mxu0 0.0
    %1588 = vmatprep.subr.mxu0 0.0
    %1589 = vmatpush1.msra.mxu0 0.0
    %1590 = vmatprep.subr.mxu0 0.0
    %1591 = vmatpush1.msra.mxu0 0.0
    %1592 = vmatprep.subr.mxu0 0.0
    %1593 = vmatpush1.msra.mxu0 0.0
    %1594 = vmatprep.subr.mxu0 0.0
    %1595 = vmatpush1.msra.mxu0 0.0
    %1596 = vmatprep.subr.mxu0 0.0
    %1597 = vmatpush1.msra.mxu0 0.0
    %1598 = vmatprep.subr.mxu0 0.0
    %1599 = vmatpush1.msra.mxu0 0.0
    %1600 = vmatprep.subr.mxu0 0.0
    %1601 = vmatpush1.msra.mxu0 0.0
    %1602 = vmatprep.subr.mxu0 0.0
    %1603 = vmatpush1.msra.mxu0 0.0
    %1604 = vmatprep.subr.mxu0 0.0
    %1605 = vmatpush1.msra.mxu0 0.0
    %1606 = vmatprep.subr.mxu0 0.0
    %1607 = vmatpush1.msra.mxu0 0.0
    %1608 = vmatprep.subr.mxu0 0.0
    %1609 = vmatpush1.msra.mxu0 0.0
    %1610 = vmatprep.mubr.f32.mxu0 0.0
    %1611 = vmatmul.mubr.f32.gmra.mrb[0].mxu0 %v1544
    %v1612 = vpop.f32.mrb[0].mxu0
    %v1613 = vadd.f32 %v1541, %v1612
    %v1614 = vpop.f32.mrb[0].mxu0
    %1615 = vdwg.mxu0
    %v1616 = vmax.f32 %v1613, 0.0
    %v1618 = vlaneseq
    %v1619 = vshrl.u32 %v1618, 7
    %v1620 = vsub.s32 0, %v1619
    %v1621 = vrot.slane %v1534, %v1620
    %v1624 = vsel %vm41, %v1616, 0
    %1626 = vmatprep.subr.mxu0 0.0
    %1627 = vmatpush1.msra.mxu0 %v1529
    %1628 = vmatprep.subr.mxu0 0.0
    %1629 = vmatpush1.msra.mxu0 %v1530
    %1630 = vmatprep.subr.mxu0 0.0
    %1631 = vmatpush1.msra.mxu0 %v1531
    %1632 = vmatprep.subr.mxu0 0.0
    %1633 = vmatpush1.msra.mxu0 %v1532
    %1634 = vmatprep.subr.mxu0 0.0
    %1635 = vmatpush1.msra.mxu0 0.0
    %1636 = vmatprep.subr.mxu0 0.0
    %1637 = vmatpush1.msra.mxu0 0.0
    %1638 = vmatprep.subr.mxu0 0.0
    %1639 = vmatpush1.msra.mxu0 0.0
    %1640 = vmatprep.subr.mxu0 0.0
    %1641 = vmatpush1.msra.mxu0 0.0
    %1642 = vmatprep.subr.mxu0 0.0
    %1643 = vmatpush1.msra.mxu0 0.0
    %1644 = vmatprep.subr.mxu0 0.0
    %1645 = vmatpush1.msra.mxu0 0.0
    %1646 = vmatprep.subr.mxu0 0.0
    %1647 = vmatpush1.msra.mxu0 0.0
    %1648 = vmatprep.subr.mxu0 0.0
    %1649 = vmatpush1.msra.mxu0 0.0
    %1650 = vmatprep.subr.mxu0 0.0
    %1651 = vmatpush1.msra.mxu0 0.0
    %1652 = vmatprep.subr.mxu0 0.0
    %1653 = vmatpush1.msra.mxu0 0.0
    %1654 = vmatprep.subr.mxu0 0.0
    %1655 = vmatpush1.msra.mxu0 0.0
    %1656 = vmatprep.subr.mxu0 0.0
    %1657 = vmatpush1.msra.mxu0 0.0
    %1658 = vmatprep.subr.mxu0 0.0
    %1659 = vmatpush1.msra.mxu0 0.0
    %1660 = vmatprep.subr.mxu0 0.0
    %1661 = vmatpush1.msra.mxu0 0.0
    %1662 = vmatprep.subr.mxu0 0.0
    %1663 = vmatpush1.msra.mxu0 0.0
    %1664 = vmatprep.subr.mxu0 0.0
    %1665 = vmatpush1.msra.mxu0 0.0
    %1666 = vmatprep.subr.mxu0 0.0
    %1667 = vmatpush1.msra.mxu0 0.0
    %1668 = vmatprep.subr.mxu0 0.0
    %1669 = vmatpush1.msra.mxu0 0.0
    %1670 = vmatprep.subr.mxu0 0.0
    %1671 = vmatpush1.msra.mxu0 0.0
    %1672 = vmatprep.subr.mxu0 0.0
    %1673 = vmatpush1.msra.mxu0 0.0
    %1674 = vmatprep.subr.mxu0 0.0
    %1675 = vmatpush1.msra.mxu0 0.0
    %1676 = vmatprep.subr.mxu0 0.0
    %1677 = vmatpush1.msra.mxu0 0.0
    %1678 = vmatprep.subr.mxu0 0.0
    %1679 = vmatpush1.msra.mxu0 0.0
    %1680 = vmatprep.subr.mxu0 0.0
    %1681 = vmatpush1.msra.mxu0 0.0
    %1682 = vmatprep.subr.mxu0 0.0
    %1683 = vmatpush1.msra.mxu0 0.0
    %1684 = vmatprep.subr.mxu0 0.0
    %1685 = vmatpush1.msra.mxu0 0.0
    %1686 = vmatprep.subr.mxu0 0.0
    %1687 = vmatpush1.msra.mxu0 0.0
    %1688 = vmatprep.subr.mxu0 0.0
    %1689 = vmatpush1.msra.mxu0 0.0
    %1690 = vmatprep.mubr.f32.mxu0 0.0
    %1691 = vmatmul.mubr.f32.gmra.mrb[0].mxu0 %v1624
    %v1692 = vpop.f32.mrb[0].mxu0
    %v1693 = vadd.f32 %v1621, %v1692
    %v1694 = vpop.f32.mrb[0].mxu0
    %1695 = vdwg.mxu0
    %s1696 = scalar_lea.vmem %s1, 16
    %v1697 = vld [vmem:[%s1696] sm:$0xff]
    %v1699 = vsel %vm41, %v1697, 0
    %1701 = vmatprep.subr.mxu0 0.0
    %1702 = vmatpush1.msra.mxu0 %v1522
    %1703 = vmatprep.subr.mxu0 0.0
    %1704 = vmatpush1.msra.mxu0 %v1523
    %1705 = vmatprep.subr.mxu0 0.0
    %1706 = vmatpush1.msra.mxu0 %v1524
    %1707 = vmatprep.subr.mxu0 0.0
    %1708 = vmatpush1.msra.mxu0 %v1525
    %1709 = vmatprep.subr.mxu0 0.0
    %1710 = vmatpush1.msra.mxu0 0.0
    %1711 = vmatprep.subr.mxu0 0.0
    %1712 = vmatpush1.msra.mxu0 0.0
    %1713 = vmatprep.subr.mxu0 0.0
    %1714 = vmatpush1.msra.mxu0 0.0
    %1715 = vmatprep.subr.mxu0 0.0
    %1716 = vmatpush1.msra.mxu0 0.0
    %1717 = vmatprep.subr.mxu0 0.0
    %1718 = vmatpush1.msra.mxu0 0.0
    %1719 = vmatprep.subr.mxu0 0.0
    %1720 = vmatpush1.msra.mxu0 0.0
    %1721 = vmatprep.subr.mxu0 0.0
    %1722 = vmatpush1.msra.mxu0 0.0
    %1723 = vmatprep.subr.mxu0 0.0
    %1724 = vmatpush1.msra.mxu0 0.0
    %1725 = vmatprep.subr.mxu0 0.0
    %1726 = vmatpush1.msra.mxu0 0.0
    %1727 = vmatprep.subr.mxu0 0.0
    %1728 = vmatpush1.msra.mxu0 0.0
    %1729 = vmatprep.subr.mxu0 0.0
    %1730 = vmatpush1.msra.mxu0 0.0
    %1731 = vmatprep.subr.mxu0 0.0
    %1732 = vmatpush1.msra.mxu0 0.0
    %1733 = vmatprep.subr.mxu0 0.0
    %1734 = vmatpush1.msra.mxu0 0.0
    %1735 = vmatprep.subr.mxu0 0.0
    %1736 = vmatpush1.msra.mxu0 0.0
    %1737 = vmatprep.subr.mxu0 0.0
    %1738 = vmatpush1.msra.mxu0 0.0
    %1739 = vmatprep.subr.mxu0 0.0
    %1740 = vmatpush1.msra.mxu0 0.0
    %1741 = vmatprep.subr.mxu0 0.0
    %1742 = vmatpush1.msra.mxu0 0.0
    %1743 = vmatprep.subr.mxu0 0.0
    %1744 = vmatpush1.msra.mxu0 0.0
    %1745 = vmatprep.subr.mxu0 0.0
    %1746 = vmatpush1.msra.mxu0 0.0
    %1747 = vmatprep.subr.mxu0 0.0
    %1748 = vmatpush1.msra.mxu0 0.0
    %1749 = vmatprep.subr.mxu0 0.0
    %1750 = vmatpush1.msra.mxu0 0.0
    %1751 = vmatprep.subr.mxu0 0.0
    %1752 = vmatpush1.msra.mxu0 0.0
    %1753 = vmatprep.subr.mxu0 0.0
    %1754 = vmatpush1.msra.mxu0 0.0
    %1755 = vmatprep.subr.mxu0 0.0
    %1756 = vmatpush1.msra.mxu0 0.0
    %1757 = vmatprep.subr.mxu0 0.0
    %1758 = vmatpush1.msra.mxu0 0.0
    %1759 = vmatprep.subr.mxu0 0.0
    %1760 = vmatpush1.msra.mxu0 0.0
    %1761 = vmatprep.subr.mxu0 0.0
    %1762 = vmatpush1.msra.mxu0 0.0
    %1763 = vmatprep.subr.mxu0 0.0
    %1764 = vmatpush1.msra.mxu0 0.0
    %1765 = vmatprep.mubr.f32.mxu0 0.0
    %1766 = vmatmul.mubr.f32.gmra.mrb[0].mxu0 %v1699
    %v1767 = vpop.f32.mrb[0].mxu0
    %v1768 = vadd.f32 %v1541, %v1767
    %v1769 = vpop.f32.mrb[0].mxu0
    %1770 = vdwg.mxu0
    %v1771 = vmax.f32 %v1768, 0.0
    %v1773 = vsel %vm41, %v1771, 0
    %1775 = vmatprep.subr.mxu0 0.0
    %1776 = vmatpush1.msra.mxu0 %v1529
    %1777 = vmatprep.subr.mxu0 0.0
    %1778 = vmatpush1.msra.mxu0 %v1530
    %1779 = vmatprep.subr.mxu0 0.0
    %1780 = vmatpush1.msra.mxu0 %v1531
    %1781 = vmatprep.subr.mxu0 0.0
    %1782 = vmatpush1.msra.mxu0 %v1532
    %1783 = vmatprep.subr.mxu0 0.0
    %1784 = vmatpush1.msra.mxu0 0.0
    %1785 = vmatprep.subr.mxu0 0.0
    %1786 = vmatpush1.msra.mxu0 0.0
    %1787 = vmatprep.subr.mxu0 0.0
    %1788 = vmatpush1.msra.mxu0 0.0
    %1789 = vmatprep.subr.mxu0 0.0
    %1790 = vmatpush1.msra.mxu0 0.0
    %1791 = vmatprep.subr.mxu0 0.0
    %1792 = vmatpush1.msra.mxu0 0.0
    %1793 = vmatprep.subr.mxu0 0.0
    %1794 = vmatpush1.msra.mxu0 0.0
    %1795 = vmatprep.subr.mxu0 0.0
    %1796 = vmatpush1.msra.mxu0 0.0
    %1797 = vmatprep.subr.mxu0 0.0
    %1798 = vmatpush1.msra.mxu0 0.0
    %1799 = vmatprep.subr.mxu0 0.0
    %1800 = vmatpush1.msra.mxu0 0.0
    %1801 = vmatprep.subr.mxu0 0.0
    %1802 = vmatpush1.msra.mxu0 0.0
    %1803 = vmatprep.subr.mxu0 0.0
    %1804 = vmatpush1.msra.mxu0 0.0
    %1805 = vmatprep.subr.mxu0 0.0
    %1806 = vmatpush1.msra.mxu0 0.0
    %1807 = vmatprep.subr.mxu0 0.0
    %1808 = vmatpush1.msra.mxu0 0.0
    %1809 = vmatprep.subr.mxu0 0.0
    %1810 = vmatpush1.msra.mxu0 0.0
    %1811 = vmatprep.subr.mxu0 0.0
    %1812 = vmatpush1.msra.mxu0 0.0
    %1813 = vmatprep.subr.mxu0 0.0
    %1814 = vmatpush1.msra.mxu0 0.0
    %1815 = vmatprep.subr.mxu0 0.0
    %1816 = vmatpush1.msra.mxu0 0.0
    %1817 = vmatprep.subr.mxu0 0.0
    %1818 = vmatpush1.msra.mxu0 0.0
    %1819 = vmatprep.subr.mxu0 0.0
    %1820 = vmatpush1.msra.mxu0 0.0
    %1821 = vmatprep.subr.mxu0 0.0
    %1822 = vmatpush1.msra.mxu0 0.0
    %1823 = vmatprep.subr.mxu0 0.0
    %1824 = vmatpush1.msra.mxu0 0.0
    %1825 = vmatprep.subr.mxu0 0.0
    %1826 = vmatpush1.msra.mxu0 0.0
    %1827 = vmatprep.subr.mxu0 0.0
    %1828 = vmatpush1.msra.mxu0 0.0
    %1829 = vmatprep.subr.mxu0 0.0
    %1830 = vmatpush1.msra.mxu0 0.0
    %1831 = vmatprep.subr.mxu0 0.0
    %1832 = vmatpush1.msra.mxu0 0.0
    %1833 = vmatprep.subr.mxu0 0.0
    %1834 = vmatpush1.msra.mxu0 0.0
    %1835 = vmatprep.subr.mxu0 0.0
    %1836 = vmatpush1.msra.mxu0 0.0
    %1837 = vmatprep.subr.mxu0 0.0
    %1838 = vmatpush1.msra.mxu0 0.0
    %1839 = vmatprep.mubr.f32.mxu0 0.0
    %1840 = vmatmul.mubr.f32.gmra.mrb[0].mxu0 %v1773
    %v1841 = vpop.f32.mrb[0].mxu0
    %v1842 = vadd.f32 %v1621, %v1841
    %v1843 = vpop.f32.mrb[0].mxu0
    %1844 = vdwg.mxu0
    %v1845 = vmul.f32 %v1693, %v1693
    %v1846 = vsel %vm41, %v1845, 0.0
    %1847 = vadd.xlane.f32.xlu0 %v1846
    %v1848 = vpop.xlane.xlu0 %1847
    %v1849 = vrsqrt.pop %v1848
    %v1850 = vmul.f32 %v1848, %v1849
    %vm1851 = vcmp.eq.f32.partialorder %v1848, inf
    %v1852 = vsel %vm1851, %v1848, %v1850
    %vm1853 = vcmp.eq.f32.partialorder %v1848, 0.0
    %v1854 = vand.u32 %v1848, 2147483648
    %v1855 = vsel %vm1853, %v1854, %v1852
    %v1856 = vmax.f32 %v1855, 1e-12
    %v1857 = vrcp.pop %v1856
    %v1858 = vmul.f32 %v1693, %v1857
    %v1859 = vmul.f32 %v1842, %v1842
    %v1860 = vsel %vm41, %v1859, 0.0
    %1861 = vadd.xlane.f32.xlu0 %v1860
    %v1862 = vpop.xlane.xlu0 %1861
    %v1863 = vrsqrt.pop %v1862
    %v1864 = vmul.f32 %v1862, %v1863
    %vm1865 = vcmp.eq.f32.partialorder %v1862, inf
    %v1866 = vsel %vm1865, %v1862, %v1864
    %vm1867 = vcmp.eq.f32.partialorder %v1862, 0.0
    %v1868 = vand.u32 %v1862, 2147483648
    %v1869 = vsel %vm1867, %v1868, %v1866
    %v1870 = vmax.f32 %v1869, 1e-12
    %v1871 = vrcp.pop %v1870
    %v1872 = vmul.f32 %v1842, %v1871
    %v1874 = vsel %vm41, %v1858, 0
    %v1877 = vsel %vm41, %v1872, 0
    %1879 = vmatprep.subr.mxu0 0.0
    %1880 = vmatpush1.xpose.msra.mxu0 %v1877
    %1881 = vmatprep.subr.mxu0 0.0
    %1882 = vmatpush1.xpose.msra.mxu0 0.0
    %1883 = vmatprep.subr.mxu0 0.0
    %1884 = vmatpush1.xpose.msra.mxu0 0.0
    %1885 = vmatprep.subr.mxu0 0.0
    %1886 = vmatpush1.xpose.msra.mxu0 0.0
    %1887 = vmatprep.subr.mxu0 0.0
    %1888 = vmatpush1.xpose.msra.mxu0 0.0
    %1889 = vmatprep.subr.mxu0 0.0
    %1890 = vmatpush1.xpose.msra.mxu0 0.0
    %1891 = vmatprep.subr.mxu0 0.0
    %1892 = vmatpush1.xpose.msra.mxu0 0.0
    %1893 = vmatprep.subr.mxu0 0.0
    %1894 = vmatpush1.xpose.msra.mxu0 0.0
    %1895 = vmatprep.subr.mxu0 0.0
    %1896 = vmatpush1.xpose.msra.mxu0 0.0
    %1897 = vmatprep.subr.mxu0 0.0
    %1898 = vmatpush1.xpose.msra.mxu0 0.0
    %1899 = vmatprep.subr.mxu0 0.0
    %1900 = vmatpush1.xpose.msra.mxu0 0.0
    %1901 = vmatprep.subr.mxu0 0.0
    %1902 = vmatpush1.xpose.msra.mxu0 0.0
    %1903 = vmatprep.subr.mxu0 0.0
    %1904 = vmatpush1.xpose.msra.mxu0 0.0
    %1905 = vmatprep.subr.mxu0 0.0
    %1906 = vmatpush1.xpose.msra.mxu0 0.0
    %1907 = vmatprep.subr.mxu0 0.0
    %1908 = vmatpush1.xpose.msra.mxu0 0.0
    %1909 = vmatprep.subr.mxu0 0.0
    %1910 = vmatpush1.xpose.msra.mxu0 0.0
    %1911 = vmatprep.subr.mxu0 0.0
    %1912 = vmatpush1.xpose.msra.mxu0 0.0
    %1913 = vmatprep.subr.mxu0 0.0
    %1914 = vmatpush1.xpose.msra.mxu0 0.0
    %1915 = vmatprep.subr.mxu0 0.0
    %1916 = vmatpush1.xpose.msra.mxu0 0.0
    %1917 = vmatprep.subr.mxu0 0.0
    %1918 = vmatpush1.xpose.msra.mxu0 0.0
    %1919 = vmatprep.subr.mxu0 0.0
    %1920 = vmatpush1.xpose.msra.mxu0 0.0
    %1921 = vmatprep.subr.mxu0 0.0
    %1922 = vmatpush1.xpose.msra.mxu0 0.0
    %1923 = vmatprep.subr.mxu0 0.0
    %1924 = vmatpush1.xpose.msra.mxu0 0.0
    %1925 = vmatprep.subr.mxu0 0.0
    %1926 = vmatpush1.xpose.msra.mxu0 0.0
    %1927 = vmatprep.subr.mxu0 0.0
    %1928 = vmatpush1.xpose.msra.mxu0 0.0
    %1929 = vmatprep.subr.mxu0 0.0
    %1930 = vmatpush1.xpose.msra.mxu0 0.0
    %1931 = vmatprep.subr.mxu0 0.0
    %1932 = vmatpush1.xpose.msra.mxu0 0.0
    %1933 = vmatprep.subr.mxu0 0.0
    %1934 = vmatpush1.xpose.msra.mxu0 0.0
    %1935 = vmatprep.subr.mxu0 0.0
    %1936 = vmatpush1.xpose.msra.mxu0 0.0
    %1937 = vmatprep.subr.mxu0 0.0
    %1938 = vmatpush1.xpose.msra.mxu0 0.0
    %1939 = vmatprep.subr.mxu0 0.0
    %1940 = vmatpush1.xpose.msra.mxu0 0.0
    %1941 = vmatprep.subr.mxu0 0.0
    %1942 = vmatpush1.xpose.msra.mxu0 0.0
    %1943 = vmatprep.mubr.f32.mxu0 0.0
    %1944 = vmatmul.mubr.f32.gmra.mrb[0].mxu0 %v1874
    %v1945 = vpop.f32.mrb[0].mxu0
    %v1946 = vadd.f32 0.0, %v1945
    %v1947 = vpop.f32.mrb[0].mxu0
    %1948 = vdwg.mxu0
    %v1949 = vmul.f32 %v1946, 1.6666666
    %v1950 = vmul.f32 %v1949, 1.442695
    %v1951 = vpow.pop %v1950
    %1952 = vmatprep.subr.mxu0 0.0
    %1953 = vmatpush1.xpose.msra.mxu0 %v1874
    %1954 = vmatprep.subr.mxu0 0.0
    %1955 = vmatpush1.xpose.msra.mxu0 0.0
    %1956 = vmatprep.subr.mxu0 0.0
    %1957 = vmatpush1.xpose.msra.mxu0 0.0
    %1958 = vmatprep.subr.mxu0 0.0
    %1959 = vmatpush1.xpose.msra.mxu0 0.0
    %1960 = vmatprep.subr.mxu0 0.0
    %1961 = vmatpush1.xpose.msra.mxu0 0.0
    %1962 = vmatprep.subr.mxu0 0.0
    %1963 = vmatpush1.xpose.msra.mxu0 0.0
    %1964 = vmatprep.subr.mxu0 0.0
    %1965 = vmatpush1.xpose.msra.mxu0 0.0
    %1966 = vmatprep.subr.mxu0 0.0
    %1967 = vmatpush1.xpose.msra.mxu0 0.0
    %1968 = vmatprep.subr.mxu0 0.0
    %1969 = vmatpush1.xpose.msra.mxu0 0.0
    %1970 = vmatprep.subr.mxu0 0.0
    %1971 = vmatpush1.xpose.msra.mxu0 0.0
    %1972 = vmatprep.subr.mxu0 0.0
    %1973 = vmatpush1.xpose.msra.mxu0 0.0
    %1974 = vmatprep.subr.mxu0 0.0
    %1975 = vmatpush1.xpose.msra.mxu0 0.0
    %1976 = vmatprep.subr.mxu0 0.0
    %1977 = vmatpush1.xpose.msra.mxu0 0.0
    %1978 = vmatprep.subr.mxu0 0.0
    %1979 = vmatpush1.xpose.msra.mxu0 0.0
    %1980 = vmatprep.subr.mxu0 0.0
    %1981 = vmatpush1.xpose.msra.mxu0 0.0
    %1982 = vmatprep.subr.mxu0 0.0
    %1983 = vmatpush1.xpose.msra.mxu0 0.0
    %1984 = vmatprep.subr.mxu0 0.0
    %1985 = vmatpush1.xpose.msra.mxu0 0.0
    %1986 = vmatprep.subr.mxu0 0.0
    %1987 = vmatpush1.xpose.msra.mxu0 0.0
    %1988 = vmatprep.subr.mxu0 0.0
    %1989 = vmatpush1.xpose.msra.mxu0 0.0
    %1990 = vmatprep.subr.mxu0 0.0
    %1991 = vmatpush1.xpose.msra.mxu0 0.0
    %1992 = vmatprep.subr.mxu0 0.0
    %1993 = vmatpush1.xpose.msra.mxu0 0.0
    %1994 = vmatprep.subr.mxu0 0.0
    %1995 = vmatpush1.xpose.msra.mxu0 0.0
    %1996 = vmatprep.subr.mxu0 0.0
    %1997 = vmatpush1.xpose.msra.mxu0 0.0
    %1998 = vmatprep.subr.mxu0 0.0
    %1999 = vmatpush1.xpose.msra.mxu0 0.0
    %2000 = vmatprep.subr.mxu0 0.0
    %2001 = vmatpush1.xpose.msra.mxu0 0.0
    %2002 = vmatprep.subr.mxu0 0.0
    %2003 = vmatpush1.xpose.msra.mxu0 0.0
    %2004 = vmatprep.subr.mxu0 0.0
    %2005 = vmatpush1.xpose.msra.mxu0 0.0
    %2006 = vmatprep.subr.mxu0 0.0
    %2007 = vmatpush1.xpose.msra.mxu0 0.0
    %2008 = vmatprep.subr.mxu0 0.0
    %2009 = vmatpush1.xpose.msra.mxu0 0.0
    %2010 = vmatprep.subr.mxu0 0.0
    %2011 = vmatpush1.xpose.msra.mxu0 0.0
    %2012 = vmatprep.subr.mxu0 0.0
    %2013 = vmatpush1.xpose.msra.mxu0 0.0
    %2014 = vmatprep.subr.mxu0 0.0
    %2015 = vmatpush1.xpose.msra.mxu0 0.0
    %2016 = vmatprep.mubr.f32.mxu0 0.0
    %2017 = vmatmul.mubr.f32.gmra.mrb[0].mxu0 %v1874
    %v2018 = vpop.f32.mrb[0].mxu0
    %v2019 = vadd.f32 0.0, %v2018
    %v2020 = vpop.f32.mrb[0].mxu0
    %2021 = vdwg.mxu0
    %v2022 = vmul.f32 %v2019, 1.6666666
    %v2023 = vmul.f32 %v2022, 1.442695
    %v2024 = vpow.pop %v2023
    %2025 = vmatprep.subr.mxu0 0.0
    %2026 = vmatpush1.xpose.msra.mxu0 %v1877
    %2027 = vmatprep.subr.mxu0 0.0
    %2028 = vmatpush1.xpose.msra.mxu0 0.0
    %2029 = vmatprep.subr.mxu0 0.0
    %2030 = vmatpush1.xpose.msra.mxu0 0.0
    %2031 = vmatprep.subr.mxu0 0.0
    %2032 = vmatpush1.xpose.msra.mxu0 0.0
    %2033 = vmatprep.subr.mxu0 0.0
    %2034 = vmatpush1.xpose.msra.mxu0 0.0
    %2035 = vmatprep.subr.mxu0 0.0
    %2036 = vmatpush1.xpose.msra.mxu0 0.0
    %2037 = vmatprep.subr.mxu0 0.0
    %2038 = vmatpush1.xpose.msra.mxu0 0.0
    %2039 = vmatprep.subr.mxu0 0.0
    %2040 = vmatpush1.xpose.msra.mxu0 0.0
    %2041 = vmatprep.subr.mxu0 0.0
    %2042 = vmatpush1.xpose.msra.mxu0 0.0
    %2043 = vmatprep.subr.mxu0 0.0
    %2044 = vmatpush1.xpose.msra.mxu0 0.0
    %2045 = vmatprep.subr.mxu0 0.0
    %2046 = vmatpush1.xpose.msra.mxu0 0.0
    %2047 = vmatprep.subr.mxu0 0.0
    %2048 = vmatpush1.xpose.msra.mxu0 0.0
    %2049 = vmatprep.subr.mxu0 0.0
    %2050 = vmatpush1.xpose.msra.mxu0 0.0
    %2051 = vmatprep.subr.mxu0 0.0
    %2052 = vmatpush1.xpose.msra.mxu0 0.0
    %2053 = vmatprep.subr.mxu0 0.0
    %2054 = vmatpush1.xpose.msra.mxu0 0.0
    %2055 = vmatprep.subr.mxu0 0.0
    %2056 = vmatpush1.xpose.msra.mxu0 0.0
    %2057 = vmatprep.subr.mxu0 0.0
    %2058 = vmatpush1.xpose.msra.mxu0 0.0
    %2059 = vmatprep.subr.mxu0 0.0
    %2060 = vmatpush1.xpose.msra.mxu0 0.0
    %2061 = vmatprep.subr.mxu0 0.0
    %2062 = vmatpush1.xpose.msra.mxu0 0.0
    %2063 = vmatprep.subr.mxu0 0.0
    %2064 = vmatpush1.xpose.msra.mxu0 0.0
    %2065 = vmatprep.subr.mxu0 0.0
    %2066 = vmatpush1.xpose.msra.mxu0 0.0
    %2067 = vmatprep.subr.mxu0 0.0
    %2068 = vmatpush1.xpose.msra.mxu0 0.0
    %2069 = vmatprep.subr.mxu0 0.0
    %2070 = vmatpush1.xpose.msra.mxu0 0.0
    %2071 = vmatprep.subr.mxu0 0.0
    %2072 = vmatpush1.xpose.msra.mxu0 0.0
    %2073 = vmatprep.subr.mxu0 0.0
    %2074 = vmatpush1.xpose.msra.mxu0 0.0
    %2075 = vmatprep.subr.mxu0 0.0
    %2076 = vmatpush1.xpose.msra.mxu0 0.0
    %2077 = vmatprep.subr.mxu0 0.0
    %2078 = vmatpush1.xpose.msra.mxu0 0.0
    %2079 = vmatprep.subr.mxu0 0.0
    %2080 = vmatpush1.xpose.msra.mxu0 0.0
    %2081 = vmatprep.subr.mxu0 0.0
    %2082 = vmatpush1.xpose.msra.mxu0 0.0
    %2083 = vmatprep.subr.mxu0 0.0
    %2084 = vmatpush1.xpose.msra.mxu0 0.0
    %2085 = vmatprep.subr.mxu0 0.0
    %2086 = vmatpush1.xpose.msra.mxu0 0.0
    %2087 = vmatprep.subr.mxu0 0.0
    %2088 = vmatpush1.xpose.msra.mxu0 0.0
    %2089 = vmatprep.mubr.f32.mxu0 0.0
    %2090 = vmatmul.mubr.f32.gmra.mrb[0].mxu0 %v1877
    %v2091 = vpop.f32.mrb[0].mxu0
    %v2092 = vadd.f32 0.0, %v2091
    %v2093 = vpop.f32.mrb[0].mxu0
    %2094 = vdwg.mxu0
    %v2095 = vmul.f32 %v2092, 1.6666666
    %v2096 = vmul.f32 %v2095, 1.442695
    %v2097 = vpow.pop %v2096
    %v2098 = vmul.f32 %v1858, %v1872
    %v2099 = vsel %vm41, %v2098, 0.0
    %2100 = vadd.xlane.f32.xlu0 %v2099
    %v2101 = vpop.xlane.xlu0 %2100
    %v2102 = vmul.f32 %v2101, 1.6666666
    %v2103 = vmul.f32 %v2102, 1.442695
    %v2104 = vpow.pop %v2103
    %v2105 = vmul.f32 %v1858, %v1858
    %v2106 = vsel %vm41, %v2105, 0.0
    %2107 = vadd.xlane.f32.xlu0 %v2106
    %v2108 = vpop.xlane.xlu0 %2107
    %v2109 = vmul.f32 %v2108, 1.6666666
    %v2110 = vmul.f32 %v2109, 1.442695
    %v2111 = vpow.pop %v2110
    %v2112 = vmul.f32 %v1872, %v1872
    %v2113 = vsel %vm41, %v2112, 0.0
    %2114 = vadd.xlane.f32.xlu0 %v2113
    %v2115 = vpop.xlane.xlu0 %2114
    %v2116 = vmul.f32 %v2115, 1.6666666
    %v2117 = vmul.f32 %v2116, 1.442695
    %v2118 = vpow.pop %v2117
    %v2119 = vsel %vm617, %v2024, 0.0
    %2120 = vadd.xlane.f32.xlu0 %v2119
    %v2121 = vpop.xlane.xlu0 %2120
    %v2122 = vsel %vm617, %v2097, 0.0
    %2123 = vadd.xlane.f32.xlu0 %v2122
    %v2124 = vpop.xlane.xlu0 %2123
    %v2125 = vsel %vm617, %v1951, 0.0
    %2126 = vadd.xlane.f32.xlu0 %v2125
    %v2127 = vpop.xlane.xlu0 %2126
    %2128 = vxpose.xlu0.b32.start [1/16] %v1951, 128
    %2129 = vxpose.xlu0.b32.cont [2/16] 0.0, 128
    %2130 = vxpose.xlu0.b32.cont [3/16] 0.0, 128
    %2131 = vxpose.xlu0.b32.cont [4/16] 0.0, 128
    %2132 = vxpose.xlu0.b32.cont [5/16] 0.0, 128
    %2133 = vxpose.xlu0.b32.cont [6/16] 0.0, 128
    %2134 = vxpose.xlu0.b32.cont [7/16] 0.0, 128
    %2135 = vxpose.xlu0.b32.cont [8/16] 0.0, 128
    %2136 = vxpose.xlu0.b32.cont [9/16] 0.0, 128
    %2137 = vxpose.xlu0.b32.cont [10/16] 0.0, 128
    %2138 = vxpose.xlu0.b32.cont [11/16] 0.0, 128
    %2139 = vxpose.xlu0.b32.cont [12/16] 0.0, 128
    %2140 = vxpose.xlu0.b32.cont [13/16] 0.0, 128
    %2141 = vxpose.xlu0.b32.cont [14/16] 0.0, 128
    %2142 = vxpose.xlu0.b32.cont [15/16] 0.0, 128
    %2143 = vxpose.xlu0.b32.end [16/16] 0.0, 128
    %v2144 = vpop.trf.xlu0
    %v2145 = vpop.trf.xlu0
    %v2146 = vpop.trf.xlu0
    %v2147 = vpop.trf.xlu0
    %v2148 = vpop.trf.xlu0
    %v2149 = vpop.trf.xlu0
    %v2150 = vpop.trf.xlu0
    %v2151 = vpop.trf.xlu0
    %v2152 = vpop.trf.xlu0
    %v2153 = vpop.trf.xlu0
    %v2154 = vpop.trf.xlu0
    %v2155 = vpop.trf.xlu0
    %v2156 = vpop.trf.xlu0
    %v2157 = vpop.trf.xlu0
    %v2158 = vpop.trf.xlu0
    %v2159 = vpop.trf.xlu0
    %v2161 = vsel %vm617, %v2144, 0
    %2163 = vmatprep.subr.mxu0 0.0
    %2164 = vmatpush1.msra.mxu0 1.0
    %2165 = vmatprep.subr.mxu0 0.0
    %2166 = vmatpush1.msra.mxu0 0.0
    %2167 = vmatprep.subr.mxu0 0.0
    %2168 = vmatpush1.msra.mxu0 0.0
    %2169 = vmatprep.subr.mxu0 0.0
    %2170 = vmatpush1.msra.mxu0 0.0
    %2171 = vmatprep.subr.mxu0 0.0
    %2172 = vmatpush1.msra.mxu0 0.0
    %2173 = vmatprep.subr.mxu0 0.0
    %2174 = vmatpush1.msra.mxu0 0.0
    %2175 = vmatprep.subr.mxu0 0.0
    %2176 = vmatpush1.msra.mxu0 0.0
    %2177 = vmatprep.subr.mxu0 0.0
    %2178 = vmatpush1.msra.mxu0 0.0
    %2179 = vmatprep.subr.mxu0 0.0
    %2180 = vmatpush1.msra.mxu0 0.0
    %2181 = vmatprep.subr.mxu0 0.0
    %2182 = vmatpush1.msra.mxu0 0.0
    %2183 = vmatprep.subr.mxu0 0.0
    %2184 = vmatpush1.msra.mxu0 0.0
    %2185 = vmatprep.subr.mxu0 0.0
    %2186 = vmatpush1.msra.mxu0 0.0
    %2187 = vmatprep.subr.mxu0 0.0
    %2188 = vmatpush1.msra.mxu0 0.0
    %2189 = vmatprep.subr.mxu0 0.0
    %2190 = vmatpush1.msra.mxu0 0.0
    %2191 = vmatprep.subr.mxu0 0.0
    %2192 = vmatpush1.msra.mxu0 0.0
    %2193 = vmatprep.subr.mxu0 0.0
    %2194 = vmatpush1.msra.mxu0 0.0
    %2195 = vmatprep.subr.mxu0 0.0
    %2196 = vmatpush1.msra.mxu0 0.0
    %2197 = vmatprep.subr.mxu0 0.0
    %2198 = vmatpush1.msra.mxu0 0.0
    %2199 = vmatprep.subr.mxu0 0.0
    %2200 = vmatpush1.msra.mxu0 0.0
    %2201 = vmatprep.subr.mxu0 0.0
    %2202 = vmatpush1.msra.mxu0 0.0
    %2203 = vmatprep.subr.mxu0 0.0
    %2204 = vmatpush1.msra.mxu0 0.0
    %2205 = vmatprep.subr.mxu0 0.0
    %2206 = vmatpush1.msra.mxu0 0.0
    %2207 = vmatprep.subr.mxu0 0.0
    %2208 = vmatpush1.msra.mxu0 0.0
    %2209 = vmatprep.subr.mxu0 0.0
    %2210 = vmatpush1.msra.mxu0 0.0
    %2211 = vmatprep.subr.mxu0 0.0
    %2212 = vmatpush1.msra.mxu0 0.0
    %2213 = vmatprep.subr.mxu0 0.0
    %2214 = vmatpush1.msra.mxu0 0.0
    %2215 = vmatprep.subr.mxu0 0.0
    %2216 = vmatpush1.msra.mxu0 0.0
    %2217 = vmatprep.subr.mxu0 0.0
    %2218 = vmatpush1.msra.mxu0 0.0
    %2219 = vmatprep.subr.mxu0 0.0
    %2220 = vmatpush1.msra.mxu0 0.0
    %2221 = vmatprep.subr.mxu0 0.0
    %2222 = vmatpush1.msra.mxu0 0.0
    %2223 = vmatprep.subr.mxu0 0.0
    %2224 = vmatpush1.msra.mxu0 0.0
    %2225 = vmatprep.subr.mxu0 0.0
    %2226 = vmatpush1.msra.mxu0 0.0
    %2227 = vmatprep.mubr.f32.mxu0 0.0
    %2228 = vmatmul.mubr.f32.gmra.mrb[0].mxu0 %v2161
    %v2229 = vpop.f32.mrb[0].mxu0
    %v2230 = vadd.f32 0.0, %v2229
    %v2231 = vpop.f32.mrb[0].mxu0
    %2232 = vdwg.mxu0
    %v2233 = vadd.f32 %v2121, %v2127
    %v2234 = vsub.f32 %v2233, %v2111
    %v2235 = vrcp.pop %v2234
    %v2236 = vmul.f32 %v2104, %v2235
    %v2237 = vlog2.pop %v2236
    %v2238 = vmul.f32 %v2237, 0.6931472
    %v2239 = vsub.f32 0.0, %v2238
    %v2240 = vadd.f32 %v2124, %v2230
    %v2241 = vsub.f32 %v2240, %v2118
    %v2242 = vrcp.pop %v2241
    %v2243 = vmul.f32 %v2104, %v2242
    %v2244 = vlog2.pop %v2243
    %v2245 = vmul.f32 %v2244, 0.6931472
    %v2246 = vsub.f32 0.0, %v2245
    %v2247 = vsel %vm746, %v2239, 0.0
    %2248 = vadd.xlane.f32.xlu0 %v2247
    %v2249 = vpop.xlane.xlu0 %2248
    %v2250 = vrot.slane %v2249, 4
    %v2251 = vadd.f32 %v2249, %v2250
    %v2252 = vrot.slane %v2251, 2
    %v2253 = vadd.f32 %v2251, %v2252
    %v2254 = vrot.slane %v2253, 1
    %v2255 = vadd.f32 %v2253, %v2254
    %s2256 = vtos %v2255
    %s2257 = scalar_lea.smem [#allocation2], 256
    %2258 = sst [smem:[%s2257]] %s2256
    %v2259 = vsel %vm746, %v2246, 0.0
    %2260 = vadd.xlane.f32.xlu0 %v2259
    %v2261 = vpop.xlane.xlu0 %2260
    %v2262 = vrot.slane %v2261, 4
    %v2263 = vadd.f32 %v2261, %v2262
    %v2264 = vrot.slane %v2263, 2
    %v2265 = vadd.f32 %v2263, %v2264
    %v2266 = vrot.slane %v2265, 1
    %v2267 = vadd.f32 %v2265, %v2266
    %s2268 = vtos %v2267
    %s2269 = scalar_lea.smem [#allocation2], 257
    %2270 = sst [smem:[%s2269]] %s2268
    // Predicated region
    $region26: #{recommender_forward.33} parent=1 // pred_check
      _
    $region27: #{recommender_forward.33} parent=1 // pred_check_branch
      %2272 = sbr.rel (0) target = $region29
    $region28: #{recommender_forward.33} parent=1 // pred_region
      %s2274 = ssub.s32 64, 64
      %2275 = vsyncadd [#allocation3], %s2274
      %s2277 = sshll.u32 %s6, 4
      %s2278 = int_to_ptr.vmem [resolvable:$true] %s2277
      %2280 = dma.smem_to_vmem [#allocation2], 64, %s2278, [#allocation3]
    $region29: #{recommender_forward.33} parent=1 // pred_fallthru
      _
    // Predicated region
    $region30: #{recommender_forward.33} parent=1 // pred_check
      _
    $region31: #{recommender_forward.33} parent=1 // pred_check_branch
      %2282 = sbr.rel (0) target = $region33
    $region32: #{recommender_forward.33} parent=1 // pred_region
      %2283 = dma.done [#allocation3], 64
    $region33: #{recommender_forward.33} parent=1 // pred_fallthru
      _
    %2284 = sfence
    %2285 = vsyncpa [#allocation3], 1

</llo_original>
